<compile_context>
chip_gen: v7x
topology: tpu7x:2x2x1
jax: 0.10.0
libtpu: 0.0.40
codegen_flags: <defaults>
</compile_context>

<pallas_src>
import functools

import jax
import jax.numpy as jnp
from jax.experimental import pallas as pl
from jax.experimental.pallas import tpu as pltpu


# Batch rows per grid step. Worst-case per-step VMEM at TB=256 is ~30 MiB
# (p1 block x2 buffers + conv1/conv2 intermediates + resident weights), which
# fits the 48 MiB scoped limit on every generation (v7x 64 MiB physical,
# v5e/v6e 128 MiB). v6e could raise this to 512 for better amortization.
_TB_MAX = 256
_VMEM_LIMIT_BYTES = 48 << 20


# ----------------------------------------------------------------------------
# Fused kernel (one batch tile): conv1 -> pool -> conv2 -> pool -> fc1/fc2/fc3
# ----------------------------------------------------------------------------
def _network_kernel(p1_ref, w1_ref, b1_ref, w2_ref, b2_ref,
                    wf1_ref, bf1_ref, wf2_ref, bf2_ref, wf3_ref, bf3_ref,
                    out_ref, *, tb):
    n = 36 * tb  # rows per (dh, dw) block of the conv1 output

    # ---- conv1: GEMM (bf16 x bf16 -> f32) + bias + ReLU ---------------------
    y1 = jnp.dot(p1_ref[...], w1_ref[...], preferred_element_type=jnp.float32)
    y1 = jnp.maximum(y1 + b1_ref[...], 0.0)                    # (4*n, 32) f32

    # ---- MaxPool2d(2,2): max over the 4 contiguous (dh, dw) row blocks ------
    pooled = jnp.maximum(jnp.maximum(y1[0 * n:1 * n, :], y1[1 * n:2 * n, :]),
                         jnp.maximum(y1[2 * n:3 * n, :], y1[3 * n:4 * n, :]))
    # pooled: (36*tb, 32), rows ordered (ph, pw, b), ph/pw in 0..5
    pooled_b = pooled.astype(jnp.bfloat16)

    # ---- conv2 (5x5, stride 1) via 4 lane-dense packed GEMMs (N=128) --------
    b2 = b2_ref[...]                                            # (1, 16) f32
    positions = ((0, 0), (0, 1), (1, 0), (1, 1))
    acc = [jnp.zeros((tb, 16), jnp.float32) for _ in positions]
    for g in range(4):
        # column group kk of t holds tap k = g*8 + kk for all spatial rows
        t = jnp.dot(pooled_b, w2_ref[g],
                    preferred_element_type=jnp.float32)         # (36*tb, 128)
        n_taps = 8 if g < 3 else 1                              # 25 real taps
        for kk in range(n_taps):
            k = g * 8 + kk
            i, j = divmod(k, 5)
            c0 = kk * 16
            for p_idx, (ho, wo) in enumerate(positions):
                r = ((ho + i) * 6 + (wo + j)) * tb              # 8-aligned row slice
                acc[p_idx] = acc[p_idx] + t[r:r + tb, c0:c0 + 16]

    # ---- bias + ReLU + MaxPool2d(2,2) over the 2x2 output positions ---------
    z = None
    for p_idx in range(4):
        a = jnp.maximum(acc[p_idx] + b2, 0.0)                   # (tb, 16)
        z = a if z is None else jnp.maximum(z, a)
    # z: (tb, 16)  == flattened features (1x1 spatial, same as torch .view)

    # ---- fc1 -> ReLU -> fc2 -> ReLU -> fc3 ----------------------------------
    h = jnp.maximum(
        jnp.dot(z.astype(jnp.bfloat16), wf1_ref[...],
                preferred_element_type=jnp.float32) + bf1_ref[...], 0.0)
    h = jnp.maximum(
        jnp.dot(h.astype(jnp.bfloat16), wf2_ref[...],
                preferred_element_type=jnp.float32) + bf2_ref[...], 0.0)
    out = jnp.dot(h.astype(jnp.bfloat16), wf3_ref[...],
                  preferred_element_type=jnp.float32) + bf3_ref[...]
    out_ref[...] = out.astype(out_ref.dtype)                    # (tb, 128) lane-dense


# ----------------------------------------------------------------------------
# Wrapper-side conv1 im2col (tiny input; everything downstream is in-kernel)
# ----------------------------------------------------------------------------
def _conv1_patches(x_nhwc, nb, tb):
    """x: (nb*tb, 28, 28, 1) -> (nb*4*36*tb, 32) bf16 conv1 im2col patches.

    Per batch block, rows ordered (dh, dw, ph, pw, b) with conv1 output
    position (h, w) = (2*ph + dh, 2*pw + dw); K = 5*5*1 = 25 zero-padded to 32.
    Row/col 12 of the 13x13 conv1 output is dropped (MaxPool floor mode).
    """
    xp = jnp.pad(x_nhwc, ((0, 0), (1, 1), (1, 1), (0, 0)))      # pad=1 -> (bp,30,30,1)
    cols = []
    for ki in range(5):
        for kj in range(5):
            cols.append(xp[:, ki:ki + 23:2, kj:kj + 23:2, 0])   # (bp, 12, 12)
    pat = jnp.stack(cols, axis=-1)                              # (bp, 12, 12, 25)
    pat = pat.reshape(nb, tb, 6, 2, 6, 2, 25)                   # (nb,b,ph,dh,pw,dw,K)
    pat = jnp.transpose(pat, (0, 3, 5, 2, 4, 1, 6))             # (nb,dh,dw,ph,pw,b,K)
    pat = pat.reshape(nb * 4 * 36 * tb, 25)
    pat = jnp.pad(pat, ((0, 0), (0, 7)))                        # K: 25 -> 32
    return pat.astype(jnp.bfloat16)


# ----------------------------------------------------------------------------
# Parameters (deterministic synthetic init matching the PyTorch shapes)
# ----------------------------------------------------------------------------
def init_params():
    key = jax.random.PRNGKey(0)
    ks = jax.random.split(key, 10)

    def w(k, shape, fan_in):
        return jax.random.normal(k, shape, jnp.float32) / jnp.sqrt(fan_in)

    # conv1 weights: (K=25 -> 32 padded, 32 out channels)
    w1 = jnp.pad(w(ks[0], (25, 32), 25.0), ((0, 7), (0, 0)))

    # conv2 weights packed lane-dense: (4 groups, 32 cin, 8 taps * 16 cout)
    w2 = w(ks[2], (25, 32, 16), 25.0 * 32.0)                    # (tap, cin, cout)
    w2 = jnp.pad(w2, ((0, 7), (0, 0), (0, 0)))                  # taps 25..31 zero
    w2 = jnp.transpose(w2.reshape(4, 8, 32, 16), (0, 2, 1, 3)).reshape(4, 32, 128)

    # fc3: N padded 10 -> 128 so the HBM output store is lane-dense
    w3 = jnp.pad(w(ks[8], (64, 10), 64.0), ((0, 0), (0, 118)))
    b3 = jnp.pad(0.01 * jax.random.normal(ks[9], (10,), jnp.float32), (0, 118))

    bf16 = jnp.bfloat16
    return {
        "w_conv1": w1.astype(bf16),                             # (32, 32)
        "b_conv1": (0.01 * jax.random.normal(ks[1], (32,))).reshape(1, 32),
        "w_conv2": w2.astype(bf16),                             # (4, 32, 128)
        "b_conv2": (0.01 * jax.random.normal(ks[3], (16,))).reshape(1, 16),
        "w_fc1": w(ks[4], (16, 128), 16.0).astype(bf16),
        "b_fc1": (0.01 * jax.random.normal(ks[5], (128,))).reshape(1, 128),
        "w_fc2": w(ks[6], (128, 64), 128.0).astype(bf16),
        "b_fc2": (0.01 * jax.random.normal(ks[7], (64,))).reshape(1, 64),
        "w_fc3": w3.astype(bf16),                               # (64, 128)
        "b_fc3": b3.reshape(1, 128),
    }


# ----------------------------------------------------------------------------
# Forward pass: one pallas_call, 1-D 'parallel' grid over batch tiles
# ----------------------------------------------------------------------------
@jax.jit
def forward(x_nchw, params):
    B = x_nchw.shape[0]
    tb = min(_TB_MAX, max(8, ((B + 7) // 8) * 8))   # sublane-aligned batch tile
    bp = ((B + tb - 1) // tb) * tb                  # padded batch = nb * tb
    nb = bp // tb
    r1 = 4 * 36 * tb                                # p1 rows per grid step

    x = jnp.transpose(x_nchw, (0, 2, 3, 1)).astype(jnp.float32)  # NCHW -> NHWC
    x = jnp.pad(x, ((0, bp - B), (0, 0), (0, 0), (0, 0)))
    p1 = _conv1_patches(x, nb, tb)                               # (nb*r1, 32) bf16

    args = (p1,
            params["w_conv1"], params["b_conv1"],
            params["w_conv2"], params["b_conv2"],
            params["w_fc1"], params["b_fc1"],
            params["w_fc2"], params["b_fc2"],
            params["w_fc3"], params["b_fc3"])

    in_specs = [
        pl.BlockSpec((r1, 32), lambda i: (i, 0)),                # p1 (batch-tiled)
        pl.BlockSpec((32, 32), lambda i: (0, 0)),                # w_conv1 (resident)
        pl.BlockSpec((1, 32), lambda i: (0, 0)),                 # b_conv1
        pl.BlockSpec((4, 32, 128), lambda i: (0, 0, 0)),         # w_conv2 (resident)
        pl.BlockSpec((1, 16), lambda i: (0, 0)),                 # b_conv2
        pl.BlockSpec((16, 128), lambda i: (0, 0)),               # w_fc1
        pl.BlockSpec((1, 128), lambda i: (0, 0)),                # b_fc1
        pl.BlockSpec((128, 64), lambda i: (0, 0)),               # w_fc2
        pl.BlockSpec((1, 64), lambda i: (0, 0)),                 # b_fc2
        pl.BlockSpec((64, 128), lambda i: (0, 0)),               # w_fc3
        pl.BlockSpec((1, 128), lambda i: (0, 0)),                # b_fc3
    ]
    out_specs = pl.BlockSpec((tb, 128), lambda i: (i, 0))

    flops = 2 * (4 * 36 * bp * 32 * 32        # conv1 GEMM
                 + 36 * bp * 32 * 512         # conv2 packed GEMMs (4 x N=128)
                 + bp * 16 * 128 + bp * 128 * 64 + bp * 64 * 128)
    bytes_accessed = (sum(int(a.size) * a.dtype.itemsize for a in args)
                      + bp * 128 * 4)

    out = pl.pallas_call(
        functools.partial(_network_kernel, tb=tb),
        grid=(nb,),
        in_specs=in_specs,
        out_specs=out_specs,
        out_shape=jax.ShapeDtypeStruct((bp, 128), jnp.float32),
        compiler_params=pltpu.CompilerParams(
            dimension_semantics=("parallel",),
            vmem_limit_bytes=_VMEM_LIMIT_BYTES),
        cost_estimate=pl.CostEstimate(flops=flops, transcendentals=0,
                                      bytes_accessed=bytes_accessed),
    )(*args)
    return out[:B, :10]


if __name__ == "__main__":
    params = init_params()
    # MNIST-style input implied by fc1 = Linear(16*1*1, 128): 1x28x28
    x = jax.random.normal(jax.random.PRNGKey(0), (2, 1, 28, 28), jnp.float32)
    out = forward(x, params)
    jax.block_until_ready(out)
    assert out.shape == (2, 10), out.shape
    print("KERNEL_OK")
</pallas_src>

<mosaic_0001>
module attributes {stable_mosaic.version = 11 : i64} {
  func.func @_network_kernel(%arg0: i32, %arg1: memref<1152x32xbf16, #tpu.memory_space<vmem>>, %arg2: memref<32x32xbf16, #tpu.memory_space<vmem>>, %arg3: memref<1x32xf32, #tpu.memory_space<vmem>>, %arg4: memref<4x32x128xbf16, #tpu.memory_space<vmem>>, %arg5: memref<1x16xf32, #tpu.memory_space<vmem>>, %arg6: memref<16x128xbf16, #tpu.memory_space<vmem>>, %arg7: memref<1x128xf32, #tpu.memory_space<vmem>>, %arg8: memref<128x64xbf16, #tpu.memory_space<vmem>>, %arg9: memref<1x64xf32, #tpu.memory_space<vmem>>, %arg10: memref<64x128xbf16, #tpu.memory_space<vmem>>, %arg11: memref<1x128xf32, #tpu.memory_space<vmem>>, %arg12: memref<8x128xf32, #tpu.memory_space<vmem>>) attributes {dimension_semantics = [#tpu.dimension_semantics<parallel>], iteration_bounds = array<i64: 1>, scalar_prefetch = 0 : i64, scratch_operands = 0 : i64, tpu.core_type = #tpu.core_type<tc>, window_params = [{transform_indices = @transform_0, window_bounds = array<i64: 1152, 32>}, {pipeline_mode = #tpu.pipeline_mode<synchronous>, transform_indices = @transform_1, window_bounds = array<i64: 32, 32>}, {pipeline_mode = #tpu.pipeline_mode<synchronous>, transform_indices = @transform_2, window_bounds = array<i64: 1, 32>}, {pipeline_mode = #tpu.pipeline_mode<synchronous>, transform_indices = @transform_3, window_bounds = array<i64: 4, 32, 128>}, {pipeline_mode = #tpu.pipeline_mode<synchronous>, transform_indices = @transform_4, window_bounds = array<i64: 1, 16>}, {pipeline_mode = #tpu.pipeline_mode<synchronous>, transform_indices = @transform_5, window_bounds = array<i64: 16, 128>}, {pipeline_mode = #tpu.pipeline_mode<synchronous>, transform_indices = @transform_6, window_bounds = array<i64: 1, 128>}, {pipeline_mode = #tpu.pipeline_mode<synchronous>, transform_indices = @transform_7, window_bounds = array<i64: 128, 64>}, {pipeline_mode = #tpu.pipeline_mode<synchronous>, transform_indices = @transform_8, window_bounds = array<i64: 1, 64>}, {pipeline_mode = #tpu.pipeline_mode<synchronous>, transform_indices = @transform_9, window_bounds = array<i64: 64, 128>}, {pipeline_mode = #tpu.pipeline_mode<synchronous>, transform_indices = @transform_10, window_bounds = array<i64: 1, 128>}, {transform_indices = @transform_11, window_bounds = array<i64: 8, 128>}]} {
    %c0 = arith.constant 0 : index
    %c0_0 = arith.constant 0 : index
    %0 = vector.load %arg1[%c0, %c0_0] : memref<1152x32xbf16, #tpu.memory_space<vmem>>, vector<1152x32xbf16>
    %c0_1 = arith.constant 0 : index
    %c0_2 = arith.constant 0 : index
    %1 = vector.load %arg2[%c0_1, %c0_2] : memref<32x32xbf16, #tpu.memory_space<vmem>>, vector<32x32xbf16>
    %cst = arith.constant dense<0.000000e+00> : vector<1152x32xf32>
    %2 = tpu.matmul %0, %1, %cst {dimension_numbers = #tpu.dot_dimension_numbers<[1], [0], [0], [1], [0, 0, 1, 1], [], []>} : vector<1152x32xbf16>, vector<32x32xbf16>, vector<1152x32xf32> -> vector<1152x32xf32>
    %c0_3 = arith.constant 0 : index
    %c0_4 = arith.constant 0 : index
    %3 = vector.load %arg3[%c0_3, %c0_4] : memref<1x32xf32, #tpu.memory_space<vmem>>, vector<1x32xf32>
    %4 = vector.broadcast %3 : vector<1x32xf32> to vector<1152x32xf32>
    %5 = arith.addf %2, %4 : vector<1152x32xf32>
    %cst_5 = arith.constant 0.000000e+00 : f32
    %6 = vector.broadcast %cst_5 : f32 to vector<1152x32xf32>
    %7 = arith.maximumf %5, %6 : vector<1152x32xf32>
    %8 = vector.extract_strided_slice %7 {offsets = [0, 0], sizes = [288, 32], strides = [1, 1]} : vector<1152x32xf32> to vector<288x32xf32>
    %9 = vector.extract_strided_slice %7 {offsets = [288, 0], sizes = [288, 32], strides = [1, 1]} : vector<1152x32xf32> to vector<288x32xf32>
    %10 = arith.maximumf %8, %9 : vector<288x32xf32>
    %11 = vector.extract_strided_slice %7 {offsets = [576, 0], sizes = [288, 32], strides = [1, 1]} : vector<1152x32xf32> to vector<288x32xf32>
    %12 = vector.extract_strided_slice %7 {offsets = [864, 0], sizes = [288, 32], strides = [1, 1]} : vector<1152x32xf32> to vector<288x32xf32>
    %13 = arith.maximumf %11, %12 : vector<288x32xf32>
    %14 = arith.maximumf %10, %13 : vector<288x32xf32>
    %15 = arith.truncf %14 : vector<288x32xf32> to vector<288x32xbf16>
    %c0_6 = arith.constant 0 : index
    %c0_7 = arith.constant 0 : index
    %16 = vector.load %arg5[%c0_6, %c0_7] : memref<1x16xf32, #tpu.memory_space<vmem>>, vector<1x16xf32>
    %cst_8 = arith.constant 0.000000e+00 : f32
    %17 = vector.broadcast %cst_8 : f32 to vector<8x16xf32>
    %cst_9 = arith.constant 0.000000e+00 : f32
    %18 = vector.broadcast %cst_9 : f32 to vector<8x16xf32>
    %cst_10 = arith.constant 0.000000e+00 : f32
    %19 = vector.broadcast %cst_10 : f32 to vector<8x16xf32>
    %cst_11 = arith.constant 0.000000e+00 : f32
    %20 = vector.broadcast %cst_11 : f32 to vector<8x16xf32>
    %c0_12 = arith.constant 0 : index
    %c0_13 = arith.constant 0 : index
    %c0_14 = arith.constant 0 : index
    %21 = vector.load %arg4[%c0_12, %c0_13, %c0_14] : memref<4x32x128xbf16, #tpu.memory_space<vmem>>, vector<1x32x128xbf16>
    %22 = vector.shape_cast %21 : vector<1x32x128xbf16> to vector<32x128xbf16>
    %cst_15 = arith.constant dense<0.000000e+00> : vector<288x128xf32>
    %23 = tpu.matmul %15, %22, %cst_15 {dimension_numbers = #tpu.dot_dimension_numbers<[1], [0], [0], [1], [0, 0, 1, 1], [], []>} : vector<288x32xbf16>, vector<32x128xbf16>, vector<288x128xf32> -> vector<288x128xf32>
    %24 = vector.extract_strided_slice %23 {offsets = [0, 0], sizes = [8, 16], strides = [1, 1]} : vector<288x128xf32> to vector<8x16xf32>
    %25 = arith.addf %17, %24 : vector<8x16xf32>
    %26 = vector.extract_strided_slice %23 {offsets = [8, 0], sizes = [8, 16], strides = [1, 1]} : vector<288x128xf32> to vector<8x16xf32>
    %27 = arith.addf %18, %26 : vector<8x16xf32>
    %28 = vector.extract_strided_slice %23 {offsets = [48, 0], sizes = [8, 16], strides = [1, 1]} : vector<288x128xf32> to vector<8x16xf32>
    %29 = arith.addf %19, %28 : vector<8x16xf32>
    %30 = vector.extract_strided_slice %23 {offsets = [56, 0], sizes = [8, 16], strides = [1, 1]} : vector<288x128xf32> to vector<8x16xf32>
    %31 = arith.addf %20, %30 : vector<8x16xf32>
    %32 = vector.extract_strided_slice %23 {offsets = [8, 16], sizes = [8, 16], strides = [1, 1]} : vector<288x128xf32> to vector<8x16xf32>
    %33 = arith.addf %25, %32 : vector<8x16xf32>
    %34 = vector.extract_strided_slice %23 {offsets = [16, 16], sizes = [8, 16], strides = [1, 1]} : vector<288x128xf32> to vector<8x16xf32>
    %35 = arith.addf %27, %34 : vector<8x16xf32>
    %36 = vector.extract_strided_slice %23 {offsets = [56, 16], sizes = [8, 16], strides = [1, 1]} : vector<288x128xf32> to vector<8x16xf32>
    %37 = arith.addf %29, %36 : vector<8x16xf32>
    %38 = vector.extract_strided_slice %23 {offsets = [64, 16], sizes = [8, 16], strides = [1, 1]} : vector<288x128xf32> to vector<8x16xf32>
    %39 = arith.addf %31, %38 : vector<8x16xf32>
    %40 = vector.extract_strided_slice %23 {offsets = [16, 32], sizes = [8, 16], strides = [1, 1]} : vector<288x128xf32> to vector<8x16xf32>
    %41 = arith.addf %33, %40 : vector<8x16xf32>
    %42 = vector.extract_strided_slice %23 {offsets = [24, 32], sizes = [8, 16], strides = [1, 1]} : vector<288x128xf32> to vector<8x16xf32>
    %43 = arith.addf %35, %42 : vector<8x16xf32>
    %44 = vector.extract_strided_slice %23 {offsets = [64, 32], sizes = [8, 16], strides = [1, 1]} : vector<288x128xf32> to vector<8x16xf32>
    %45 = arith.addf %37, %44 : vector<8x16xf32>
    %46 = vector.extract_strided_slice %23 {offsets = [72, 32], sizes = [8, 16], strides = [1, 1]} : vector<288x128xf32> to vector<8x16xf32>
    %47 = arith.addf %39, %46 : vector<8x16xf32>
    %48 = vector.extract_strided_slice %23 {offsets = [24, 48], sizes = [8, 16], strides = [1, 1]} : vector<288x128xf32> to vector<8x16xf32>
    %49 = arith.addf %41, %48 : vector<8x16xf32>
    %50 = vector.extract_strided_slice %23 {offsets = [32, 48], sizes = [8, 16], strides = [1, 1]} : vector<288x128xf32> to vector<8x16xf32>
    %51 = arith.addf %43, %50 : vector<8x16xf32>
    %52 = vector.extract_strided_slice %23 {offsets = [72, 48], sizes = [8, 16], strides = [1, 1]} : vector<288x128xf32> to vector<8x16xf32>
    %53 = arith.addf %45, %52 : vector<8x16xf32>
    %54 = vector.extract_strided_slice %23 {offsets = [80, 48], sizes = [8, 16], strides = [1, 1]} : vector<288x128xf32> to vector<8x16xf32>
    %55 = arith.addf %47, %54 : vector<8x16xf32>
    %56 = vector.extract_strided_slice %23 {offsets = [32, 64], sizes = [8, 16], strides = [1, 1]} : vector<288x128xf32> to vector<8x16xf32>
    %57 = arith.addf %49, %56 : vector<8x16xf32>
    %58 = vector.extract_strided_slice %23 {offsets = [40, 64], sizes = [8, 16], strides = [1, 1]} : vector<288x128xf32> to vector<8x16xf32>
    %59 = arith.addf %51, %58 : vector<8x16xf32>
    %60 = vector.extract_strided_slice %23 {offsets = [80, 64], sizes = [8, 16], strides = [1, 1]} : vector<288x128xf32> to vector<8x16xf32>
    %61 = arith.addf %53, %60 : vector<8x16xf32>
    %62 = vector.extract_strided_slice %23 {offsets = [88, 64], sizes = [8, 16], strides = [1, 1]} : vector<288x128xf32> to vector<8x16xf32>
    %63 = arith.addf %55, %62 : vector<8x16xf32>
    %64 = vector.extract_strided_slice %23 {offsets = [48, 80], sizes = [8, 16], strides = [1, 1]} : vector<288x128xf32> to vector<8x16xf32>
    %65 = arith.addf %57, %64 : vector<8x16xf32>
    %66 = vector.extract_strided_slice %23 {offsets = [56, 80], sizes = [8, 16], strides = [1, 1]} : vector<288x128xf32> to vector<8x16xf32>
    %67 = arith.addf %59, %66 : vector<8x16xf32>
    %68 = vector.extract_strided_slice %23 {offsets = [96, 80], sizes = [8, 16], strides = [1, 1]} : vector<288x128xf32> to vector<8x16xf32>
    %69 = arith.addf %61, %68 : vector<8x16xf32>
    %70 = vector.extract_strided_slice %23 {offsets = [104, 80], sizes = [8, 16], strides = [1, 1]} : vector<288x128xf32> to vector<8x16xf32>
    %71 = arith.addf %63, %70 : vector<8x16xf32>
    %72 = vector.extract_strided_slice %23 {offsets = [56, 96], sizes = [8, 16], strides = [1, 1]} : vector<288x128xf32> to vector<8x16xf32>
    %73 = arith.addf %65, %72 : vector<8x16xf32>
    %74 = vector.extract_strided_slice %23 {offsets = [64, 96], sizes = [8, 16], strides = [1, 1]} : vector<288x128xf32> to vector<8x16xf32>
    %75 = arith.addf %67, %74 : vector<8x16xf32>
    %76 = vector.extract_strided_slice %23 {offsets = [104, 96], sizes = [8, 16], strides = [1, 1]} : vector<288x128xf32> to vector<8x16xf32>
    %77 = arith.addf %69, %76 : vector<8x16xf32>
    %78 = vector.extract_strided_slice %23 {offsets = [112, 96], sizes = [8, 16], strides = [1, 1]} : vector<288x128xf32> to vector<8x16xf32>
    %79 = arith.addf %71, %78 : vector<8x16xf32>
    %80 = vector.extract_strided_slice %23 {offsets = [64, 112], sizes = [8, 16], strides = [1, 1]} : vector<288x128xf32> to vector<8x16xf32>
    %81 = arith.addf %73, %80 : vector<8x16xf32>
    %82 = vector.extract_strided_slice %23 {offsets = [72, 112], sizes = [8, 16], strides = [1, 1]} : vector<288x128xf32> to vector<8x16xf32>
    %83 = arith.addf %75, %82 : vector<8x16xf32>
    %84 = vector.extract_strided_slice %23 {offsets = [112, 112], sizes = [8, 16], strides = [1, 1]} : vector<288x128xf32> to vector<8x16xf32>
    %85 = arith.addf %77, %84 : vector<8x16xf32>
    %86 = vector.extract_strided_slice %23 {offsets = [120, 112], sizes = [8, 16], strides = [1, 1]} : vector<288x128xf32> to vector<8x16xf32>
    %87 = arith.addf %79, %86 : vector<8x16xf32>
    %c1 = arith.constant 1 : index
    %c0_16 = arith.constant 0 : index
    %c0_17 = arith.constant 0 : index
    %88 = vector.load %arg4[%c1, %c0_16, %c0_17] : memref<4x32x128xbf16, #tpu.memory_space<vmem>>, vector<1x32x128xbf16>
    %89 = vector.shape_cast %88 : vector<1x32x128xbf16> to vector<32x128xbf16>
    %cst_18 = arith.constant dense<0.000000e+00> : vector<288x128xf32>
    %90 = tpu.matmul %15, %89, %cst_18 {dimension_numbers = #tpu.dot_dimension_numbers<[1], [0], [0], [1], [0, 0, 1, 1], [], []>} : vector<288x32xbf16>, vector<32x128xbf16>, vector<288x128xf32> -> vector<288x128xf32>
    %91 = vector.extract_strided_slice %90 {offsets = [72, 0], sizes = [8, 16], strides = [1, 1]} : vector<288x128xf32> to vector<8x16xf32>
    %92 = arith.addf %81, %91 : vector<8x16xf32>
    %93 = vector.extract_strided_slice %90 {offsets = [80, 0], sizes = [8, 16], strides = [1, 1]} : vector<288x128xf32> to vector<8x16xf32>
    %94 = arith.addf %83, %93 : vector<8x16xf32>
    %95 = vector.extract_strided_slice %90 {offsets = [120, 0], sizes = [8, 16], strides = [1, 1]} : vector<288x128xf32> to vector<8x16xf32>
    %96 = arith.addf %85, %95 : vector<8x16xf32>
    %97 = vector.extract_strided_slice %90 {offsets = [128, 0], sizes = [8, 16], strides = [1, 1]} : vector<288x128xf32> to vector<8x16xf32>
    %98 = arith.addf %87, %97 : vector<8x16xf32>
    %99 = vector.extract_strided_slice %90 {offsets = [80, 16], sizes = [8, 16], strides = [1, 1]} : vector<288x128xf32> to vector<8x16xf32>
    %100 = arith.addf %92, %99 : vector<8x16xf32>
    %101 = vector.extract_strided_slice %90 {offsets = [88, 16], sizes = [8, 16], strides = [1, 1]} : vector<288x128xf32> to vector<8x16xf32>
    %102 = arith.addf %94, %101 : vector<8x16xf32>
    %103 = vector.extract_strided_slice %90 {offsets = [128, 16], sizes = [8, 16], strides = [1, 1]} : vector<288x128xf32> to vector<8x16xf32>
    %104 = arith.addf %96, %103 : vector<8x16xf32>
    %105 = vector.extract_strided_slice %90 {offsets = [136, 16], sizes = [8, 16], strides = [1, 1]} : vector<288x128xf32> to vector<8x16xf32>
    %106 = arith.addf %98, %105 : vector<8x16xf32>
    %107 = vector.extract_strided_slice %90 {offsets = [96, 32], sizes = [8, 16], strides = [1, 1]} : vector<288x128xf32> to vector<8x16xf32>
    %108 = arith.addf %100, %107 : vector<8x16xf32>
    %109 = vector.extract_strided_slice %90 {offsets = [104, 32], sizes = [8, 16], strides = [1, 1]} : vector<288x128xf32> to vector<8x16xf32>
    %110 = arith.addf %102, %109 : vector<8x16xf32>
    %111 = vector.extract_strided_slice %90 {offsets = [144, 32], sizes = [8, 16], strides = [1, 1]} : vector<288x128xf32> to vector<8x16xf32>
    %112 = arith.addf %104, %111 : vector<8x16xf32>
    %113 = vector.extract_strided_slice %90 {offsets = [152, 32], sizes = [8, 16], strides = [1, 1]} : vector<288x128xf32> to vector<8x16xf32>
    %114 = arith.addf %106, %113 : vector<8x16xf32>
    %115 = vector.extract_strided_slice %90 {offsets = [104, 48], sizes = [8, 16], strides = [1, 1]} : vector<288x128xf32> to vector<8x16xf32>
    %116 = arith.addf %108, %115 : vector<8x16xf32>
    %117 = vector.extract_strided_slice %90 {offsets = [112, 48], sizes = [8, 16], strides = [1, 1]} : vector<288x128xf32> to vector<8x16xf32>
    %118 = arith.addf %110, %117 : vector<8x16xf32>
    %119 = vector.extract_strided_slice %90 {offsets = [152, 48], sizes = [8, 16], strides = [1, 1]} : vector<288x128xf32> to vector<8x16xf32>
    %120 = arith.addf %112, %119 : vector<8x16xf32>
    %121 = vector.extract_strided_slice %90 {offsets = [160, 48], sizes = [8, 16], strides = [1, 1]} : vector<288x128xf32> to vector<8x16xf32>
    %122 = arith.addf %114, %121 : vector<8x16xf32>
    %123 = vector.extract_strided_slice %90 {offsets = [112, 64], sizes = [8, 16], strides = [1, 1]} : vector<288x128xf32> to vector<8x16xf32>
    %124 = arith.addf %116, %123 : vector<8x16xf32>
    %125 = vector.extract_strided_slice %90 {offsets = [120, 64], sizes = [8, 16], strides = [1, 1]} : vector<288x128xf32> to vector<8x16xf32>
    %126 = arith.addf %118, %125 : vector<8x16xf32>
    %127 = vector.extract_strided_slice %90 {offsets = [160, 64], sizes = [8, 16], strides = [1, 1]} : vector<288x128xf32> to vector<8x16xf32>
    %128 = arith.addf %120, %127 : vector<8x16xf32>
    %129 = vector.extract_strided_slice %90 {offsets = [168, 64], sizes = [8, 16], strides = [1, 1]} : vector<288x128xf32> to vector<8x16xf32>
    %130 = arith.addf %122, %129 : vector<8x16xf32>
    %131 = vector.extract_strided_slice %90 {offsets = [120, 80], sizes = [8, 16], strides = [1, 1]} : vector<288x128xf32> to vector<8x16xf32>
    %132 = arith.addf %124, %131 : vector<8x16xf32>
    %133 = vector.extract_strided_slice %90 {offsets = [128, 80], sizes = [8, 16], strides = [1, 1]} : vector<288x128xf32> to vector<8x16xf32>
    %134 = arith.addf %126, %133 : vector<8x16xf32>
    %135 = vector.extract_strided_slice %90 {offsets = [168, 80], sizes = [8, 16], strides = [1, 1]} : vector<288x128xf32> to vector<8x16xf32>
    %136 = arith.addf %128, %135 : vector<8x16xf32>
    %137 = vector.extract_strided_slice %90 {offsets = [176, 80], sizes = [8, 16], strides = [1, 1]} : vector<288x128xf32> to vector<8x16xf32>
    %138 = arith.addf %130, %137 : vector<8x16xf32>
    %139 = vector.extract_strided_slice %90 {offsets = [128, 96], sizes = [8, 16], strides = [1, 1]} : vector<288x128xf32> to vector<8x16xf32>
    %140 = arith.addf %132, %139 : vector<8x16xf32>
    %141 = vector.extract_strided_slice %90 {offsets = [136, 96], sizes = [8, 16], strides = [1, 1]} : vector<288x128xf32> to vector<8x16xf32>
    %142 = arith.addf %134, %141 : vector<8x16xf32>
    %143 = vector.extract_strided_slice %90 {offsets = [176, 96], sizes = [8, 16], strides = [1, 1]} : vector<288x128xf32> to vector<8x16xf32>
    %144 = arith.addf %136, %143 : vector<8x16xf32>
    %145 = vector.extract_strided_slice %90 {offsets = [184, 96], sizes = [8, 16], strides = [1, 1]} : vector<288x128xf32> to vector<8x16xf32>
    %146 = arith.addf %138, %145 : vector<8x16xf32>
    %147 = vector.extract_strided_slice %90 {offsets = [144, 112], sizes = [8, 16], strides = [1, 1]} : vector<288x128xf32> to vector<8x16xf32>
    %148 = arith.addf %140, %147 : vector<8x16xf32>
    %149 = vector.extract_strided_slice %90 {offsets = [152, 112], sizes = [8, 16], strides = [1, 1]} : vector<288x128xf32> to vector<8x16xf32>
    %150 = arith.addf %142, %149 : vector<8x16xf32>
    %151 = vector.extract_strided_slice %90 {offsets = [192, 112], sizes = [8, 16], strides = [1, 1]} : vector<288x128xf32> to vector<8x16xf32>
    %152 = arith.addf %144, %151 : vector<8x16xf32>
    %153 = vector.extract_strided_slice %90 {offsets = [200, 112], sizes = [8, 16], strides = [1, 1]} : vector<288x128xf32> to vector<8x16xf32>
    %154 = arith.addf %146, %153 : vector<8x16xf32>
    %c2 = arith.constant 2 : index
    %c0_19 = arith.constant 0 : index
    %c0_20 = arith.constant 0 : index
    %155 = vector.load %arg4[%c2, %c0_19, %c0_20] : memref<4x32x128xbf16, #tpu.memory_space<vmem>>, vector<1x32x128xbf16>
    %156 = vector.shape_cast %155 : vector<1x32x128xbf16> to vector<32x128xbf16>
    %cst_21 = arith.constant dense<0.000000e+00> : vector<288x128xf32>
    %157 = tpu.matmul %15, %156, %cst_21 {dimension_numbers = #tpu.dot_dimension_numbers<[1], [0], [0], [1], [0, 0, 1, 1], [], []>} : vector<288x32xbf16>, vector<32x128xbf16>, vector<288x128xf32> -> vector<288x128xf32>
    %158 = vector.extract_strided_slice %157 {offsets = [152, 0], sizes = [8, 16], strides = [1, 1]} : vector<288x128xf32> to vector<8x16xf32>
    %159 = arith.addf %148, %158 : vector<8x16xf32>
    %160 = vector.extract_strided_slice %157 {offsets = [160, 0], sizes = [8, 16], strides = [1, 1]} : vector<288x128xf32> to vector<8x16xf32>
    %161 = arith.addf %150, %160 : vector<8x16xf32>
    %162 = vector.extract_strided_slice %157 {offsets = [200, 0], sizes = [8, 16], strides = [1, 1]} : vector<288x128xf32> to vector<8x16xf32>
    %163 = arith.addf %152, %162 : vector<8x16xf32>
    %164 = vector.extract_strided_slice %157 {offsets = [208, 0], sizes = [8, 16], strides = [1, 1]} : vector<288x128xf32> to vector<8x16xf32>
    %165 = arith.addf %154, %164 : vector<8x16xf32>
    %166 = vector.extract_strided_slice %157 {offsets = [160, 16], sizes = [8, 16], strides = [1, 1]} : vector<288x128xf32> to vector<8x16xf32>
    %167 = arith.addf %159, %166 : vector<8x16xf32>
    %168 = vector.extract_strided_slice %157 {offsets = [168, 16], sizes = [8, 16], strides = [1, 1]} : vector<288x128xf32> to vector<8x16xf32>
    %169 = arith.addf %161, %168 : vector<8x16xf32>
    %170 = vector.extract_strided_slice %157 {offsets = [208, 16], sizes = [8, 16], strides = [1, 1]} : vector<288x128xf32> to vector<8x16xf32>
    %171 = arith.addf %163, %170 : vector<8x16xf32>
    %172 = vector.extract_strided_slice %157 {offsets = [216, 16], sizes = [8, 16], strides = [1, 1]} : vector<288x128xf32> to vector<8x16xf32>
    %173 = arith.addf %165, %172 : vector<8x16xf32>
    %174 = vector.extract_strided_slice %157 {offsets = [168, 32], sizes = [8, 16], strides = [1, 1]} : vector<288x128xf32> to vector<8x16xf32>
    %175 = arith.addf %167, %174 : vector<8x16xf32>
    %176 = vector.extract_strided_slice %157 {offsets = [176, 32], sizes = [8, 16], strides = [1, 1]} : vector<288x128xf32> to vector<8x16xf32>
    %177 = arith.addf %169, %176 : vector<8x16xf32>
    %178 = vector.extract_strided_slice %157 {offsets = [216, 32], sizes = [8, 16], strides = [1, 1]} : vector<288x128xf32> to vector<8x16xf32>
    %179 = arith.addf %171, %178 : vector<8x16xf32>
    %180 = vector.extract_strided_slice %157 {offsets = [224, 32], sizes = [8, 16], strides = [1, 1]} : vector<288x128xf32> to vector<8x16xf32>
    %181 = arith.addf %173, %180 : vector<8x16xf32>
    %182 = vector.extract_strided_slice %157 {offsets = [176, 48], sizes = [8, 16], strides = [1, 1]} : vector<288x128xf32> to vector<8x16xf32>
    %183 = arith.addf %175, %182 : vector<8x16xf32>
    %184 = vector.extract_strided_slice %157 {offsets = [184, 48], sizes = [8, 16], strides = [1, 1]} : vector<288x128xf32> to vector<8x16xf32>
    %185 = arith.addf %177, %184 : vector<8x16xf32>
    %186 = vector.extract_strided_slice %157 {offsets = [224, 48], sizes = [8, 16], strides = [1, 1]} : vector<288x128xf32> to vector<8x16xf32>
    %187 = arith.addf %179, %186 : vector<8x16xf32>
    %188 = vector.extract_strided_slice %157 {offsets = [232, 48], sizes = [8, 16], strides = [1, 1]} : vector<288x128xf32> to vector<8x16xf32>
    %189 = arith.addf %181, %188 : vector<8x16xf32>
    %190 = vector.extract_strided_slice %157 {offsets = [192, 64], sizes = [8, 16], strides = [1, 1]} : vector<288x128xf32> to vector<8x16xf32>
    %191 = arith.addf %183, %190 : vector<8x16xf32>
    %192 = vector.extract_strided_slice %157 {offsets = [200, 64], sizes = [8, 16], strides = [1, 1]} : vector<288x128xf32> to vector<8x16xf32>
    %193 = arith.addf %185, %192 : vector<8x16xf32>
    %194 = vector.extract_strided_slice %157 {offsets = [240, 64], sizes = [8, 16], strides = [1, 1]} : vector<288x128xf32> to vector<8x16xf32>
    %195 = arith.addf %187, %194 : vector<8x16xf32>
    %196 = vector.extract_strided_slice %157 {offsets = [248, 64], sizes = [8, 16], strides = [1, 1]} : vector<288x128xf32> to vector<8x16xf32>
    %197 = arith.addf %189, %196 : vector<8x16xf32>
    %198 = vector.extract_strided_slice %157 {offsets = [200, 80], sizes = [8, 16], strides = [1, 1]} : vector<288x128xf32> to vector<8x16xf32>
    %199 = arith.addf %191, %198 : vector<8x16xf32>
    %200 = vector.extract_strided_slice %157 {offsets = [208, 80], sizes = [8, 16], strides = [1, 1]} : vector<288x128xf32> to vector<8x16xf32>
    %201 = arith.addf %193, %200 : vector<8x16xf32>
    %202 = vector.extract_strided_slice %157 {offsets = [248, 80], sizes = [8, 16], strides = [1, 1]} : vector<288x128xf32> to vector<8x16xf32>
    %203 = arith.addf %195, %202 : vector<8x16xf32>
    %204 = vector.extract_strided_slice %157 {offsets = [256, 80], sizes = [8, 16], strides = [1, 1]} : vector<288x128xf32> to vector<8x16xf32>
    %205 = arith.addf %197, %204 : vector<8x16xf32>
    %206 = vector.extract_strided_slice %157 {offsets = [208, 96], sizes = [8, 16], strides = [1, 1]} : vector<288x128xf32> to vector<8x16xf32>
    %207 = arith.addf %199, %206 : vector<8x16xf32>
    %208 = vector.extract_strided_slice %157 {offsets = [216, 96], sizes = [8, 16], strides = [1, 1]} : vector<288x128xf32> to vector<8x16xf32>
    %209 = arith.addf %201, %208 : vector<8x16xf32>
    %210 = vector.extract_strided_slice %157 {offsets = [256, 96], sizes = [8, 16], strides = [1, 1]} : vector<288x128xf32> to vector<8x16xf32>
    %211 = arith.addf %203, %210 : vector<8x16xf32>
    %212 = vector.extract_strided_slice %157 {offsets = [264, 96], sizes = [8, 16], strides = [1, 1]} : vector<288x128xf32> to vector<8x16xf32>
    %213 = arith.addf %205, %212 : vector<8x16xf32>
    %214 = vector.extract_strided_slice %157 {offsets = [216, 112], sizes = [8, 16], strides = [1, 1]} : vector<288x128xf32> to vector<8x16xf32>
    %215 = arith.addf %207, %214 : vector<8x16xf32>
    %216 = vector.extract_strided_slice %157 {offsets = [224, 112], sizes = [8, 16], strides = [1, 1]} : vector<288x128xf32> to vector<8x16xf32>
    %217 = arith.addf %209, %216 : vector<8x16xf32>
    %218 = vector.extract_strided_slice %157 {offsets = [264, 112], sizes = [8, 16], strides = [1, 1]} : vector<288x128xf32> to vector<8x16xf32>
    %219 = arith.addf %211, %218 : vector<8x16xf32>
    %220 = vector.extract_strided_slice %157 {offsets = [272, 112], sizes = [8, 16], strides = [1, 1]} : vector<288x128xf32> to vector<8x16xf32>
    %221 = arith.addf %213, %220 : vector<8x16xf32>
    %c3 = arith.constant 3 : index
    %c0_22 = arith.constant 0 : index
    %c0_23 = arith.constant 0 : index
    %222 = vector.load %arg4[%c3, %c0_22, %c0_23] : memref<4x32x128xbf16, #tpu.memory_space<vmem>>, vector<1x32x128xbf16>
    %223 = vector.shape_cast %222 : vector<1x32x128xbf16> to vector<32x128xbf16>
    %cst_24 = arith.constant dense<0.000000e+00> : vector<288x128xf32>
    %224 = tpu.matmul %15, %223, %cst_24 {dimension_numbers = #tpu.dot_dimension_numbers<[1], [0], [0], [1], [0, 0, 1, 1], [], []>} : vector<288x32xbf16>, vector<32x128xbf16>, vector<288x128xf32> -> vector<288x128xf32>
    %225 = vector.extract_strided_slice %224 {offsets = [224, 0], sizes = [8, 16], strides = [1, 1]} : vector<288x128xf32> to vector<8x16xf32>
    %226 = arith.addf %215, %225 : vector<8x16xf32>
    %227 = vector.extract_strided_slice %224 {offsets = [232, 0], sizes = [8, 16], strides = [1, 1]} : vector<288x128xf32> to vector<8x16xf32>
    %228 = arith.addf %217, %227 : vector<8x16xf32>
    %229 = vector.extract_strided_slice %224 {offsets = [272, 0], sizes = [8, 16], strides = [1, 1]} : vector<288x128xf32> to vector<8x16xf32>
    %230 = arith.addf %219, %229 : vector<8x16xf32>
    %231 = vector.extract_strided_slice %224 {offsets = [280, 0], sizes = [8, 16], strides = [1, 1]} : vector<288x128xf32> to vector<8x16xf32>
    %232 = arith.addf %221, %231 : vector<8x16xf32>
    %233 = vector.broadcast %16 : vector<1x16xf32> to vector<8x16xf32>
    %234 = arith.addf %226, %233 : vector<8x16xf32>
    %cst_25 = arith.constant 0.000000e+00 : f32
    %235 = vector.broadcast %cst_25 : f32 to vector<8x16xf32>
    %236 = arith.maximumf %234, %235 : vector<8x16xf32>
    %237 = vector.broadcast %16 : vector<1x16xf32> to vector<8x16xf32>
    %238 = arith.addf %228, %237 : vector<8x16xf32>
    %cst_26 = arith.constant 0.000000e+00 : f32
    %239 = vector.broadcast %cst_26 : f32 to vector<8x16xf32>
    %240 = arith.maximumf %238, %239 : vector<8x16xf32>
    %241 = arith.maximumf %236, %240 : vector<8x16xf32>
    %242 = vector.broadcast %16 : vector<1x16xf32> to vector<8x16xf32>
    %243 = arith.addf %230, %242 : vector<8x16xf32>
    %cst_27 = arith.constant 0.000000e+00 : f32
    %244 = vector.broadcast %cst_27 : f32 to vector<8x16xf32>
    %245 = arith.maximumf %243, %244 : vector<8x16xf32>
    %246 = arith.maximumf %241, %245 : vector<8x16xf32>
    %247 = vector.broadcast %16 : vector<1x16xf32> to vector<8x16xf32>
    %248 = arith.addf %232, %247 : vector<8x16xf32>
    %cst_28 = arith.constant 0.000000e+00 : f32
    %249 = vector.broadcast %cst_28 : f32 to vector<8x16xf32>
    %250 = arith.maximumf %248, %249 : vector<8x16xf32>
    %251 = arith.maximumf %246, %250 : vector<8x16xf32>
    %252 = arith.truncf %251 : vector<8x16xf32> to vector<8x16xbf16>
    %c0_29 = arith.constant 0 : index
    %c0_30 = arith.constant 0 : index
    %253 = vector.load %arg6[%c0_29, %c0_30] : memref<16x128xbf16, #tpu.memory_space<vmem>>, vector<16x128xbf16>
    %cst_31 = arith.constant dense<0.000000e+00> : vector<8x128xf32>
    %254 = tpu.matmul %252, %253, %cst_31 {dimension_numbers = #tpu.dot_dimension_numbers<[1], [0], [0], [1], [0, 0, 1, 1], [], []>} : vector<8x16xbf16>, vector<16x128xbf16>, vector<8x128xf32> -> vector<8x128xf32>
    %c0_32 = arith.constant 0 : index
    %c0_33 = arith.constant 0 : index
    %255 = vector.load %arg7[%c0_32, %c0_33] : memref<1x128xf32, #tpu.memory_space<vmem>>, vector<1x128xf32>
    %256 = vector.broadcast %255 : vector<1x128xf32> to vector<8x128xf32>
    %257 = arith.addf %254, %256 : vector<8x128xf32>
    %cst_34 = arith.constant 0.000000e+00 : f32
    %258 = vector.broadcast %cst_34 : f32 to vector<8x128xf32>
    %259 = arith.maximumf %257, %258 : vector<8x128xf32>
    %260 = arith.truncf %259 : vector<8x128xf32> to vector<8x128xbf16>
    %c0_35 = arith.constant 0 : index
    %c0_36 = arith.constant 0 : index
    %261 = vector.load %arg8[%c0_35, %c0_36] : memref<128x64xbf16, #tpu.memory_space<vmem>>, vector<128x64xbf16>
    %cst_37 = arith.constant dense<0.000000e+00> : vector<8x64xf32>
    %262 = tpu.matmul %260, %261, %cst_37 {dimension_numbers = #tpu.dot_dimension_numbers<[1], [0], [0], [1], [0, 0, 1, 1], [], []>} : vector<8x128xbf16>, vector<128x64xbf16>, vector<8x64xf32> -> vector<8x64xf32>
    %c0_38 = arith.constant 0 : index
    %c0_39 = arith.constant 0 : index
    %263 = vector.load %arg9[%c0_38, %c0_39] : memref<1x64xf32, #tpu.memory_space<vmem>>, vector<1x64xf32>
    %264 = vector.broadcast %263 : vector<1x64xf32> to vector<8x64xf32>
    %265 = arith.addf %262, %264 : vector<8x64xf32>
    %cst_40 = arith.constant 0.000000e+00 : f32
    %266 = vector.broadcast %cst_40 : f32 to vector<8x64xf32>
    %267 = arith.maximumf %265, %266 : vector<8x64xf32>
    %268 = arith.truncf %267 : vector<8x64xf32> to vector<8x64xbf16>
    %c0_41 = arith.constant 0 : index
    %c0_42 = arith.constant 0 : index
    %269 = vector.load %arg10[%c0_41, %c0_42] : memref<64x128xbf16, #tpu.memory_space<vmem>>, vector<64x128xbf16>
    %cst_43 = arith.constant dense<0.000000e+00> : vector<8x128xf32>
    %270 = tpu.matmul %268, %269, %cst_43 {dimension_numbers = #tpu.dot_dimension_numbers<[1], [0], [0], [1], [0, 0, 1, 1], [], []>} : vector<8x64xbf16>, vector<64x128xbf16>, vector<8x128xf32> -> vector<8x128xf32>
    %c0_44 = arith.constant 0 : index
    %c0_45 = arith.constant 0 : index
    %271 = vector.load %arg11[%c0_44, %c0_45] : memref<1x128xf32, #tpu.memory_space<vmem>>, vector<1x128xf32>
    %272 = vector.broadcast %271 : vector<1x128xf32> to vector<8x128xf32>
    %273 = arith.addf %270, %272 : vector<8x128xf32>
    %c0_46 = arith.constant 0 : index
    %c0_47 = arith.constant 0 : index
    %274 = vector.load %arg12[%c0_46, %c0_47] : memref<8x128xf32, #tpu.memory_space<vmem>>, vector<8x128xf32>
    tpu.vector_store %arg12[%c0_46, %c0_47], %273 {strides = array<i32>} : memref<8x128xf32, #tpu.memory_space<vmem>>, vector<8x128xf32>,
    return
  }
  func.func @transform_0(%arg0: i32) -> (i32, i32) {
    %c0_i32 = arith.constant 0 : i32
    %c0_i32_0 = arith.constant 0 : i32
    return %arg0, %c0_i32 : i32, i32
  }
  func.func @transform_1(%arg0: i32) -> (i32, i32) {
    %c0_i32 = arith.constant 0 : i32
    %c0_i32_0 = arith.constant 0 : i32
    %c0_i32_1 = arith.constant 0 : i32
    return %c0_i32, %c0_i32_0 : i32, i32
  }
  func.func @transform_2(%arg0: i32) -> (i32, i32) {
    %c0_i32 = arith.constant 0 : i32
    %c0_i32_0 = arith.constant 0 : i32
    %c0_i32_1 = arith.constant 0 : i32
    return %c0_i32, %c0_i32_0 : i32, i32
  }
  func.func @transform_3(%arg0: i32) -> (i32, i32, i32) {
    %c0_i32 = arith.constant 0 : i32
    %c0_i32_0 = arith.constant 0 : i32
    %c0_i32_1 = arith.constant 0 : i32
    %c0_i32_2 = arith.constant 0 : i32
    return %c0_i32, %c0_i32_0, %c0_i32_1 : i32, i32, i32
  }
  func.func @transform_4(%arg0: i32) -> (i32, i32) {
    %c0_i32 = arith.constant 0 : i32
    %c0_i32_0 = arith.constant 0 : i32
    %c0_i32_1 = arith.constant 0 : i32
    return %c0_i32, %c0_i32_0 : i32, i32
  }
  func.func @transform_5(%arg0: i32) -> (i32, i32) {
    %c0_i32 = arith.constant 0 : i32
    %c0_i32_0 = arith.constant 0 : i32
    %c0_i32_1 = arith.constant 0 : i32
    return %c0_i32, %c0_i32_0 : i32, i32
  }
  func.func @transform_6(%arg0: i32) -> (i32, i32) {
    %c0_i32 = arith.constant 0 : i32
    %c0_i32_0 = arith.constant 0 : i32
    %c0_i32_1 = arith.constant 0 : i32
    return %c0_i32, %c0_i32_0 : i32, i32
  }
  func.func @transform_7(%arg0: i32) -> (i32, i32) {
    %c0_i32 = arith.constant 0 : i32
    %c0_i32_0 = arith.constant 0 : i32
    %c0_i32_1 = arith.constant 0 : i32
    return %c0_i32, %c0_i32_0 : i32, i32
  }
  func.func @transform_8(%arg0: i32) -> (i32, i32) {
    %c0_i32 = arith.constant 0 : i32
    %c0_i32_0 = arith.constant 0 : i32
    %c0_i32_1 = arith.constant 0 : i32
    return %c0_i32, %c0_i32_0 : i32, i32
  }
  func.func @transform_9(%arg0: i32) -> (i32, i32) {
    %c0_i32 = arith.constant 0 : i32
    %c0_i32_0 = arith.constant 0 : i32
    %c0_i32_1 = arith.constant 0 : i32
    return %c0_i32, %c0_i32_0 : i32, i32
  }
  func.func @transform_10(%arg0: i32) -> (i32, i32) {
    %c0_i32 = arith.constant 0 : i32
    %c0_i32_0 = arith.constant 0 : i32
    %c0_i32_1 = arith.constant 0 : i32
    return %c0_i32, %c0_i32_0 : i32, i32
  }
  func.func @transform_11(%arg0: i32) -> (i32, i32) {
    %c0_i32 = arith.constant 0 : i32
    %c0_i32_0 = arith.constant 0 : i32
    return %arg0, %c0_i32 : i32, i32
  }
}

</mosaic_0001>

<llo_original>
// kernel: forward.1
$region0: #{forward.1}
  #allocation0 [shape = 'u32[]', space=smem, size = 0x4, offset = 0x4, fixed_abs, tag = 'smem constant byte address 0x4 - core index']
  #allocation1 [shape = 'u32[144,128]{1,0:T(1,128)}', space=vmem, size = 0x12000, scoped, tag = 'internal scratch']
  %s0 = inlined_call_operand.vmem [shape: bf16[1152,32], index: 0, kind: input, shape index: {}]
  %s1 = inlined_call_operand.vmem [shape: bf16[32,32], index: 1, kind: input, shape index: {}]
  %s2 = inlined_call_operand.vmem [shape: f32[1,32], index: 2, kind: input, shape index: {}]
  %s3 = inlined_call_operand.vmem [shape: bf16[4,32,128], index: 3, kind: input, shape index: {}]
  %s4 = inlined_call_operand.vmem [shape: f32[1,16], index: 4, kind: input, shape index: {}]
  %s5 = inlined_call_operand.vmem [shape: bf16[16,128], index: 5, kind: input, shape index: {}]
  %s6 = inlined_call_operand.vmem [shape: f32[1,128], index: 6, kind: input, shape index: {}]
  %s7 = inlined_call_operand.vmem [shape: bf16[128,64], index: 7, kind: input, shape index: {}]
  %s8 = inlined_call_operand.vmem [shape: f32[1,64], index: 8, kind: input, shape index: {}]
  %s9 = inlined_call_operand.vmem [shape: bf16[64,128], index: 9, kind: input, shape index: {}]
  %s10 = inlined_call_operand.vmem [shape: f32[1,128], index: 10, kind: input, shape index: {}]
  %s11 = inlined_call_operand.vmem [shape: f32[8,128], index: 11, kind: output, shape index: {}]
  %s12 = sld [smem:[#allocation0]]
  $region54: #{forward.1} parent=0
    _
  %s14 = ssub.s32 1, %s12
  %s15 = scalar_select 0, %s14, %s12
  // Predicated region
  $region2: #{forward.1} parent=0 // pred_check
    _
  $region3: #{forward.1} parent=0 // pred_check_branch
    %17 = sbr.rel (0) target = $region5
  $region4: #{forward.1} parent=0 // pred_region
    _
  $region5: #{forward.1} parent=0 // pred_fallthru
    _
  // Predicated region
  $region6: #{forward.1} parent=0 // pred_check
    _
  $region7: #{forward.1} parent=0 // pred_check_branch
    %19 = sbr.rel (0) target = $region9
  $region8: #{forward.1} parent=0 // pred_region
    _
  $region9: #{forward.1} parent=0 // pred_fallthru
    _
  // Predicated region
  $region10: #{forward.1} parent=0 // pred_check
    _
  $region11: #{forward.1} parent=0 // pred_check_branch
    %21 = sbr.rel (0) target = $region13
  $region12: #{forward.1} parent=0 // pred_region
    _
  $region13: #{forward.1} parent=0 // pred_fallthru
    _
  // Predicated region
  $region14: #{forward.1} parent=0 // pred_check
    _
  $region15: #{forward.1} parent=0 // pred_check_branch
    %23 = sbr.rel (0) target = $region17
  $region16: #{forward.1} parent=0 // pred_region
    _
  $region17: #{forward.1} parent=0 // pred_fallthru
    _
  // Predicated region
  $region18: #{forward.1} parent=0 // pred_check
    _
  $region19: #{forward.1} parent=0 // pred_check_branch
    %25 = sbr.rel (0) target = $region21
  $region20: #{forward.1} parent=0 // pred_region
    _
  $region21: #{forward.1} parent=0 // pred_fallthru
    _
  // Predicated region
  $region22: #{forward.1} parent=0 // pred_check
    _
  $region23: #{forward.1} parent=0 // pred_check_branch
    %27 = sbr.rel (0) target = $region25
  $region24: #{forward.1} parent=0 // pred_region
    _
  $region25: #{forward.1} parent=0 // pred_fallthru
    _
  // Predicated region
  $region26: #{forward.1} parent=0 // pred_check
    _
  $region27: #{forward.1} parent=0 // pred_check_branch
    %29 = sbr.rel (0) target = $region29
  $region28: #{forward.1} parent=0 // pred_region
    _
  $region29: #{forward.1} parent=0 // pred_fallthru
    _
  // Predicated region
  $region30: #{forward.1} parent=0 // pred_check
    _
  $region31: #{forward.1} parent=0 // pred_check_branch
    %31 = sbr.rel (0) target = $region33
  $region32: #{forward.1} parent=0 // pred_region
    _
  $region33: #{forward.1} parent=0 // pred_fallthru
    _
  // Predicated region
  $region34: #{forward.1} parent=0 // pred_check
    _
  $region35: #{forward.1} parent=0 // pred_check_branch
    %33 = sbr.rel (0) target = $region37
  $region36: #{forward.1} parent=0 // pred_region
    _
  $region37: #{forward.1} parent=0 // pred_fallthru
    _
  // Predicated region
  $region38: #{forward.1} parent=0 // pred_check
    _
  $region39: #{forward.1} parent=0 // pred_check_branch
    %35 = sbr.rel (0) target = $region41
  $region40: #{forward.1} parent=0 // pred_region
    _
  $region41: #{forward.1} parent=0 // pred_fallthru
    _
  // Predicated region
  $region42: #{forward.1} parent=0 // pred_check
    _
  $region43: #{forward.1} parent=0 // pred_check_branch
    %37 = sbr.rel (0) target = $region45
  $region44: #{forward.1} parent=0 // pred_region
    _
  $region45: #{forward.1} parent=0 // pred_fallthru
    _
  %v39 = vld [vmem:[%s0] sm:$0xf]
  %v40 = vld [vmem:[%s0 + $0x4] sm:$0xf]
  %v41 = vld [vmem:[%s0 + $0x8] sm:$0xf]
  %v42 = vld [vmem:[%s0 + $0xc] sm:$0xf]
  %v43 = vld [vmem:[%s0 + $0x10] sm:$0xf]
  %v44 = vld [vmem:[%s0 + $0x14] sm:$0xf]
  %v45 = vld [vmem:[%s0 + $0x18] sm:$0xf]
  %v46 = vld [vmem:[%s0 + $0x1c] sm:$0xf]
  %v47 = vld [vmem:[%s0 + $0x20] sm:$0xf]
  %v48 = vld [vmem:[%s0 + $0x24] sm:$0xf]
  %v49 = vld [vmem:[%s0 + $0x28] sm:$0xf]
  %v50 = vld [vmem:[%s0 + $0x2c] sm:$0xf]
  %v51 = vld [vmem:[%s0 + $0x30] sm:$0xf]
  %v52 = vld [vmem:[%s0 + $0x34] sm:$0xf]
  %v53 = vld [vmem:[%s0 + $0x38] sm:$0xf]
  %v54 = vld [vmem:[%s0 + $0x3c] sm:$0xf]
  %v55 = vld [vmem:[%s0 + $0x40] sm:$0xf]
  %v56 = vld [vmem:[%s0 + $0x44] sm:$0xf]
  %v57 = vld [vmem:[%s0 + $0x48] sm:$0xf]
  %v58 = vld [vmem:[%s0 + $0x4c] sm:$0xf]
  %v59 = vld [vmem:[%s0 + $0x50] sm:$0xf]
  %v60 = vld [vmem:[%s0 + $0x54] sm:$0xf]
  %v61 = vld [vmem:[%s0 + $0x58] sm:$0xf]
  %v62 = vld [vmem:[%s0 + $0x5c] sm:$0xf]
  %v63 = vld [vmem:[%s0 + $0x60] sm:$0xf]
  %v64 = vld [vmem:[%s0 + $0x64] sm:$0xf]
  %v65 = vld [vmem:[%s0 + $0x68] sm:$0xf]
  %v66 = vld [vmem:[%s0 + $0x6c] sm:$0xf]
  %v67 = vld [vmem:[%s0 + $0x70] sm:$0xf]
  %v68 = vld [vmem:[%s0 + $0x74] sm:$0xf]
  %v69 = vld [vmem:[%s0 + $0x78] sm:$0xf]
  %v70 = vld [vmem:[%s0 + $0x7c] sm:$0xf]
  %v71 = vld [vmem:[%s0 + $0x80] sm:$0xf]
  %v72 = vld [vmem:[%s0 + $0x84] sm:$0xf]
  %v73 = vld [vmem:[%s0 + $0x88] sm:$0xf]
  %v74 = vld [vmem:[%s0 + $0x8c] sm:$0xf]
  %v75 = vld [vmem:[%s0 + $0x90] sm:$0xf]
  %v76 = vld [vmem:[%s0 + $0x94] sm:$0xf]
  %v77 = vld [vmem:[%s0 + $0x98] sm:$0xf]
  %v78 = vld [vmem:[%s0 + $0x9c] sm:$0xf]
  %v79 = vld [vmem:[%s0 + $0xa0] sm:$0xf]
  %v80 = vld [vmem:[%s0 + $0xa4] sm:$0xf]
  %v81 = vld [vmem:[%s0 + $0xa8] sm:$0xf]
  %v82 = vld [vmem:[%s0 + $0xac] sm:$0xf]
  %v83 = vld [vmem:[%s0 + $0xb0] sm:$0xf]
  %v84 = vld [vmem:[%s0 + $0xb4] sm:$0xf]
  %v85 = vld [vmem:[%s0 + $0xb8] sm:$0xf]
  %v86 = vld [vmem:[%s0 + $0xbc] sm:$0xf]
  %v87 = vld [vmem:[%s0 + $0xc0] sm:$0xf]
  %v88 = vld [vmem:[%s0 + $0xc4] sm:$0xf]
  %v89 = vld [vmem:[%s0 + $0xc8] sm:$0xf]
  %v90 = vld [vmem:[%s0 + $0xcc] sm:$0xf]
  %v91 = vld [vmem:[%s0 + $0xd0] sm:$0xf]
  %v92 = vld [vmem:[%s0 + $0xd4] sm:$0xf]
  %v93 = vld [vmem:[%s0 + $0xd8] sm:$0xf]
  %v94 = vld [vmem:[%s0 + $0xdc] sm:$0xf]
  %v95 = vld [vmem:[%s0 + $0xe0] sm:$0xf]
  %v96 = vld [vmem:[%s0 + $0xe4] sm:$0xf]
  %v97 = vld [vmem:[%s0 + $0xe8] sm:$0xf]
  %v98 = vld [vmem:[%s0 + $0xec] sm:$0xf]
  %v99 = vld [vmem:[%s0 + $0xf0] sm:$0xf]
  %v100 = vld [vmem:[%s0 + $0xf4] sm:$0xf]
  %v101 = vld [vmem:[%s0 + $0xf8] sm:$0xf]
  %v102 = vld [vmem:[%s0 + $0xfc] sm:$0xf]
  %v103 = vld [vmem:[%s0 + $0x100] sm:$0xf]
  %v104 = vld [vmem:[%s0 + $0x104] sm:$0xf]
  %v105 = vld [vmem:[%s0 + $0x108] sm:$0xf]
  %v106 = vld [vmem:[%s0 + $0x10c] sm:$0xf]
  %v107 = vld [vmem:[%s0 + $0x110] sm:$0xf]
  %v108 = vld [vmem:[%s0 + $0x114] sm:$0xf]
  %v109 = vld [vmem:[%s0 + $0x118] sm:$0xf]
  %v110 = vld [vmem:[%s0 + $0x11c] sm:$0xf]
  %v111 = vld [vmem:[%s0 + $0x120] sm:$0xf]
  %v112 = vld [vmem:[%s0 + $0x124] sm:$0xf]
  %v113 = vld [vmem:[%s0 + $0x128] sm:$0xf]
  %v114 = vld [vmem:[%s0 + $0x12c] sm:$0xf]
  %v115 = vld [vmem:[%s0 + $0x130] sm:$0xf]
  %v116 = vld [vmem:[%s0 + $0x134] sm:$0xf]
  %v117 = vld [vmem:[%s0 + $0x138] sm:$0xf]
  %v118 = vld [vmem:[%s0 + $0x13c] sm:$0xf]
  %v119 = vld [vmem:[%s0 + $0x140] sm:$0xf]
  %v120 = vld [vmem:[%s0 + $0x144] sm:$0xf]
  %v121 = vld [vmem:[%s0 + $0x148] sm:$0xf]
  %v122 = vld [vmem:[%s0 + $0x14c] sm:$0xf]
  %v123 = vld [vmem:[%s0 + $0x150] sm:$0xf]
  %v124 = vld [vmem:[%s0 + $0x154] sm:$0xf]
  %v125 = vld [vmem:[%s0 + $0x158] sm:$0xf]
  %v126 = vld [vmem:[%s0 + $0x15c] sm:$0xf]
  %v127 = vld [vmem:[%s0 + $0x160] sm:$0xf]
  %v128 = vld [vmem:[%s0 + $0x164] sm:$0xf]
  %v129 = vld [vmem:[%s0 + $0x168] sm:$0xf]
  %v130 = vld [vmem:[%s0 + $0x16c] sm:$0xf]
  %v131 = vld [vmem:[%s0 + $0x170] sm:$0xf]
  %v132 = vld [vmem:[%s0 + $0x174] sm:$0xf]
  %v133 = vld [vmem:[%s0 + $0x178] sm:$0xf]
  %v134 = vld [vmem:[%s0 + $0x17c] sm:$0xf]
  %v135 = vld [vmem:[%s0 + $0x180] sm:$0xf]
  %v136 = vld [vmem:[%s0 + $0x184] sm:$0xf]
  %v137 = vld [vmem:[%s0 + $0x188] sm:$0xf]
  %v138 = vld [vmem:[%s0 + $0x18c] sm:$0xf]
  %v139 = vld [vmem:[%s0 + $0x190] sm:$0xf]
  %v140 = vld [vmem:[%s0 + $0x194] sm:$0xf]
  %v141 = vld [vmem:[%s0 + $0x198] sm:$0xf]
  %v142 = vld [vmem:[%s0 + $0x19c] sm:$0xf]
  %v143 = vld [vmem:[%s0 + $0x1a0] sm:$0xf]
  %v144 = vld [vmem:[%s0 + $0x1a4] sm:$0xf]
  %v145 = vld [vmem:[%s0 + $0x1a8] sm:$0xf]
  %v146 = vld [vmem:[%s0 + $0x1ac] sm:$0xf]
  %v147 = vld [vmem:[%s0 + $0x1b0] sm:$0xf]
  %v148 = vld [vmem:[%s0 + $0x1b4] sm:$0xf]
  %v149 = vld [vmem:[%s0 + $0x1b8] sm:$0xf]
  %v150 = vld [vmem:[%s0 + $0x1bc] sm:$0xf]
  %v151 = vld [vmem:[%s0 + $0x1c0] sm:$0xf]
  %v152 = vld [vmem:[%s0 + $0x1c4] sm:$0xf]
  %v153 = vld [vmem:[%s0 + $0x1c8] sm:$0xf]
  %v154 = vld [vmem:[%s0 + $0x1cc] sm:$0xf]
  %v155 = vld [vmem:[%s0 + $0x1d0] sm:$0xf]
  %v156 = vld [vmem:[%s0 + $0x1d4] sm:$0xf]
  %v157 = vld [vmem:[%s0 + $0x1d8] sm:$0xf]
  %v158 = vld [vmem:[%s0 + $0x1dc] sm:$0xf]
  %v159 = vld [vmem:[%s0 + $0x1e0] sm:$0xf]
  %v160 = vld [vmem:[%s0 + $0x1e4] sm:$0xf]
  %v161 = vld [vmem:[%s0 + $0x1e8] sm:$0xf]
  %v162 = vld [vmem:[%s0 + $0x1ec] sm:$0xf]
  %v163 = vld [vmem:[%s0 + $0x1f0] sm:$0xf]
  %v164 = vld [vmem:[%s0 + $0x1f4] sm:$0xf]
  %v165 = vld [vmem:[%s0 + $0x1f8] sm:$0xf]
  %v166 = vld [vmem:[%s0 + $0x1fc] sm:$0xf]
  %v167 = vld [vmem:[%s0 + $0x200] sm:$0xf]
  %v168 = vld [vmem:[%s0 + $0x204] sm:$0xf]
  %v169 = vld [vmem:[%s0 + $0x208] sm:$0xf]
  %v170 = vld [vmem:[%s0 + $0x20c] sm:$0xf]
  %v171 = vld [vmem:[%s0 + $0x210] sm:$0xf]
  %v172 = vld [vmem:[%s0 + $0x214] sm:$0xf]
  %v173 = vld [vmem:[%s0 + $0x218] sm:$0xf]
  %v174 = vld [vmem:[%s0 + $0x21c] sm:$0xf]
  %v175 = vld [vmem:[%s0 + $0x220] sm:$0xf]
  %v176 = vld [vmem:[%s0 + $0x224] sm:$0xf]
  %v177 = vld [vmem:[%s0 + $0x228] sm:$0xf]
  %v178 = vld [vmem:[%s0 + $0x22c] sm:$0xf]
  %v179 = vld [vmem:[%s0 + $0x230] sm:$0xf]
  %v180 = vld [vmem:[%s0 + $0x234] sm:$0xf]
  %v181 = vld [vmem:[%s0 + $0x238] sm:$0xf]
  %v182 = vld [vmem:[%s0 + $0x23c] sm:$0xf]
  %v183 = vld [vmem:[%s1] sm:$0xf]
  %v184 = vld [vmem:[%s1 + $0x4] sm:$0xf]
  %v185 = vld [vmem:[%s1 + $0x8] sm:$0xf]
  %v186 = vld [vmem:[%s1 + $0xc] sm:$0xf]
  %v187 = vld [vmem:[%s2] sm:$0x1]
  %v189 = vlaneseq
  %v190 = vshrl.u32 %v189, 7
  %v191 = vsub.s32 0, %v190
  %v192 = vrot.slane %v187, %v191
  %v338 = vunpack.c.l.b16 %v39
  %v339 = vunpack.c.l.b16 %v40
  %v340 = vunpack.c.l.b16 %v41
  %v341 = vunpack.c.l.b16 %v42
  %v342 = vunpack.c.l.b16 %v43
  %v343 = vunpack.c.l.b16 %v44
  %v344 = vunpack.c.l.b16 %v45
  %v345 = vunpack.c.l.b16 %v46
  %v346 = vunpack.c.l.b16 %v47
  %v347 = vunpack.c.l.b16 %v48
  %v348 = vunpack.c.l.b16 %v49
  %v349 = vunpack.c.l.b16 %v50
  %v350 = vunpack.c.l.b16 %v51
  %v351 = vunpack.c.l.b16 %v52
  %v352 = vunpack.c.l.b16 %v53
  %v353 = vunpack.c.l.b16 %v54
  %v354 = vunpack.c.l.b16 %v55
  %v355 = vunpack.c.l.b16 %v56
  %v356 = vunpack.c.l.b16 %v57
  %v357 = vunpack.c.l.b16 %v58
  %v358 = vunpack.c.l.b16 %v59
  %v359 = vunpack.c.l.b16 %v60
  %v360 = vunpack.c.l.b16 %v61
  %v361 = vunpack.c.l.b16 %v62
  %v362 = vunpack.c.l.b16 %v63
  %v363 = vunpack.c.l.b16 %v64
  %v364 = vunpack.c.l.b16 %v65
  %v365 = vunpack.c.l.b16 %v66
  %v366 = vunpack.c.l.b16 %v67
  %v367 = vunpack.c.l.b16 %v68
  %v368 = vunpack.c.l.b16 %v69
  %v369 = vunpack.c.l.b16 %v70
  %v370 = vunpack.c.l.b16 %v71
  %v371 = vunpack.c.l.b16 %v72
  %v372 = vunpack.c.l.b16 %v73
  %v373 = vunpack.c.l.b16 %v74
  %v374 = vunpack.c.l.b16 %v75
  %v375 = vunpack.c.l.b16 %v76
  %v376 = vunpack.c.l.b16 %v77
  %v377 = vunpack.c.l.b16 %v78
  %v378 = vunpack.c.l.b16 %v79
  %v379 = vunpack.c.l.b16 %v80
  %v380 = vunpack.c.l.b16 %v81
  %v381 = vunpack.c.l.b16 %v82
  %v382 = vunpack.c.l.b16 %v83
  %v383 = vunpack.c.l.b16 %v84
  %v384 = vunpack.c.l.b16 %v85
  %v385 = vunpack.c.l.b16 %v86
  %v386 = vunpack.c.l.b16 %v87
  %v387 = vunpack.c.l.b16 %v88
  %v388 = vunpack.c.l.b16 %v89
  %v389 = vunpack.c.l.b16 %v90
  %v390 = vunpack.c.l.b16 %v91
  %v391 = vunpack.c.l.b16 %v92
  %v392 = vunpack.c.l.b16 %v93
  %v393 = vunpack.c.l.b16 %v94
  %v394 = vunpack.c.l.b16 %v95
  %v395 = vunpack.c.l.b16 %v96
  %v396 = vunpack.c.l.b16 %v97
  %v397 = vunpack.c.l.b16 %v98
  %v398 = vunpack.c.l.b16 %v99
  %v399 = vunpack.c.l.b16 %v100
  %v400 = vunpack.c.l.b16 %v101
  %v401 = vunpack.c.l.b16 %v102
  %v402 = vunpack.c.l.b16 %v103
  %v403 = vunpack.c.l.b16 %v104
  %v404 = vunpack.c.l.b16 %v105
  %v405 = vunpack.c.l.b16 %v106
  %v406 = vunpack.c.l.b16 %v107
  %v407 = vunpack.c.l.b16 %v108
  %v408 = vunpack.c.l.b16 %v109
  %v409 = vunpack.c.l.b16 %v110
  %v410 = vunpack.c.l.b16 %v111
  %v411 = vunpack.c.l.b16 %v112
  %v412 = vunpack.c.l.b16 %v113
  %v413 = vunpack.c.l.b16 %v114
  %v414 = vunpack.c.l.b16 %v115
  %v415 = vunpack.c.l.b16 %v116
  %v416 = vunpack.c.l.b16 %v117
  %v417 = vunpack.c.l.b16 %v118
  %v418 = vunpack.c.l.b16 %v119
  %v419 = vunpack.c.l.b16 %v120
  %v420 = vunpack.c.l.b16 %v121
  %v421 = vunpack.c.l.b16 %v122
  %v422 = vunpack.c.l.b16 %v123
  %v423 = vunpack.c.l.b16 %v124
  %v424 = vunpack.c.l.b16 %v125
  %v425 = vunpack.c.l.b16 %v126
  %v426 = vunpack.c.l.b16 %v127
  %v427 = vunpack.c.l.b16 %v128
  %v428 = vunpack.c.l.b16 %v129
  %v429 = vunpack.c.l.b16 %v130
  %v430 = vunpack.c.l.b16 %v131
  %v431 = vunpack.c.l.b16 %v132
  %v432 = vunpack.c.l.b16 %v133
  %v433 = vunpack.c.l.b16 %v134
  %v434 = vunpack.c.l.b16 %v135
  %v435 = vunpack.c.l.b16 %v136
  %v436 = vunpack.c.l.b16 %v137
  %v437 = vunpack.c.l.b16 %v138
  %v438 = vunpack.c.l.b16 %v139
  %v439 = vunpack.c.l.b16 %v140
  %v440 = vunpack.c.l.b16 %v141
  %v441 = vunpack.c.l.b16 %v142
  %v442 = vunpack.c.l.b16 %v143
  %v443 = vunpack.c.l.b16 %v144
  %v444 = vunpack.c.l.b16 %v145
  %v445 = vunpack.c.l.b16 %v146
  %v446 = vunpack.c.l.b16 %v147
  %v447 = vunpack.c.l.b16 %v148
  %v448 = vunpack.c.l.b16 %v149
  %v449 = vunpack.c.l.b16 %v150
  %v450 = vunpack.c.l.b16 %v151
  %v451 = vunpack.c.l.b16 %v152
  %v452 = vunpack.c.l.b16 %v153
  %v453 = vunpack.c.l.b16 %v154
  %v454 = vunpack.c.l.b16 %v155
  %v455 = vunpack.c.l.b16 %v156
  %v456 = vunpack.c.l.b16 %v157
  %v457 = vunpack.c.l.b16 %v158
  %v458 = vunpack.c.l.b16 %v159
  %v459 = vunpack.c.l.b16 %v160
  %v460 = vunpack.c.l.b16 %v161
  %v461 = vunpack.c.l.b16 %v162
  %v462 = vunpack.c.l.b16 %v163
  %v463 = vunpack.c.l.b16 %v164
  %v464 = vunpack.c.l.b16 %v165
  %v465 = vunpack.c.l.b16 %v166
  %v466 = vunpack.c.l.b16 %v167
  %v467 = vunpack.c.l.b16 %v168
  %v468 = vunpack.c.l.b16 %v169
  %v469 = vunpack.c.l.b16 %v170
  %v470 = vunpack.c.l.b16 %v171
  %v471 = vunpack.c.l.b16 %v172
  %v472 = vunpack.c.l.b16 %v173
  %v473 = vunpack.c.l.b16 %v174
  %v474 = vunpack.c.l.b16 %v175
  %v475 = vunpack.c.l.b16 %v176
  %v476 = vunpack.c.l.b16 %v177
  %v477 = vunpack.c.l.b16 %v178
  %v478 = vunpack.c.l.b16 %v179
  %v479 = vunpack.c.l.b16 %v180
  %v480 = vunpack.c.l.b16 %v181
  %v481 = vunpack.c.l.b16 %v182
  %v482 = vpack.c.b16 %v339, %v338
  %v483 = vpack.c.b16 %v341, %v340
  %v484 = vpack.c.b16 %v343, %v342
  %v485 = vpack.c.b16 %v345, %v344
  %v486 = vpack.c.b16 %v347, %v346
  %v487 = vpack.c.b16 %v349, %v348
  %v488 = vpack.c.b16 %v351, %v350
  %v489 = vpack.c.b16 %v353, %v352
  %v490 = vpack.c.b16 %v355, %v354
  %v491 = vpack.c.b16 %v357, %v356
  %v492 = vpack.c.b16 %v359, %v358
  %v493 = vpack.c.b16 %v361, %v360
  %v494 = vpack.c.b16 %v363, %v362
  %v495 = vpack.c.b16 %v365, %v364
  %v496 = vpack.c.b16 %v367, %v366
  %v497 = vpack.c.b16 %v369, %v368
  %v498 = vpack.c.b16 %v371, %v370
  %v499 = vpack.c.b16 %v373, %v372
  %v500 = vpack.c.b16 %v375, %v374
  %v501 = vpack.c.b16 %v377, %v376
  %v502 = vpack.c.b16 %v379, %v378
  %v503 = vpack.c.b16 %v381, %v380
  %v504 = vpack.c.b16 %v383, %v382
  %v505 = vpack.c.b16 %v385, %v384
  %v506 = vpack.c.b16 %v387, %v386
  %v507 = vpack.c.b16 %v389, %v388
  %v508 = vpack.c.b16 %v391, %v390
  %v509 = vpack.c.b16 %v393, %v392
  %v510 = vpack.c.b16 %v395, %v394
  %v511 = vpack.c.b16 %v397, %v396
  %v512 = vpack.c.b16 %v399, %v398
  %v513 = vpack.c.b16 %v401, %v400
  %v514 = vpack.c.b16 %v403, %v402
  %v515 = vpack.c.b16 %v405, %v404
  %v516 = vpack.c.b16 %v407, %v406
  %v517 = vpack.c.b16 %v409, %v408
  %v518 = vpack.c.b16 %v411, %v410
  %v519 = vpack.c.b16 %v413, %v412
  %v520 = vpack.c.b16 %v415, %v414
  %v521 = vpack.c.b16 %v417, %v416
  %v522 = vpack.c.b16 %v419, %v418
  %v523 = vpack.c.b16 %v421, %v420
  %v524 = vpack.c.b16 %v423, %v422
  %v525 = vpack.c.b16 %v425, %v424
  %v526 = vpack.c.b16 %v427, %v426
  %v527 = vpack.c.b16 %v429, %v428
  %v528 = vpack.c.b16 %v431, %v430
  %v529 = vpack.c.b16 %v433, %v432
  %v530 = vpack.c.b16 %v435, %v434
  %v531 = vpack.c.b16 %v437, %v436
  %v532 = vpack.c.b16 %v439, %v438
  %v533 = vpack.c.b16 %v441, %v440
  %v534 = vpack.c.b16 %v443, %v442
  %v535 = vpack.c.b16 %v445, %v444
  %v536 = vpack.c.b16 %v447, %v446
  %v537 = vpack.c.b16 %v449, %v448
  %v538 = vpack.c.b16 %v451, %v450
  %v539 = vpack.c.b16 %v453, %v452
  %v540 = vpack.c.b16 %v455, %v454
  %v541 = vpack.c.b16 %v457, %v456
  %v542 = vpack.c.b16 %v459, %v458
  %v543 = vpack.c.b16 %v461, %v460
  %v544 = vpack.c.b16 %v463, %v462
  %v545 = vpack.c.b16 %v465, %v464
  %v546 = vpack.c.b16 %v467, %v466
  %v547 = vpack.c.b16 %v469, %v468
  %v548 = vpack.c.b16 %v471, %v470
  %v549 = vpack.c.b16 %v473, %v472
  %v550 = vpack.c.b16 %v475, %v474
  %v551 = vpack.c.b16 %v477, %v476
  %v552 = vpack.c.b16 %v479, %v478
  %v553 = vpack.c.b16 %v481, %v480
  %v558 = vunpack.c.l.b16 %v183
  %v559 = vunpack.c.l.b16 %v184
  %v560 = vunpack.c.l.b16 %v185
  %v561 = vunpack.c.l.b16 %v186
  %v562 = vpack.c.b16 %v559, %v558
  %v563 = vpack.c.b16 %v561, %v560
  %vm566 = vcmask 261120
  %v568 = vsel %vm566, %v482, 0
  %v571 = vsel %vm566, %v483, 0
  %v574 = vsel %vm566, %v484, 0
  %v577 = vsel %vm566, %v485, 0
  %v580 = vsel %vm566, %v486, 0
  %v583 = vsel %vm566, %v487, 0
  %v586 = vsel %vm566, %v488, 0
  %v589 = vsel %vm566, %v489, 0
  %v592 = vsel %vm566, %v490, 0
  %v595 = vsel %vm566, %v491, 0
  %v598 = vsel %vm566, %v492, 0
  %v601 = vsel %vm566, %v493, 0
  %v604 = vsel %vm566, %v494, 0
  %v607 = vsel %vm566, %v495, 0
  %v610 = vsel %vm566, %v496, 0
  %v613 = vsel %vm566, %v497, 0
  %v616 = vsel %vm566, %v498, 0
  %v619 = vsel %vm566, %v499, 0
  %v622 = vsel %vm566, %v500, 0
  %v625 = vsel %vm566, %v501, 0
  %v628 = vsel %vm566, %v502, 0
  %v631 = vsel %vm566, %v503, 0
  %v634 = vsel %vm566, %v504, 0
  %v637 = vsel %vm566, %v505, 0
  %v640 = vsel %vm566, %v506, 0
  %v643 = vsel %vm566, %v507, 0
  %v646 = vsel %vm566, %v508, 0
  %v649 = vsel %vm566, %v509, 0
  %v652 = vsel %vm566, %v510, 0
  %v655 = vsel %vm566, %v511, 0
  %v658 = vsel %vm566, %v512, 0
  %v661 = vsel %vm566, %v513, 0
  %v664 = vsel %vm566, %v514, 0
  %v667 = vsel %vm566, %v515, 0
  %v670 = vsel %vm566, %v516, 0
  %v673 = vsel %vm566, %v517, 0
  %v676 = vsel %vm566, %v518, 0
  %v679 = vsel %vm566, %v519, 0
  %v682 = vsel %vm566, %v520, 0
  %v685 = vsel %vm566, %v521, 0
  %v688 = vsel %vm566, %v522, 0
  %v691 = vsel %vm566, %v523, 0
  %v694 = vsel %vm566, %v524, 0
  %v697 = vsel %vm566, %v525, 0
  %v700 = vsel %vm566, %v526, 0
  %v703 = vsel %vm566, %v527, 0
  %v706 = vsel %vm566, %v528, 0
  %v709 = vsel %vm566, %v529, 0
  %v712 = vsel %vm566, %v530, 0
  %v715 = vsel %vm566, %v531, 0
  %v718 = vsel %vm566, %v532, 0
  %v721 = vsel %vm566, %v533, 0
  %v724 = vsel %vm566, %v534, 0
  %v727 = vsel %vm566, %v535, 0
  %v730 = vsel %vm566, %v536, 0
  %v733 = vsel %vm566, %v537, 0
  %v736 = vsel %vm566, %v538, 0
  %v739 = vsel %vm566, %v539, 0
  %v742 = vsel %vm566, %v540, 0
  %v745 = vsel %vm566, %v541, 0
  %v748 = vsel %vm566, %v542, 0
  %v751 = vsel %vm566, %v543, 0
  %v754 = vsel %vm566, %v544, 0
  %v757 = vsel %vm566, %v545, 0
  %v760 = vsel %vm566, %v546, 0
  %v763 = vsel %vm566, %v547, 0
  %v766 = vsel %vm566, %v548, 0
  %v769 = vsel %vm566, %v549, 0
  %v772 = vsel %vm566, %v550, 0
  %v775 = vsel %vm566, %v551, 0
  %v778 = vsel %vm566, %v552, 0
  %v781 = vsel %vm566, %v553, 0
  %783 = vmatprep.subr.bf16.mxu0 0
  %784 = vmatpush1.bf16.msra.mxu0 %v562
  %785 = vmatprep.subr.bf16.mxu0 0
  %786 = vmatpush1.bf16.msra.mxu0 %v563
  %787 = vmatprep.subr.bf16.mxu0 0
  %788 = vmatpush1.bf16.msra.mxu0 0
  %789 = vmatprep.subr.bf16.mxu0 0
  %790 = vmatpush1.bf16.msra.mxu0 0
  %791 = vmatprep.subr.bf16.mxu0 0
  %792 = vmatpush1.bf16.msra.mxu0 0
  %793 = vmatprep.subr.bf16.mxu0 0
  %794 = vmatpush1.bf16.msra.mxu0 0
  %795 = vmatprep.subr.bf16.mxu0 0
  %796 = vmatpush1.bf16.msra.mxu0 0
  %797 = vmatprep.subr.bf16.mxu0 0
  %798 = vmatpush1.bf16.msra.mxu0 0
  %799 = vmatprep.subr.bf16.mxu0 0
  %800 = vmatpush1.bf16.msra.mxu0 0
  %801 = vmatprep.subr.bf16.mxu0 0
  %802 = vmatpush1.bf16.msra.mxu0 0
  %803 = vmatprep.subr.bf16.mxu0 0
  %804 = vmatpush1.bf16.msra.mxu0 0
  %805 = vmatprep.subr.bf16.mxu0 0
  %806 = vmatpush1.bf16.msra.mxu0 0
  %807 = vmatprep.subr.bf16.mxu0 0
  %808 = vmatpush1.bf16.msra.mxu0 0
  %809 = vmatprep.subr.bf16.mxu0 0
  %810 = vmatpush1.bf16.msra.mxu0 0
  %811 = vmatprep.subr.bf16.mxu0 0
  %812 = vmatpush1.bf16.msra.mxu0 0
  %813 = vmatprep.subr.bf16.mxu0 0
  %814 = vmatpush1.bf16.msra.mxu0 0
  %815 = vmatprep.mubr.bf16.mxu0 0
  %816 = vmatmul.mubr.bf16.gmra.mrb[0].mxu0 %v568
  %v817 = vpop.f32.mrb[0].mxu0
  %v818 = vadd.f32 %v192, %v817
  %v819 = vpop.f32.mrb[0].mxu0
  %v820 = vpop.f32.mrb[0].mxu0
  %v821 = vadd.f32 %v192, %v820
  %v822 = vpop.f32.mrb[0].mxu0
  %823 = vmatprep.mubr.bf16.mxu0 0
  %824 = vmatmul.mubr.bf16.gmra.mrb[0].mxu0 %v571
  %v825 = vpop.f32.mrb[0].mxu0
  %v826 = vadd.f32 %v192, %v825
  %v827 = vpop.f32.mrb[0].mxu0
  %v828 = vpop.f32.mrb[0].mxu0
  %v829 = vadd.f32 %v192, %v828
  %v830 = vpop.f32.mrb[0].mxu0
  %831 = vmatprep.mubr.bf16.mxu0 0
  %832 = vmatmul.mubr.bf16.gmra.mrb[0].mxu0 %v574
  %v833 = vpop.f32.mrb[0].mxu0
  %v834 = vadd.f32 %v192, %v833
  %v835 = vpop.f32.mrb[0].mxu0
  %v836 = vpop.f32.mrb[0].mxu0
  %v837 = vadd.f32 %v192, %v836
  %v838 = vpop.f32.mrb[0].mxu0
  %839 = vmatprep.mubr.bf16.mxu0 0
  %840 = vmatmul.mubr.bf16.gmra.mrb[0].mxu0 %v577
  %v841 = vpop.f32.mrb[0].mxu0
  %v842 = vadd.f32 %v192, %v841
  %v843 = vpop.f32.mrb[0].mxu0
  %v844 = vpop.f32.mrb[0].mxu0
  %v845 = vadd.f32 %v192, %v844
  %v846 = vpop.f32.mrb[0].mxu0
  %847 = vmatprep.mubr.bf16.mxu0 0
  %848 = vmatmul.mubr.bf16.gmra.mrb[0].mxu0 %v580
  %v849 = vpop.f32.mrb[0].mxu0
  %v850 = vadd.f32 %v192, %v849
  %v851 = vpop.f32.mrb[0].mxu0
  %v852 = vpop.f32.mrb[0].mxu0
  %v853 = vadd.f32 %v192, %v852
  %v854 = vpop.f32.mrb[0].mxu0
  %855 = vmatprep.mubr.bf16.mxu0 0
  %856 = vmatmul.mubr.bf16.gmra.mrb[0].mxu0 %v583
  %v857 = vpop.f32.mrb[0].mxu0
  %v858 = vadd.f32 %v192, %v857
  %v859 = vpop.f32.mrb[0].mxu0
  %v860 = vpop.f32.mrb[0].mxu0
  %v861 = vadd.f32 %v192, %v860
  %v862 = vpop.f32.mrb[0].mxu0
  %863 = vmatprep.mubr.bf16.mxu0 0
  %864 = vmatmul.mubr.bf16.gmra.mrb[0].mxu0 %v586
  %v865 = vpop.f32.mrb[0].mxu0
  %v866 = vadd.f32 %v192, %v865
  %v867 = vpop.f32.mrb[0].mxu0
  %v868 = vpop.f32.mrb[0].mxu0
  %v869 = vadd.f32 %v192, %v868
  %v870 = vpop.f32.mrb[0].mxu0
  %871 = vmatprep.mubr.bf16.mxu0 0
  %872 = vmatmul.mubr.bf16.gmra.mrb[0].mxu0 %v589
  %v873 = vpop.f32.mrb[0].mxu0
  %v874 = vadd.f32 %v192, %v873
  %v875 = vpop.f32.mrb[0].mxu0
  %v876 = vpop.f32.mrb[0].mxu0
  %v877 = vadd.f32 %v192, %v876
  %v878 = vpop.f32.mrb[0].mxu0
  %879 = vmatprep.mubr.bf16.mxu0 0
  %880 = vmatmul.mubr.bf16.gmra.mrb[0].mxu0 %v592
  %v881 = vpop.f32.mrb[0].mxu0
  %v882 = vadd.f32 %v192, %v881
  %v883 = vpop.f32.mrb[0].mxu0
  %v884 = vpop.f32.mrb[0].mxu0
  %v885 = vadd.f32 %v192, %v884
  %v886 = vpop.f32.mrb[0].mxu0
  %887 = vmatprep.mubr.bf16.mxu0 0
  %888 = vmatmul.mubr.bf16.gmra.mrb[0].mxu0 %v595
  %v889 = vpop.f32.mrb[0].mxu0
  %v890 = vadd.f32 %v192, %v889
  %v891 = vpop.f32.mrb[0].mxu0
  %v892 = vpop.f32.mrb[0].mxu0
  %v893 = vadd.f32 %v192, %v892
  %v894 = vpop.f32.mrb[0].mxu0
  %895 = vmatprep.mubr.bf16.mxu0 0
  %896 = vmatmul.mubr.bf16.gmra.mrb[0].mxu0 %v598
  %v897 = vpop.f32.mrb[0].mxu0
  %v898 = vadd.f32 %v192, %v897
  %v899 = vpop.f32.mrb[0].mxu0
  %v900 = vpop.f32.mrb[0].mxu0
  %v901 = vadd.f32 %v192, %v900
  %v902 = vpop.f32.mrb[0].mxu0
  %903 = vmatprep.mubr.bf16.mxu0 0
  %904 = vmatmul.mubr.bf16.gmra.mrb[0].mxu0 %v601
  %v905 = vpop.f32.mrb[0].mxu0
  %v906 = vadd.f32 %v192, %v905
  %v907 = vpop.f32.mrb[0].mxu0
  %v908 = vpop.f32.mrb[0].mxu0
  %v909 = vadd.f32 %v192, %v908
  %v910 = vpop.f32.mrb[0].mxu0
  %911 = vmatprep.mubr.bf16.mxu0 0
  %912 = vmatmul.mubr.bf16.gmra.mrb[0].mxu0 %v604
  %v913 = vpop.f32.mrb[0].mxu0
  %v914 = vadd.f32 %v192, %v913
  %v915 = vpop.f32.mrb[0].mxu0
  %v916 = vpop.f32.mrb[0].mxu0
  %v917 = vadd.f32 %v192, %v916
  %v918 = vpop.f32.mrb[0].mxu0
  %919 = vmatprep.mubr.bf16.mxu0 0
  %920 = vmatmul.mubr.bf16.gmra.mrb[0].mxu0 %v607
  %v921 = vpop.f32.mrb[0].mxu0
  %v922 = vadd.f32 %v192, %v921
  %v923 = vpop.f32.mrb[0].mxu0
  %v924 = vpop.f32.mrb[0].mxu0
  %v925 = vadd.f32 %v192, %v924
  %v926 = vpop.f32.mrb[0].mxu0
  %927 = vmatprep.mubr.bf16.mxu0 0
  %928 = vmatmul.mubr.bf16.gmra.mrb[0].mxu0 %v610
  %v929 = vpop.f32.mrb[0].mxu0
  %v930 = vadd.f32 %v192, %v929
  %v931 = vpop.f32.mrb[0].mxu0
  %v932 = vpop.f32.mrb[0].mxu0
  %v933 = vadd.f32 %v192, %v932
  %v934 = vpop.f32.mrb[0].mxu0
  %935 = vmatprep.mubr.bf16.mxu0 0
  %936 = vmatmul.mubr.bf16.gmra.mrb[0].mxu0 %v613
  %v937 = vpop.f32.mrb[0].mxu0
  %v938 = vadd.f32 %v192, %v937
  %v939 = vpop.f32.mrb[0].mxu0
  %v940 = vpop.f32.mrb[0].mxu0
  %v941 = vadd.f32 %v192, %v940
  %v942 = vpop.f32.mrb[0].mxu0
  %943 = vmatprep.mubr.bf16.mxu0 0
  %944 = vmatmul.mubr.bf16.gmra.mrb[0].mxu0 %v616
  %v945 = vpop.f32.mrb[0].mxu0
  %v946 = vadd.f32 %v192, %v945
  %v947 = vpop.f32.mrb[0].mxu0
  %v948 = vpop.f32.mrb[0].mxu0
  %v949 = vadd.f32 %v192, %v948
  %v950 = vpop.f32.mrb[0].mxu0
  %951 = vmatprep.mubr.bf16.mxu0 0
  %952 = vmatmul.mubr.bf16.gmra.mrb[0].mxu0 %v619
  %v953 = vpop.f32.mrb[0].mxu0
  %v954 = vadd.f32 %v192, %v953
  %v955 = vpop.f32.mrb[0].mxu0
  %v956 = vpop.f32.mrb[0].mxu0
  %v957 = vadd.f32 %v192, %v956
  %v958 = vpop.f32.mrb[0].mxu0
  %959 = vmatprep.mubr.bf16.mxu0 0
  %960 = vmatmul.mubr.bf16.gmra.mrb[0].mxu0 %v622
  %v961 = vpop.f32.mrb[0].mxu0
  %v962 = vadd.f32 %v192, %v961
  %v963 = vpop.f32.mrb[0].mxu0
  %v964 = vpop.f32.mrb[0].mxu0
  %v965 = vadd.f32 %v192, %v964
  %v966 = vpop.f32.mrb[0].mxu0
  %967 = vmatprep.mubr.bf16.mxu0 0
  %968 = vmatmul.mubr.bf16.gmra.mrb[0].mxu0 %v625
  %v969 = vpop.f32.mrb[0].mxu0
  %v970 = vadd.f32 %v192, %v969
  %v971 = vpop.f32.mrb[0].mxu0
  %v972 = vpop.f32.mrb[0].mxu0
  %v973 = vadd.f32 %v192, %v972
  %v974 = vpop.f32.mrb[0].mxu0
  %975 = vmatprep.mubr.bf16.mxu0 0
  %976 = vmatmul.mubr.bf16.gmra.mrb[0].mxu0 %v628
  %v977 = vpop.f32.mrb[0].mxu0
  %v978 = vadd.f32 %v192, %v977
  %v979 = vpop.f32.mrb[0].mxu0
  %v980 = vpop.f32.mrb[0].mxu0
  %v981 = vadd.f32 %v192, %v980
  %v982 = vpop.f32.mrb[0].mxu0
  %983 = vmatprep.mubr.bf16.mxu0 0
  %984 = vmatmul.mubr.bf16.gmra.mrb[0].mxu0 %v631
  %v985 = vpop.f32.mrb[0].mxu0
  %v986 = vadd.f32 %v192, %v985
  %v987 = vpop.f32.mrb[0].mxu0
  %v988 = vpop.f32.mrb[0].mxu0
  %v989 = vadd.f32 %v192, %v988
  %v990 = vpop.f32.mrb[0].mxu0
  %991 = vmatprep.mubr.bf16.mxu0 0
  %992 = vmatmul.mubr.bf16.gmra.mrb[0].mxu0 %v634
  %v993 = vpop.f32.mrb[0].mxu0
  %v994 = vadd.f32 %v192, %v993
  %v995 = vpop.f32.mrb[0].mxu0
  %v996 = vpop.f32.mrb[0].mxu0
  %v997 = vadd.f32 %v192, %v996
  %v998 = vpop.f32.mrb[0].mxu0
  %999 = vmatprep.mubr.bf16.mxu0 0
  %1000 = vmatmul.mubr.bf16.gmra.mrb[0].mxu0 %v637
  %v1001 = vpop.f32.mrb[0].mxu0
  %v1002 = vadd.f32 %v192, %v1001
  %v1003 = vpop.f32.mrb[0].mxu0
  %v1004 = vpop.f32.mrb[0].mxu0
  %v1005 = vadd.f32 %v192, %v1004
  %v1006 = vpop.f32.mrb[0].mxu0
  %1007 = vmatprep.mubr.bf16.mxu0 0
  %1008 = vmatmul.mubr.bf16.gmra.mrb[0].mxu0 %v640
  %v1009 = vpop.f32.mrb[0].mxu0
  %v1010 = vadd.f32 %v192, %v1009
  %v1011 = vpop.f32.mrb[0].mxu0
  %v1012 = vpop.f32.mrb[0].mxu0
  %v1013 = vadd.f32 %v192, %v1012
  %v1014 = vpop.f32.mrb[0].mxu0
  %1015 = vmatprep.mubr.bf16.mxu0 0
  %1016 = vmatmul.mubr.bf16.gmra.mrb[0].mxu0 %v643
  %v1017 = vpop.f32.mrb[0].mxu0
  %v1018 = vadd.f32 %v192, %v1017
  %v1019 = vpop.f32.mrb[0].mxu0
  %v1020 = vpop.f32.mrb[0].mxu0
  %v1021 = vadd.f32 %v192, %v1020
  %v1022 = vpop.f32.mrb[0].mxu0
  %1023 = vmatprep.mubr.bf16.mxu0 0
  %1024 = vmatmul.mubr.bf16.gmra.mrb[0].mxu0 %v646
  %v1025 = vpop.f32.mrb[0].mxu0
  %v1026 = vadd.f32 %v192, %v1025
  %v1027 = vpop.f32.mrb[0].mxu0
  %v1028 = vpop.f32.mrb[0].mxu0
  %v1029 = vadd.f32 %v192, %v1028
  %v1030 = vpop.f32.mrb[0].mxu0
  %1031 = vmatprep.mubr.bf16.mxu0 0
  %1032 = vmatmul.mubr.bf16.gmra.mrb[0].mxu0 %v649
  %v1033 = vpop.f32.mrb[0].mxu0
  %v1034 = vadd.f32 %v192, %v1033
  %v1035 = vpop.f32.mrb[0].mxu0
  %v1036 = vpop.f32.mrb[0].mxu0
  %v1037 = vadd.f32 %v192, %v1036
  %v1038 = vpop.f32.mrb[0].mxu0
  %1039 = vmatprep.mubr.bf16.mxu0 0
  %1040 = vmatmul.mubr.bf16.gmra.mrb[0].mxu0 %v652
  %v1041 = vpop.f32.mrb[0].mxu0
  %v1042 = vadd.f32 %v192, %v1041
  %v1043 = vpop.f32.mrb[0].mxu0
  %v1044 = vpop.f32.mrb[0].mxu0
  %v1045 = vadd.f32 %v192, %v1044
  %v1046 = vpop.f32.mrb[0].mxu0
  %1047 = vmatprep.mubr.bf16.mxu0 0
  %1048 = vmatmul.mubr.bf16.gmra.mrb[0].mxu0 %v655
  %v1049 = vpop.f32.mrb[0].mxu0
  %v1050 = vadd.f32 %v192, %v1049
  %v1051 = vpop.f32.mrb[0].mxu0
  %v1052 = vpop.f32.mrb[0].mxu0
  %v1053 = vadd.f32 %v192, %v1052
  %v1054 = vpop.f32.mrb[0].mxu0
  %1055 = vmatprep.mubr.bf16.mxu0 0
  %1056 = vmatmul.mubr.bf16.gmra.mrb[0].mxu0 %v658
  %v1057 = vpop.f32.mrb[0].mxu0
  %v1058 = vadd.f32 %v192, %v1057
  %v1059 = vpop.f32.mrb[0].mxu0
  %v1060 = vpop.f32.mrb[0].mxu0
  %v1061 = vadd.f32 %v192, %v1060
  %v1062 = vpop.f32.mrb[0].mxu0
  %1063 = vmatprep.mubr.bf16.mxu0 0
  %1064 = vmatmul.mubr.bf16.gmra.mrb[0].mxu0 %v661
  %v1065 = vpop.f32.mrb[0].mxu0
  %v1066 = vadd.f32 %v192, %v1065
  %v1067 = vpop.f32.mrb[0].mxu0
  %v1068 = vpop.f32.mrb[0].mxu0
  %v1069 = vadd.f32 %v192, %v1068
  %v1070 = vpop.f32.mrb[0].mxu0
  %1071 = vmatprep.mubr.bf16.mxu0 0
  %1072 = vmatmul.mubr.bf16.gmra.mrb[0].mxu0 %v664
  %v1073 = vpop.f32.mrb[0].mxu0
  %v1074 = vadd.f32 %v192, %v1073
  %v1075 = vpop.f32.mrb[0].mxu0
  %v1076 = vpop.f32.mrb[0].mxu0
  %v1077 = vadd.f32 %v192, %v1076
  %v1078 = vpop.f32.mrb[0].mxu0
  %1079 = vmatprep.mubr.bf16.mxu0 0
  %1080 = vmatmul.mubr.bf16.gmra.mrb[0].mxu0 %v667
  %v1081 = vpop.f32.mrb[0].mxu0
  %v1082 = vadd.f32 %v192, %v1081
  %v1083 = vpop.f32.mrb[0].mxu0
  %v1084 = vpop.f32.mrb[0].mxu0
  %v1085 = vadd.f32 %v192, %v1084
  %v1086 = vpop.f32.mrb[0].mxu0
  %1087 = vmatprep.mubr.bf16.mxu0 0
  %1088 = vmatmul.mubr.bf16.gmra.mrb[0].mxu0 %v670
  %v1089 = vpop.f32.mrb[0].mxu0
  %v1090 = vadd.f32 %v192, %v1089
  %v1091 = vpop.f32.mrb[0].mxu0
  %v1092 = vpop.f32.mrb[0].mxu0
  %v1093 = vadd.f32 %v192, %v1092
  %v1094 = vpop.f32.mrb[0].mxu0
  %1095 = vmatprep.mubr.bf16.mxu0 0
  %1096 = vmatmul.mubr.bf16.gmra.mrb[0].mxu0 %v673
  %v1097 = vpop.f32.mrb[0].mxu0
  %v1098 = vadd.f32 %v192, %v1097
  %v1099 = vpop.f32.mrb[0].mxu0
  %v1100 = vpop.f32.mrb[0].mxu0
  %v1101 = vadd.f32 %v192, %v1100
  %v1102 = vpop.f32.mrb[0].mxu0
  %1103 = vmatprep.mubr.bf16.mxu0 0
  %1104 = vmatmul.mubr.bf16.gmra.mrb[0].mxu0 %v676
  %v1105 = vpop.f32.mrb[0].mxu0
  %v1106 = vadd.f32 %v192, %v1105
  %v1107 = vpop.f32.mrb[0].mxu0
  %v1108 = vpop.f32.mrb[0].mxu0
  %v1109 = vadd.f32 %v192, %v1108
  %v1110 = vpop.f32.mrb[0].mxu0
  %1111 = vmatprep.mubr.bf16.mxu0 0
  %1112 = vmatmul.mubr.bf16.gmra.mrb[0].mxu0 %v679
  %v1113 = vpop.f32.mrb[0].mxu0
  %v1114 = vadd.f32 %v192, %v1113
  %v1115 = vpop.f32.mrb[0].mxu0
  %v1116 = vpop.f32.mrb[0].mxu0
  %v1117 = vadd.f32 %v192, %v1116
  %v1118 = vpop.f32.mrb[0].mxu0
  %1119 = vmatprep.mubr.bf16.mxu0 0
  %1120 = vmatmul.mubr.bf16.gmra.mrb[0].mxu0 %v682
  %v1121 = vpop.f32.mrb[0].mxu0
  %v1122 = vadd.f32 %v192, %v1121
  %v1123 = vpop.f32.mrb[0].mxu0
  %v1124 = vpop.f32.mrb[0].mxu0
  %v1125 = vadd.f32 %v192, %v1124
  %v1126 = vpop.f32.mrb[0].mxu0
  %1127 = vmatprep.mubr.bf16.mxu0 0
  %1128 = vmatmul.mubr.bf16.gmra.mrb[0].mxu0 %v685
  %v1129 = vpop.f32.mrb[0].mxu0
  %v1130 = vadd.f32 %v192, %v1129
  %v1131 = vpop.f32.mrb[0].mxu0
  %v1132 = vpop.f32.mrb[0].mxu0
  %v1133 = vadd.f32 %v192, %v1132
  %v1134 = vpop.f32.mrb[0].mxu0
  %1135 = vmatprep.mubr.bf16.mxu0 0
  %1136 = vmatmul.mubr.bf16.gmra.mrb[0].mxu0 %v688
  %v1137 = vpop.f32.mrb[0].mxu0
  %v1138 = vadd.f32 %v192, %v1137
  %v1139 = vpop.f32.mrb[0].mxu0
  %v1140 = vpop.f32.mrb[0].mxu0
  %v1141 = vadd.f32 %v192, %v1140
  %v1142 = vpop.f32.mrb[0].mxu0
  %1143 = vmatprep.mubr.bf16.mxu0 0
  %1144 = vmatmul.mubr.bf16.gmra.mrb[0].mxu0 %v691
  %v1145 = vpop.f32.mrb[0].mxu0
  %v1146 = vadd.f32 %v192, %v1145
  %v1147 = vpop.f32.mrb[0].mxu0
  %v1148 = vpop.f32.mrb[0].mxu0
  %v1149 = vadd.f32 %v192, %v1148
  %v1150 = vpop.f32.mrb[0].mxu0
  %1151 = vmatprep.mubr.bf16.mxu0 0
  %1152 = vmatmul.mubr.bf16.gmra.mrb[0].mxu0 %v694
  %v1153 = vpop.f32.mrb[0].mxu0
  %v1154 = vadd.f32 %v192, %v1153
  %v1155 = vpop.f32.mrb[0].mxu0
  %v1156 = vpop.f32.mrb[0].mxu0
  %v1157 = vadd.f32 %v192, %v1156
  %v1158 = vpop.f32.mrb[0].mxu0
  %1159 = vmatprep.mubr.bf16.mxu0 0
  %1160 = vmatmul.mubr.bf16.gmra.mrb[0].mxu0 %v697
  %v1161 = vpop.f32.mrb[0].mxu0
  %v1162 = vadd.f32 %v192, %v1161
  %v1163 = vpop.f32.mrb[0].mxu0
  %v1164 = vpop.f32.mrb[0].mxu0
  %v1165 = vadd.f32 %v192, %v1164
  %v1166 = vpop.f32.mrb[0].mxu0
  %1167 = vmatprep.mubr.bf16.mxu0 0
  %1168 = vmatmul.mubr.bf16.gmra.mrb[0].mxu0 %v700
  %v1169 = vpop.f32.mrb[0].mxu0
  %v1170 = vadd.f32 %v192, %v1169
  %v1171 = vpop.f32.mrb[0].mxu0
  %v1172 = vpop.f32.mrb[0].mxu0
  %v1173 = vadd.f32 %v192, %v1172
  %v1174 = vpop.f32.mrb[0].mxu0
  %1175 = vmatprep.mubr.bf16.mxu0 0
  %1176 = vmatmul.mubr.bf16.gmra.mrb[0].mxu0 %v703
  %v1177 = vpop.f32.mrb[0].mxu0
  %v1178 = vadd.f32 %v192, %v1177
  %v1179 = vpop.f32.mrb[0].mxu0
  %v1180 = vpop.f32.mrb[0].mxu0
  %v1181 = vadd.f32 %v192, %v1180
  %v1182 = vpop.f32.mrb[0].mxu0
  %1183 = vmatprep.mubr.bf16.mxu0 0
  %1184 = vmatmul.mubr.bf16.gmra.mrb[0].mxu0 %v706
  %v1185 = vpop.f32.mrb[0].mxu0
  %v1186 = vadd.f32 %v192, %v1185
  %v1187 = vpop.f32.mrb[0].mxu0
  %v1188 = vpop.f32.mrb[0].mxu0
  %v1189 = vadd.f32 %v192, %v1188
  %v1190 = vpop.f32.mrb[0].mxu0
  %1191 = vmatprep.mubr.bf16.mxu0 0
  %1192 = vmatmul.mubr.bf16.gmra.mrb[0].mxu0 %v709
  %v1193 = vpop.f32.mrb[0].mxu0
  %v1194 = vadd.f32 %v192, %v1193
  %v1195 = vpop.f32.mrb[0].mxu0
  %v1196 = vpop.f32.mrb[0].mxu0
  %v1197 = vadd.f32 %v192, %v1196
  %v1198 = vpop.f32.mrb[0].mxu0
  %1199 = vmatprep.mubr.bf16.mxu0 0
  %1200 = vmatmul.mubr.bf16.gmra.mrb[0].mxu0 %v712
  %v1201 = vpop.f32.mrb[0].mxu0
  %v1202 = vadd.f32 %v192, %v1201
  %v1203 = vpop.f32.mrb[0].mxu0
  %v1204 = vpop.f32.mrb[0].mxu0
  %v1205 = vadd.f32 %v192, %v1204
  %v1206 = vpop.f32.mrb[0].mxu0
  %1207 = vmatprep.mubr.bf16.mxu0 0
  %1208 = vmatmul.mubr.bf16.gmra.mrb[0].mxu0 %v715
  %v1209 = vpop.f32.mrb[0].mxu0
  %v1210 = vadd.f32 %v192, %v1209
  %v1211 = vpop.f32.mrb[0].mxu0
  %v1212 = vpop.f32.mrb[0].mxu0
  %v1213 = vadd.f32 %v192, %v1212
  %v1214 = vpop.f32.mrb[0].mxu0
  %1215 = vmatprep.mubr.bf16.mxu0 0
  %1216 = vmatmul.mubr.bf16.gmra.mrb[0].mxu0 %v718
  %v1217 = vpop.f32.mrb[0].mxu0
  %v1218 = vadd.f32 %v192, %v1217
  %v1219 = vpop.f32.mrb[0].mxu0
  %v1220 = vpop.f32.mrb[0].mxu0
  %v1221 = vadd.f32 %v192, %v1220
  %v1222 = vpop.f32.mrb[0].mxu0
  %1223 = vmatprep.mubr.bf16.mxu0 0
  %1224 = vmatmul.mubr.bf16.gmra.mrb[0].mxu0 %v721
  %v1225 = vpop.f32.mrb[0].mxu0
  %v1226 = vadd.f32 %v192, %v1225
  %v1227 = vpop.f32.mrb[0].mxu0
  %v1228 = vpop.f32.mrb[0].mxu0
  %v1229 = vadd.f32 %v192, %v1228
  %v1230 = vpop.f32.mrb[0].mxu0
  %1231 = vmatprep.mubr.bf16.mxu0 0
  %1232 = vmatmul.mubr.bf16.gmra.mrb[0].mxu0 %v724
  %v1233 = vpop.f32.mrb[0].mxu0
  %v1234 = vadd.f32 %v192, %v1233
  %v1235 = vpop.f32.mrb[0].mxu0
  %v1236 = vpop.f32.mrb[0].mxu0
  %v1237 = vadd.f32 %v192, %v1236
  %v1238 = vpop.f32.mrb[0].mxu0
  %1239 = vmatprep.mubr.bf16.mxu0 0
  %1240 = vmatmul.mubr.bf16.gmra.mrb[0].mxu0 %v727
  %v1241 = vpop.f32.mrb[0].mxu0
  %v1242 = vadd.f32 %v192, %v1241
  %v1243 = vpop.f32.mrb[0].mxu0
  %v1244 = vpop.f32.mrb[0].mxu0
  %v1245 = vadd.f32 %v192, %v1244
  %v1246 = vpop.f32.mrb[0].mxu0
  %1247 = vmatprep.mubr.bf16.mxu0 0
  %1248 = vmatmul.mubr.bf16.gmra.mrb[0].mxu0 %v730
  %v1249 = vpop.f32.mrb[0].mxu0
  %v1250 = vadd.f32 %v192, %v1249
  %v1251 = vpop.f32.mrb[0].mxu0
  %v1252 = vpop.f32.mrb[0].mxu0
  %v1253 = vadd.f32 %v192, %v1252
  %v1254 = vpop.f32.mrb[0].mxu0
  %1255 = vmatprep.mubr.bf16.mxu0 0
  %1256 = vmatmul.mubr.bf16.gmra.mrb[0].mxu0 %v733
  %v1257 = vpop.f32.mrb[0].mxu0
  %v1258 = vadd.f32 %v192, %v1257
  %v1259 = vpop.f32.mrb[0].mxu0
  %v1260 = vpop.f32.mrb[0].mxu0
  %v1261 = vadd.f32 %v192, %v1260
  %v1262 = vpop.f32.mrb[0].mxu0
  %1263 = vmatprep.mubr.bf16.mxu0 0
  %1264 = vmatmul.mubr.bf16.gmra.mrb[0].mxu0 %v736
  %v1265 = vpop.f32.mrb[0].mxu0
  %v1266 = vadd.f32 %v192, %v1265
  %v1267 = vpop.f32.mrb[0].mxu0
  %v1268 = vpop.f32.mrb[0].mxu0
  %v1269 = vadd.f32 %v192, %v1268
  %v1270 = vpop.f32.mrb[0].mxu0
  %1271 = vmatprep.mubr.bf16.mxu0 0
  %1272 = vmatmul.mubr.bf16.gmra.mrb[0].mxu0 %v739
  %v1273 = vpop.f32.mrb[0].mxu0
  %v1274 = vadd.f32 %v192, %v1273
  %v1275 = vpop.f32.mrb[0].mxu0
  %v1276 = vpop.f32.mrb[0].mxu0
  %v1277 = vadd.f32 %v192, %v1276
  %v1278 = vpop.f32.mrb[0].mxu0
  %1279 = vmatprep.mubr.bf16.mxu0 0
  %1280 = vmatmul.mubr.bf16.gmra.mrb[0].mxu0 %v742
  %v1281 = vpop.f32.mrb[0].mxu0
  %v1282 = vadd.f32 %v192, %v1281
  %v1283 = vpop.f32.mrb[0].mxu0
  %v1284 = vpop.f32.mrb[0].mxu0
  %v1285 = vadd.f32 %v192, %v1284
  %v1286 = vpop.f32.mrb[0].mxu0
  %1287 = vmatprep.mubr.bf16.mxu0 0
  %1288 = vmatmul.mubr.bf16.gmra.mrb[0].mxu0 %v745
  %v1289 = vpop.f32.mrb[0].mxu0
  %v1290 = vadd.f32 %v192, %v1289
  %v1291 = vpop.f32.mrb[0].mxu0
  %v1292 = vpop.f32.mrb[0].mxu0
  %v1293 = vadd.f32 %v192, %v1292
  %v1294 = vpop.f32.mrb[0].mxu0
  %1295 = vmatprep.mubr.bf16.mxu0 0
  %1296 = vmatmul.mubr.bf16.gmra.mrb[0].mxu0 %v748
  %v1297 = vpop.f32.mrb[0].mxu0
  %v1298 = vadd.f32 %v192, %v1297
  %v1299 = vpop.f32.mrb[0].mxu0
  %v1300 = vpop.f32.mrb[0].mxu0
  %v1301 = vadd.f32 %v192, %v1300
  %v1302 = vpop.f32.mrb[0].mxu0
  %1303 = vmatprep.mubr.bf16.mxu0 0
  %1304 = vmatmul.mubr.bf16.gmra.mrb[0].mxu0 %v751
  %v1305 = vpop.f32.mrb[0].mxu0
  %v1306 = vadd.f32 %v192, %v1305
  %v1307 = vpop.f32.mrb[0].mxu0
  %v1308 = vpop.f32.mrb[0].mxu0
  %v1309 = vadd.f32 %v192, %v1308
  %v1310 = vpop.f32.mrb[0].mxu0
  %1311 = vmatprep.mubr.bf16.mxu0 0
  %1312 = vmatmul.mubr.bf16.gmra.mrb[0].mxu0 %v754
  %v1313 = vpop.f32.mrb[0].mxu0
  %v1314 = vadd.f32 %v192, %v1313
  %v1315 = vpop.f32.mrb[0].mxu0
  %v1316 = vpop.f32.mrb[0].mxu0
  %v1317 = vadd.f32 %v192, %v1316
  %v1318 = vpop.f32.mrb[0].mxu0
  %1319 = vmatprep.mubr.bf16.mxu0 0
  %1320 = vmatmul.mubr.bf16.gmra.mrb[0].mxu0 %v757
  %v1321 = vpop.f32.mrb[0].mxu0
  %v1322 = vadd.f32 %v192, %v1321
  %v1323 = vpop.f32.mrb[0].mxu0
  %v1324 = vpop.f32.mrb[0].mxu0
  %v1325 = vadd.f32 %v192, %v1324
  %v1326 = vpop.f32.mrb[0].mxu0
  %1327 = vmatprep.mubr.bf16.mxu0 0
  %1328 = vmatmul.mubr.bf16.gmra.mrb[0].mxu0 %v760
  %v1329 = vpop.f32.mrb[0].mxu0
  %v1330 = vadd.f32 %v192, %v1329
  %v1331 = vpop.f32.mrb[0].mxu0
  %v1332 = vpop.f32.mrb[0].mxu0
  %v1333 = vadd.f32 %v192, %v1332
  %v1334 = vpop.f32.mrb[0].mxu0
  %1335 = vmatprep.mubr.bf16.mxu0 0
  %1336 = vmatmul.mubr.bf16.gmra.mrb[0].mxu0 %v763
  %v1337 = vpop.f32.mrb[0].mxu0
  %v1338 = vadd.f32 %v192, %v1337
  %v1339 = vpop.f32.mrb[0].mxu0
  %v1340 = vpop.f32.mrb[0].mxu0
  %v1341 = vadd.f32 %v192, %v1340
  %v1342 = vpop.f32.mrb[0].mxu0
  %1343 = vmatprep.mubr.bf16.mxu0 0
  %1344 = vmatmul.mubr.bf16.gmra.mrb[0].mxu0 %v766
  %v1345 = vpop.f32.mrb[0].mxu0
  %v1346 = vadd.f32 %v192, %v1345
  %v1347 = vpop.f32.mrb[0].mxu0
  %v1348 = vpop.f32.mrb[0].mxu0
  %v1349 = vadd.f32 %v192, %v1348
  %v1350 = vpop.f32.mrb[0].mxu0
  %1351 = vmatprep.mubr.bf16.mxu0 0
  %1352 = vmatmul.mubr.bf16.gmra.mrb[0].mxu0 %v769
  %v1353 = vpop.f32.mrb[0].mxu0
  %v1354 = vadd.f32 %v192, %v1353
  %v1355 = vpop.f32.mrb[0].mxu0
  %v1356 = vpop.f32.mrb[0].mxu0
  %v1357 = vadd.f32 %v192, %v1356
  %v1358 = vpop.f32.mrb[0].mxu0
  %1359 = vmatprep.mubr.bf16.mxu0 0
  %1360 = vmatmul.mubr.bf16.gmra.mrb[0].mxu0 %v772
  %v1361 = vpop.f32.mrb[0].mxu0
  %v1362 = vadd.f32 %v192, %v1361
  %v1363 = vpop.f32.mrb[0].mxu0
  %v1364 = vpop.f32.mrb[0].mxu0
  %v1365 = vadd.f32 %v192, %v1364
  %v1366 = vpop.f32.mrb[0].mxu0
  %1367 = vmatprep.mubr.bf16.mxu0 0
  %1368 = vmatmul.mubr.bf16.gmra.mrb[0].mxu0 %v775
  %v1369 = vpop.f32.mrb[0].mxu0
  %v1370 = vadd.f32 %v192, %v1369
  %v1371 = vpop.f32.mrb[0].mxu0
  %v1372 = vpop.f32.mrb[0].mxu0
  %v1373 = vadd.f32 %v192, %v1372
  %v1374 = vpop.f32.mrb[0].mxu0
  %1375 = vmatprep.mubr.bf16.mxu0 0
  %1376 = vmatmul.mubr.bf16.gmra.mrb[0].mxu0 %v778
  %v1377 = vpop.f32.mrb[0].mxu0
  %v1378 = vadd.f32 %v192, %v1377
  %v1379 = vpop.f32.mrb[0].mxu0
  %v1380 = vpop.f32.mrb[0].mxu0
  %v1381 = vadd.f32 %v192, %v1380
  %v1382 = vpop.f32.mrb[0].mxu0
  %1383 = vmatprep.mubr.bf16.mxu0 0
  %1384 = vmatmul.mubr.bf16.gmra.mrb[0].mxu0 %v781
  %v1385 = vpop.f32.mrb[0].mxu0
  %v1386 = vadd.f32 %v192, %v1385
  %v1387 = vpop.f32.mrb[0].mxu0
  %v1388 = vpop.f32.mrb[0].mxu0
  %v1389 = vadd.f32 %v192, %v1388
  %v1390 = vpop.f32.mrb[0].mxu0
  %1391 = vdwg.mxu0
  %v1392 = vmax.f32 %v818, 0.0
  %v1393 = vmax.f32 %v821, 0.0
  %v1394 = vmax.f32 %v826, 0.0
  %v1395 = vmax.f32 %v829, 0.0
  %v1396 = vmax.f32 %v834, 0.0
  %v1397 = vmax.f32 %v837, 0.0
  %v1398 = vmax.f32 %v842, 0.0
  %v1399 = vmax.f32 %v845, 0.0
  %v1400 = vmax.f32 %v850, 0.0
  %v1401 = vmax.f32 %v853, 0.0
  %v1402 = vmax.f32 %v858, 0.0
  %v1403 = vmax.f32 %v861, 0.0
  %v1404 = vmax.f32 %v866, 0.0
  %v1405 = vmax.f32 %v869, 0.0
  %v1406 = vmax.f32 %v874, 0.0
  %v1407 = vmax.f32 %v877, 0.0
  %v1408 = vmax.f32 %v882, 0.0
  %v1409 = vmax.f32 %v885, 0.0
  %v1410 = vmax.f32 %v890, 0.0
  %v1411 = vmax.f32 %v893, 0.0
  %v1412 = vmax.f32 %v898, 0.0
  %v1413 = vmax.f32 %v901, 0.0
  %v1414 = vmax.f32 %v906, 0.0
  %v1415 = vmax.f32 %v909, 0.0
  %v1416 = vmax.f32 %v914, 0.0
  %v1417 = vmax.f32 %v917, 0.0
  %v1418 = vmax.f32 %v922, 0.0
  %v1419 = vmax.f32 %v925, 0.0
  %v1420 = vmax.f32 %v930, 0.0
  %v1421 = vmax.f32 %v933, 0.0
  %v1422 = vmax.f32 %v938, 0.0
  %v1423 = vmax.f32 %v941, 0.0
  %v1424 = vmax.f32 %v946, 0.0
  %v1425 = vmax.f32 %v949, 0.0
  %v1426 = vmax.f32 %v954, 0.0
  %v1427 = vmax.f32 %v957, 0.0
  %v1428 = vmax.f32 %v962, 0.0
  %v1429 = vmax.f32 %v965, 0.0
  %v1430 = vmax.f32 %v970, 0.0
  %v1431 = vmax.f32 %v973, 0.0
  %v1432 = vmax.f32 %v978, 0.0
  %v1433 = vmax.f32 %v981, 0.0
  %v1434 = vmax.f32 %v986, 0.0
  %v1435 = vmax.f32 %v989, 0.0
  %v1436 = vmax.f32 %v994, 0.0
  %v1437 = vmax.f32 %v997, 0.0
  %v1438 = vmax.f32 %v1002, 0.0
  %v1439 = vmax.f32 %v1005, 0.0
  %v1440 = vmax.f32 %v1010, 0.0
  %v1441 = vmax.f32 %v1013, 0.0
  %v1442 = vmax.f32 %v1018, 0.0
  %v1443 = vmax.f32 %v1021, 0.0
  %v1444 = vmax.f32 %v1026, 0.0
  %v1445 = vmax.f32 %v1029, 0.0
  %v1446 = vmax.f32 %v1034, 0.0
  %v1447 = vmax.f32 %v1037, 0.0
  %v1448 = vmax.f32 %v1042, 0.0
  %v1449 = vmax.f32 %v1045, 0.0
  %v1450 = vmax.f32 %v1050, 0.0
  %v1451 = vmax.f32 %v1053, 0.0
  %v1452 = vmax.f32 %v1058, 0.0
  %v1453 = vmax.f32 %v1061, 0.0
  %v1454 = vmax.f32 %v1066, 0.0
  %v1455 = vmax.f32 %v1069, 0.0
  %v1456 = vmax.f32 %v1074, 0.0
  %v1457 = vmax.f32 %v1077, 0.0
  %v1458 = vmax.f32 %v1082, 0.0
  %v1459 = vmax.f32 %v1085, 0.0
  %v1460 = vmax.f32 %v1090, 0.0
  %v1461 = vmax.f32 %v1093, 0.0
  %v1462 = vmax.f32 %v1098, 0.0
  %v1463 = vmax.f32 %v1101, 0.0
  %v1464 = vmax.f32 %v1106, 0.0
  %v1465 = vmax.f32 %v1109, 0.0
  %v1466 = vmax.f32 %v1114, 0.0
  %v1467 = vmax.f32 %v1117, 0.0
  %v1468 = vmax.f32 %v1122, 0.0
  %v1469 = vmax.f32 %v1125, 0.0
  %v1470 = vmax.f32 %v1130, 0.0
  %v1471 = vmax.f32 %v1133, 0.0
  %v1472 = vmax.f32 %v1138, 0.0
  %v1473 = vmax.f32 %v1141, 0.0
  %v1474 = vmax.f32 %v1146, 0.0
  %v1475 = vmax.f32 %v1149, 0.0
  %v1476 = vmax.f32 %v1154, 0.0
  %v1477 = vmax.f32 %v1157, 0.0
  %v1478 = vmax.f32 %v1162, 0.0
  %v1479 = vmax.f32 %v1165, 0.0
  %v1480 = vmax.f32 %v1170, 0.0
  %v1481 = vmax.f32 %v1173, 0.0
  %v1482 = vmax.f32 %v1178, 0.0
  %v1483 = vmax.f32 %v1181, 0.0
  %v1484 = vmax.f32 %v1186, 0.0
  %v1485 = vmax.f32 %v1189, 0.0
  %v1486 = vmax.f32 %v1194, 0.0
  %v1487 = vmax.f32 %v1197, 0.0
  %v1488 = vmax.f32 %v1202, 0.0
  %v1489 = vmax.f32 %v1205, 0.0
  %v1490 = vmax.f32 %v1210, 0.0
  %v1491 = vmax.f32 %v1213, 0.0
  %v1492 = vmax.f32 %v1218, 0.0
  %v1493 = vmax.f32 %v1221, 0.0
  %v1494 = vmax.f32 %v1226, 0.0
  %v1495 = vmax.f32 %v1229, 0.0
  %v1496 = vmax.f32 %v1234, 0.0
  %v1497 = vmax.f32 %v1237, 0.0
  %v1498 = vmax.f32 %v1242, 0.0
  %v1499 = vmax.f32 %v1245, 0.0
  %v1500 = vmax.f32 %v1250, 0.0
  %v1501 = vmax.f32 %v1253, 0.0
  %v1502 = vmax.f32 %v1258, 0.0
  %v1503 = vmax.f32 %v1261, 0.0
  %v1504 = vmax.f32 %v1266, 0.0
  %v1505 = vmax.f32 %v1269, 0.0
  %v1506 = vmax.f32 %v1274, 0.0
  %v1507 = vmax.f32 %v1277, 0.0
  %v1508 = vmax.f32 %v1282, 0.0
  %v1509 = vmax.f32 %v1285, 0.0
  %v1510 = vmax.f32 %v1290, 0.0
  %v1511 = vmax.f32 %v1293, 0.0
  %v1512 = vmax.f32 %v1298, 0.0
  %v1513 = vmax.f32 %v1301, 0.0
  %v1514 = vmax.f32 %v1306, 0.0
  %v1515 = vmax.f32 %v1309, 0.0
  %v1516 = vmax.f32 %v1314, 0.0
  %v1517 = vmax.f32 %v1317, 0.0
  %v1518 = vmax.f32 %v1322, 0.0
  %v1519 = vmax.f32 %v1325, 0.0
  %v1520 = vmax.f32 %v1330, 0.0
  %v1521 = vmax.f32 %v1333, 0.0
  %v1522 = vmax.f32 %v1338, 0.0
  %v1523 = vmax.f32 %v1341, 0.0
  %v1524 = vmax.f32 %v1346, 0.0
  %v1525 = vmax.f32 %v1349, 0.0
  %v1526 = vmax.f32 %v1354, 0.0
  %v1527 = vmax.f32 %v1357, 0.0
  %v1528 = vmax.f32 %v1362, 0.0
  %v1529 = vmax.f32 %v1365, 0.0
  %v1530 = vmax.f32 %v1370, 0.0
  %v1531 = vmax.f32 %v1373, 0.0
  %v1532 = vmax.f32 %v1378, 0.0
  %v1533 = vmax.f32 %v1381, 0.0
  %v1534 = vmax.f32 %v1386, 0.0
  %v1535 = vmax.f32 %v1389, 0.0
  %v1536 = vmax.f32 %v1392, %v1428
  %v1537 = vmax.f32 %v1393, %v1429
  %v1538 = vmax.f32 %v1394, %v1430
  %v1539 = vmax.f32 %v1395, %v1431
  %v1540 = vmax.f32 %v1396, %v1432
  %v1541 = vmax.f32 %v1397, %v1433
  %v1542 = vmax.f32 %v1398, %v1434
  %v1543 = vmax.f32 %v1399, %v1435
  %v1544 = vmax.f32 %v1400, %v1436
  %v1545 = vmax.f32 %v1401, %v1437
  %v1546 = vmax.f32 %v1402, %v1438
  %v1547 = vmax.f32 %v1403, %v1439
  %v1548 = vmax.f32 %v1404, %v1440
  %v1549 = vmax.f32 %v1405, %v1441
  %v1550 = vmax.f32 %v1406, %v1442
  %v1551 = vmax.f32 %v1407, %v1443
  %v1552 = vmax.f32 %v1408, %v1444
  %v1553 = vmax.f32 %v1409, %v1445
  %v1554 = vmax.f32 %v1410, %v1446
  %v1555 = vmax.f32 %v1411, %v1447
  %v1556 = vmax.f32 %v1412, %v1448
  %v1557 = vmax.f32 %v1413, %v1449
  %v1558 = vmax.f32 %v1414, %v1450
  %v1559 = vmax.f32 %v1415, %v1451
  %v1560 = vmax.f32 %v1416, %v1452
  %v1561 = vmax.f32 %v1417, %v1453
  %v1562 = vmax.f32 %v1418, %v1454
  %v1563 = vmax.f32 %v1419, %v1455
  %v1564 = vmax.f32 %v1420, %v1456
  %v1565 = vmax.f32 %v1421, %v1457
  %v1566 = vmax.f32 %v1422, %v1458
  %v1567 = vmax.f32 %v1423, %v1459
  %v1568 = vmax.f32 %v1424, %v1460
  %v1569 = vmax.f32 %v1425, %v1461
  %v1570 = vmax.f32 %v1426, %v1462
  %v1571 = vmax.f32 %v1427, %v1463
  %v1572 = vmax.f32 %v1464, %v1500
  %v1573 = vmax.f32 %v1465, %v1501
  %v1574 = vmax.f32 %v1466, %v1502
  %v1575 = vmax.f32 %v1467, %v1503
  %v1576 = vmax.f32 %v1468, %v1504
  %v1577 = vmax.f32 %v1469, %v1505
  %v1578 = vmax.f32 %v1470, %v1506
  %v1579 = vmax.f32 %v1471, %v1507
  %v1580 = vmax.f32 %v1472, %v1508
  %v1581 = vmax.f32 %v1473, %v1509
  %v1582 = vmax.f32 %v1474, %v1510
  %v1583 = vmax.f32 %v1475, %v1511
  %v1584 = vmax.f32 %v1476, %v1512
  %v1585 = vmax.f32 %v1477, %v1513
  %v1586 = vmax.f32 %v1478, %v1514
  %v1587 = vmax.f32 %v1479, %v1515
  %v1588 = vmax.f32 %v1480, %v1516
  %v1589 = vmax.f32 %v1481, %v1517
  %v1590 = vmax.f32 %v1482, %v1518
  %v1591 = vmax.f32 %v1483, %v1519
  %v1592 = vmax.f32 %v1484, %v1520
  %v1593 = vmax.f32 %v1485, %v1521
  %v1594 = vmax.f32 %v1486, %v1522
  %v1595 = vmax.f32 %v1487, %v1523
  %v1596 = vmax.f32 %v1488, %v1524
  %v1597 = vmax.f32 %v1489, %v1525
  %v1598 = vmax.f32 %v1490, %v1526
  %v1599 = vmax.f32 %v1491, %v1527
  %v1600 = vmax.f32 %v1492, %v1528
  %v1601 = vmax.f32 %v1493, %v1529
  %v1602 = vmax.f32 %v1494, %v1530
  %v1603 = vmax.f32 %v1495, %v1531
  %v1604 = vmax.f32 %v1496, %v1532
  %v1605 = vmax.f32 %v1497, %v1533
  %v1606 = vmax.f32 %v1498, %v1534
  %v1607 = vmax.f32 %v1499, %v1535
  %v1608 = vmax.f32 %v1536, %v1572
  %v1609 = vmax.f32 %v1537, %v1573
  %v1610 = vmax.f32 %v1538, %v1574
  %v1611 = vmax.f32 %v1539, %v1575
  %v1612 = vmax.f32 %v1540, %v1576
  %v1613 = vmax.f32 %v1541, %v1577
  %v1614 = vmax.f32 %v1542, %v1578
  %v1615 = vmax.f32 %v1543, %v1579
  %v1616 = vmax.f32 %v1544, %v1580
  %v1617 = vmax.f32 %v1545, %v1581
  %v1618 = vmax.f32 %v1546, %v1582
  %v1619 = vmax.f32 %v1547, %v1583
  %v1620 = vmax.f32 %v1548, %v1584
  %v1621 = vmax.f32 %v1549, %v1585
  %v1622 = vmax.f32 %v1550, %v1586
  %v1623 = vmax.f32 %v1551, %v1587
  %v1624 = vmax.f32 %v1552, %v1588
  %v1625 = vmax.f32 %v1553, %v1589
  %v1626 = vmax.f32 %v1554, %v1590
  %v1627 = vmax.f32 %v1555, %v1591
  %v1628 = vmax.f32 %v1556, %v1592
  %v1629 = vmax.f32 %v1557, %v1593
  %v1630 = vmax.f32 %v1558, %v1594
  %v1631 = vmax.f32 %v1559, %v1595
  %v1632 = vmax.f32 %v1560, %v1596
  %v1633 = vmax.f32 %v1561, %v1597
  %v1634 = vmax.f32 %v1562, %v1598
  %v1635 = vmax.f32 %v1563, %v1599
  %v1636 = vmax.f32 %v1564, %v1600
  %v1637 = vmax.f32 %v1565, %v1601
  %v1638 = vmax.f32 %v1566, %v1602
  %v1639 = vmax.f32 %v1567, %v1603
  %v1640 = vmax.f32 %v1568, %v1604
  %v1641 = vmax.f32 %v1569, %v1605
  %v1642 = vmax.f32 %v1570, %v1606
  %v1643 = vmax.f32 %v1571, %v1607
  %v1644 = vpack.c.bf16 %v1609, %v1608
  %v1645 = vpack.c.bf16 %v1611, %v1610
  %v1646 = vpack.c.bf16 %v1613, %v1612
  %v1647 = vpack.c.bf16 %v1615, %v1614
  %v1648 = vpack.c.bf16 %v1617, %v1616
  %v1649 = vpack.c.bf16 %v1619, %v1618
  %v1650 = vpack.c.bf16 %v1621, %v1620
  %v1651 = vpack.c.bf16 %v1623, %v1622
  %v1652 = vpack.c.bf16 %v1625, %v1624
  %v1653 = vpack.c.bf16 %v1627, %v1626
  %v1654 = vpack.c.bf16 %v1629, %v1628
  %v1655 = vpack.c.bf16 %v1631, %v1630
  %v1656 = vpack.c.bf16 %v1633, %v1632
  %v1657 = vpack.c.bf16 %v1635, %v1634
  %v1658 = vpack.c.bf16 %v1637, %v1636
  %v1659 = vpack.c.bf16 %v1639, %v1638
  %v1660 = vpack.c.bf16 %v1641, %v1640
  %v1661 = vpack.c.bf16 %v1643, %v1642
  %v1662 = vld [vmem:[%s4] sm:$0x1]
  %v1663 = vld [vmem:[%s3] sm:$0xf]
  %v1664 = vld [vmem:[%s3 + $0x4] sm:$0xf]
  %v1665 = vld [vmem:[%s3 + $0x8] sm:$0xf]
  %v1666 = vld [vmem:[%s3 + $0xc] sm:$0xf]
  %v1671 = vunpack.c.l.b16 %v1663
  %v1672 = vunpack.c.l.b16 %v1664
  %v1673 = vunpack.c.l.b16 %v1665
  %v1674 = vunpack.c.l.b16 %v1666
  %v1675 = vpack.c.b16 %v1672, %v1671
  %v1676 = vpack.c.b16 %v1674, %v1673
  %v1680 = vsel %vm566, %v1644, 0
  %v1683 = vsel %vm566, %v1645, 0
  %v1686 = vsel %vm566, %v1646, 0
  %v1689 = vsel %vm566, %v1647, 0
  %v1692 = vsel %vm566, %v1648, 0
  %v1695 = vsel %vm566, %v1649, 0
  %v1698 = vsel %vm566, %v1650, 0
  %v1701 = vsel %vm566, %v1651, 0
  %v1704 = vsel %vm566, %v1652, 0
  %v1707 = vsel %vm566, %v1653, 0
  %v1710 = vsel %vm566, %v1654, 0
  %v1713 = vsel %vm566, %v1655, 0
  %v1716 = vsel %vm566, %v1656, 0
  %v1719 = vsel %vm566, %v1657, 0
  %v1722 = vsel %vm566, %v1658, 0
  %v1725 = vsel %vm566, %v1659, 0
  %v1728 = vsel %vm566, %v1660, 0
  %v1731 = vsel %vm566, %v1661, 0
  %1733 = vmatprep.subr.bf16.mxu0 0
  %1734 = vmatpush1.bf16.msra.mxu0 %v1675
  %1735 = vmatprep.subr.bf16.mxu0 0
  %1736 = vmatpush1.bf16.msra.mxu0 %v1676
  %1737 = vmatprep.subr.bf16.mxu0 0
  %1738 = vmatpush1.bf16.msra.mxu0 0
  %1739 = vmatprep.subr.bf16.mxu0 0
  %1740 = vmatpush1.bf16.msra.mxu0 0
  %1741 = vmatprep.subr.bf16.mxu0 0
  %1742 = vmatpush1.bf16.msra.mxu0 0
  %1743 = vmatprep.subr.bf16.mxu0 0
  %1744 = vmatpush1.bf16.msra.mxu0 0
  %1745 = vmatprep.subr.bf16.mxu0 0
  %1746 = vmatpush1.bf16.msra.mxu0 0
  %1747 = vmatprep.subr.bf16.mxu0 0
  %1748 = vmatpush1.bf16.msra.mxu0 0
  %1749 = vmatprep.subr.bf16.mxu0 0
  %1750 = vmatpush1.bf16.msra.mxu0 0
  %1751 = vmatprep.subr.bf16.mxu0 0
  %1752 = vmatpush1.bf16.msra.mxu0 0
  %1753 = vmatprep.subr.bf16.mxu0 0
  %1754 = vmatpush1.bf16.msra.mxu0 0
  %1755 = vmatprep.subr.bf16.mxu0 0
  %1756 = vmatpush1.bf16.msra.mxu0 0
  %1757 = vmatprep.subr.bf16.mxu0 0
  %1758 = vmatpush1.bf16.msra.mxu0 0
  %1759 = vmatprep.subr.bf16.mxu0 0
  %1760 = vmatpush1.bf16.msra.mxu0 0
  %1761 = vmatprep.subr.bf16.mxu0 0
  %1762 = vmatpush1.bf16.msra.mxu0 0
  %1763 = vmatprep.subr.bf16.mxu0 0
  %1764 = vmatpush1.bf16.msra.mxu0 0
  %1765 = vmatprep.mubr.bf16.mxu0 0
  %1766 = vmatmul.mubr.bf16.gmra.mrb[0].mxu0 %v1680
  %v1767 = vpop.f32.mrb[0].mxu0
  %v1768 = vadd.f32 0.0, %v1767
  %v1769 = vpop.f32.mrb[0].mxu0
  %v1770 = vpop.f32.mrb[0].mxu0
  %v1771 = vadd.f32 0.0, %v1770
  %v1772 = vpop.f32.mrb[0].mxu0
  %1773 = vmatprep.mubr.bf16.mxu0 0
  %1774 = vmatmul.mubr.bf16.gmra.mrb[0].mxu0 %v1683
  %v1775 = vpop.f32.mrb[0].mxu0
  %v1776 = vadd.f32 0.0, %v1775
  %v1777 = vpop.f32.mrb[0].mxu0
  %v1778 = vpop.f32.mrb[0].mxu0
  %v1779 = vadd.f32 0.0, %v1778
  %v1780 = vpop.f32.mrb[0].mxu0
  %1781 = vmatprep.mubr.bf16.mxu0 0
  %1782 = vmatmul.mubr.bf16.gmra.mrb[0].mxu0 %v1686
  %v1783 = vpop.f32.mrb[0].mxu0
  %v1784 = vadd.f32 0.0, %v1783
  %v1785 = vpop.f32.mrb[0].mxu0
  %v1786 = vpop.f32.mrb[0].mxu0
  %v1787 = vadd.f32 0.0, %v1786
  %v1788 = vpop.f32.mrb[0].mxu0
  %1789 = vmatprep.mubr.bf16.mxu0 0
  %1790 = vmatmul.mubr.bf16.gmra.mrb[0].mxu0 %v1689
  %v1791 = vpop.f32.mrb[0].mxu0
  %v1792 = vadd.f32 0.0, %v1791
  %v1793 = vpop.f32.mrb[0].mxu0
  %v1794 = vpop.f32.mrb[0].mxu0
  %v1795 = vadd.f32 0.0, %v1794
  %v1796 = vpop.f32.mrb[0].mxu0
  %1797 = vmatprep.mubr.bf16.mxu0 0
  %1798 = vmatmul.mubr.bf16.gmra.mrb[0].mxu0 %v1692
  %v1799 = vpop.f32.mrb[0].mxu0
  %v1800 = vadd.f32 0.0, %v1799
  %v1801 = vpop.f32.mrb[0].mxu0
  %v1802 = vpop.f32.mrb[0].mxu0
  %v1803 = vadd.f32 0.0, %v1802
  %v1804 = vpop.f32.mrb[0].mxu0
  %1805 = vmatprep.mubr.bf16.mxu0 0
  %1806 = vmatmul.mubr.bf16.gmra.mrb[0].mxu0 %v1695
  %v1807 = vpop.f32.mrb[0].mxu0
  %v1808 = vadd.f32 0.0, %v1807
  %v1809 = vpop.f32.mrb[0].mxu0
  %v1810 = vpop.f32.mrb[0].mxu0
  %v1811 = vadd.f32 0.0, %v1810
  %v1812 = vpop.f32.mrb[0].mxu0
  %1813 = vmatprep.mubr.bf16.mxu0 0
  %1814 = vmatmul.mubr.bf16.gmra.mrb[0].mxu0 %v1698
  %v1815 = vpop.f32.mrb[0].mxu0
  %v1816 = vadd.f32 0.0, %v1815
  %v1817 = vpop.f32.mrb[0].mxu0
  %v1818 = vpop.f32.mrb[0].mxu0
  %v1819 = vadd.f32 0.0, %v1818
  %v1820 = vpop.f32.mrb[0].mxu0
  %1821 = vmatprep.mubr.bf16.mxu0 0
  %1822 = vmatmul.mubr.bf16.gmra.mrb[0].mxu0 %v1701
  %v1823 = vpop.f32.mrb[0].mxu0
  %v1824 = vadd.f32 0.0, %v1823
  %v1825 = vpop.f32.mrb[0].mxu0
  %v1826 = vpop.f32.mrb[0].mxu0
  %v1827 = vadd.f32 0.0, %v1826
  %v1828 = vpop.f32.mrb[0].mxu0
  %1829 = vmatprep.mubr.bf16.mxu0 0
  %1830 = vmatmul.mubr.bf16.gmra.mrb[0].mxu0 %v1704
  %v1831 = vpop.f32.mrb[0].mxu0
  %v1832 = vpop.f32.mrb[0].mxu0
  %v1833 = vpop.f32.mrb[0].mxu0
  %v1834 = vpop.f32.mrb[0].mxu0
  %1835 = vmatprep.mubr.bf16.mxu0 0
  %1836 = vmatmul.mubr.bf16.gmra.mrb[0].mxu0 %v1707
  %v1837 = vpop.f32.mrb[0].mxu0
  %v1838 = vpop.f32.mrb[0].mxu0
  %v1839 = vpop.f32.mrb[0].mxu0
  %v1840 = vpop.f32.mrb[0].mxu0
  %1841 = vmatprep.mubr.bf16.mxu0 0
  %1842 = vmatmul.mubr.bf16.gmra.mrb[0].mxu0 %v1710
  %v1843 = vpop.f32.mrb[0].mxu0
  %v1844 = vpop.f32.mrb[0].mxu0
  %v1845 = vpop.f32.mrb[0].mxu0
  %v1846 = vpop.f32.mrb[0].mxu0
  %1847 = vmatprep.mubr.bf16.mxu0 0
  %1848 = vmatmul.mubr.bf16.gmra.mrb[0].mxu0 %v1713
  %v1849 = vpop.f32.mrb[0].mxu0
  %v1850 = vpop.f32.mrb[0].mxu0
  %v1851 = vpop.f32.mrb[0].mxu0
  %v1852 = vpop.f32.mrb[0].mxu0
  %1853 = vmatprep.mubr.bf16.mxu0 0
  %1854 = vmatmul.mubr.bf16.gmra.mrb[0].mxu0 %v1716
  %v1855 = vpop.f32.mrb[0].mxu0
  %v1856 = vpop.f32.mrb[0].mxu0
  %v1857 = vpop.f32.mrb[0].mxu0
  %v1858 = vpop.f32.mrb[0].mxu0
  %1859 = vmatprep.mubr.bf16.mxu0 0
  %1860 = vmatmul.mubr.bf16.gmra.mrb[0].mxu0 %v1719
  %v1861 = vpop.f32.mrb[0].mxu0
  %v1862 = vpop.f32.mrb[0].mxu0
  %v1863 = vpop.f32.mrb[0].mxu0
  %v1864 = vpop.f32.mrb[0].mxu0
  %1865 = vmatprep.mubr.bf16.mxu0 0
  %1866 = vmatmul.mubr.bf16.gmra.mrb[0].mxu0 %v1722
  %v1867 = vpop.f32.mrb[0].mxu0
  %v1868 = vpop.f32.mrb[0].mxu0
  %v1869 = vpop.f32.mrb[0].mxu0
  %v1870 = vpop.f32.mrb[0].mxu0
  %1871 = vmatprep.mubr.bf16.mxu0 0
  %1872 = vmatmul.mubr.bf16.gmra.mrb[0].mxu0 %v1725
  %v1873 = vpop.f32.mrb[0].mxu0
  %v1874 = vpop.f32.mrb[0].mxu0
  %v1875 = vpop.f32.mrb[0].mxu0
  %v1876 = vpop.f32.mrb[0].mxu0
  %1877 = vmatprep.mubr.bf16.mxu0 0
  %1878 = vmatmul.mubr.bf16.gmra.mrb[0].mxu0 %v1728
  %v1879 = vpop.f32.mrb[0].mxu0
  %v1880 = vpop.f32.mrb[0].mxu0
  %v1881 = vpop.f32.mrb[0].mxu0
  %v1882 = vpop.f32.mrb[0].mxu0
  %1883 = vmatprep.mubr.bf16.mxu0 0
  %1884 = vmatmul.mubr.bf16.gmra.mrb[0].mxu0 %v1731
  %v1885 = vpop.f32.mrb[0].mxu0
  %v1886 = vpop.f32.mrb[0].mxu0
  %v1887 = vpop.f32.mrb[0].mxu0
  %v1888 = vpop.f32.mrb[0].mxu0
  %1889 = vdwg.mxu0
  %v1890 = vadd.f32 %v1768, 0.0
  %v1891 = vadd.f32 %v1771, 0.0
  %v1892 = vadd.f32 %v1792, 0.0
  %v1893 = vadd.f32 %v1795, 0.0
  %1895 = vrot.lane.b32.xlu0 %v1771, 112
  %v1896 = vpop.permute.xlu0 %1895
  %v1898 = vadd.f32 %v1890, %v1896
  %1900 = vrot.lane.b32.xlu0 %v1776, 112
  %v1901 = vpop.permute.xlu0 %1900
  %v1903 = vadd.f32 %v1891, %v1901
  %1905 = vrot.lane.b32.xlu0 %v1795, 112
  %v1906 = vpop.permute.xlu0 %1905
  %v1908 = vadd.f32 %v1892, %v1906
  %1910 = vrot.lane.b32.xlu0 %v1800, 112
  %v1911 = vpop.permute.xlu0 %1910
  %v1913 = vadd.f32 %v1893, %v1911
  %1914 = vrot.lane.b32.xlu0 %v1776, 96
  %v1915 = vpop.permute.xlu0 %1914
  %v1917 = vadd.f32 %v1898, %v1915
  %1919 = vrot.lane.b32.xlu0 %v1779, 96
  %v1920 = vpop.permute.xlu0 %1919
  %v1922 = vadd.f32 %v1903, %v1920
  %1923 = vrot.lane.b32.xlu0 %v1800, 96
  %v1924 = vpop.permute.xlu0 %1923
  %v1926 = vadd.f32 %v1908, %v1924
  %1928 = vrot.lane.b32.xlu0 %v1803, 96
  %v1929 = vpop.permute.xlu0 %1928
  %v1931 = vadd.f32 %v1913, %v1929
  %1932 = vrot.lane.b32.xlu0 %v1779, 80
  %v1933 = vpop.permute.xlu0 %1932
  %v1935 = vadd.f32 %v1917, %v1933
  %1937 = vrot.lane.b32.xlu0 %v1784, 80
  %v1938 = vpop.permute.xlu0 %1937
  %v1940 = vadd.f32 %v1922, %v1938
  %1941 = vrot.lane.b32.xlu0 %v1803, 80
  %v1942 = vpop.permute.xlu0 %1941
  %v1944 = vadd.f32 %v1926, %v1942
  %1946 = vrot.lane.b32.xlu0 %v1808, 80
  %v1947 = vpop.permute.xlu0 %1946
  %v1949 = vadd.f32 %v1931, %v1947
  %1950 = vrot.lane.b32.xlu0 %v1784, 64
  %v1951 = vpop.permute.xlu0 %1950
  %v1953 = vadd.f32 %v1935, %v1951
  %1955 = vrot.lane.b32.xlu0 %v1787, 64
  %v1956 = vpop.permute.xlu0 %1955
  %v1958 = vadd.f32 %v1940, %v1956
  %1959 = vrot.lane.b32.xlu0 %v1808, 64
  %v1960 = vpop.permute.xlu0 %1959
  %v1962 = vadd.f32 %v1944, %v1960
  %1964 = vrot.lane.b32.xlu0 %v1811, 64
  %v1965 = vpop.permute.xlu0 %1964
  %v1967 = vadd.f32 %v1949, %v1965
  %1969 = vrot.lane.b32.xlu0 %v1792, 48
  %v1970 = vpop.permute.xlu0 %1969
  %v1972 = vadd.f32 %v1953, %v1970
  %1973 = vrot.lane.b32.xlu0 %v1795, 48
  %v1974 = vpop.permute.xlu0 %1973
  %v1976 = vadd.f32 %v1958, %v1974
  %1978 = vrot.lane.b32.xlu0 %v1816, 48
  %v1979 = vpop.permute.xlu0 %1978
  %v1981 = vadd.f32 %v1962, %v1979
  %1983 = vrot.lane.b32.xlu0 %v1819, 48
  %v1984 = vpop.permute.xlu0 %1983
  %v1986 = vadd.f32 %v1967, %v1984
  %1987 = vrot.lane.b32.xlu0 %v1795, 32
  %v1988 = vpop.permute.xlu0 %1987
  %v1990 = vadd.f32 %v1972, %v1988
  %1991 = vrot.lane.b32.xlu0 %v1800, 32
  %v1992 = vpop.permute.xlu0 %1991
  %v1994 = vadd.f32 %v1976, %v1992
  %1995 = vrot.lane.b32.xlu0 %v1819, 32
  %v1996 = vpop.permute.xlu0 %1995
  %v1998 = vadd.f32 %v1981, %v1996
  %2000 = vrot.lane.b32.xlu0 %v1824, 32
  %v2001 = vpop.permute.xlu0 %2000
  %v2003 = vadd.f32 %v1986, %v2001
  %2004 = vrot.lane.b32.xlu0 %v1800, 16
  %v2005 = vpop.permute.xlu0 %2004
  %v2007 = vadd.f32 %v1990, %v2005
  %2008 = vrot.lane.b32.xlu0 %v1803, 16
  %v2009 = vpop.permute.xlu0 %2008
  %v2011 = vadd.f32 %v1994, %v2009
  %2012 = vrot.lane.b32.xlu0 %v1824, 16
  %v2013 = vpop.permute.xlu0 %2012
  %v2015 = vadd.f32 %v1998, %v2013
  %2017 = vrot.lane.b32.xlu0 %v1827, 16
  %v2018 = vpop.permute.xlu0 %2017
  %v2020 = vadd.f32 %v2003, %v2018
  %s2021 = scalar_lea.vmem %s3, 16
  %v2022 = vld [vmem:[%s2021] sm:$0xf]
  %v2023 = vld [vmem:[%s2021 + $0x4] sm:$0xf]
  %v2024 = vld [vmem:[%s2021 + $0x8] sm:$0xf]
  %v2025 = vld [vmem:[%s2021 + $0xc] sm:$0xf]
  %v2030 = vunpack.c.l.b16 %v2022
  %v2031 = vunpack.c.l.b16 %v2023
  %v2032 = vunpack.c.l.b16 %v2024
  %v2033 = vunpack.c.l.b16 %v2025
  %v2034 = vpack.c.b16 %v2031, %v2030
  %v2035 = vpack.c.b16 %v2033, %v2032
  %2038 = vmatprep.subr.bf16.mxu0 0
  %2039 = vmatpush1.bf16.msra.mxu0 %v2034
  %2040 = vmatprep.subr.bf16.mxu0 0
  %2041 = vmatpush1.bf16.msra.mxu0 %v2035
  %2042 = vmatprep.subr.bf16.mxu0 0
  %2043 = vmatpush1.bf16.msra.mxu0 0
  %2044 = vmatprep.subr.bf16.mxu0 0
  %2045 = vmatpush1.bf16.msra.mxu0 0
  %2046 = vmatprep.subr.bf16.mxu0 0
  %2047 = vmatpush1.bf16.msra.mxu0 0
  %2048 = vmatprep.subr.bf16.mxu0 0
  %2049 = vmatpush1.bf16.msra.mxu0 0
  %2050 = vmatprep.subr.bf16.mxu0 0
  %2051 = vmatpush1.bf16.msra.mxu0 0
  %2052 = vmatprep.subr.bf16.mxu0 0
  %2053 = vmatpush1.bf16.msra.mxu0 0
  %2054 = vmatprep.subr.bf16.mxu0 0
  %2055 = vmatpush1.bf16.msra.mxu0 0
  %2056 = vmatprep.subr.bf16.mxu0 0
  %2057 = vmatpush1.bf16.msra.mxu0 0
  %2058 = vmatprep.subr.bf16.mxu0 0
  %2059 = vmatpush1.bf16.msra.mxu0 0
  %2060 = vmatprep.subr.bf16.mxu0 0
  %2061 = vmatpush1.bf16.msra.mxu0 0
  %2062 = vmatprep.subr.bf16.mxu0 0
  %2063 = vmatpush1.bf16.msra.mxu0 0
  %2064 = vmatprep.subr.bf16.mxu0 0
  %2065 = vmatpush1.bf16.msra.mxu0 0
  %2066 = vmatprep.subr.bf16.mxu0 0
  %2067 = vmatpush1.bf16.msra.mxu0 0
  %2068 = vmatprep.subr.bf16.mxu0 0
  %2069 = vmatpush1.bf16.msra.mxu0 0
  %2070 = vmatprep.mubr.bf16.mxu0 0
  %2071 = vmatmul.mubr.bf16.gmra.mrb[0].mxu0 %v1680
  %v2072 = vpop.f32.mrb[0].mxu0
  %v2073 = vpop.f32.mrb[0].mxu0
  %v2074 = vpop.f32.mrb[0].mxu0
  %v2075 = vpop.f32.mrb[0].mxu0
  %2076 = vmatprep.mubr.bf16.mxu0 0
  %2077 = vmatmul.mubr.bf16.gmra.mrb[0].mxu0 %v1683
  %v2078 = vpop.f32.mrb[0].mxu0
  %v2079 = vpop.f32.mrb[0].mxu0
  %v2080 = vpop.f32.mrb[0].mxu0
  %v2081 = vpop.f32.mrb[0].mxu0
  %2082 = vmatprep.mubr.bf16.mxu0 0
  %2083 = vmatmul.mubr.bf16.gmra.mrb[0].mxu0 %v1686
  %v2084 = vpop.f32.mrb[0].mxu0
  %v2085 = vpop.f32.mrb[0].mxu0
  %v2086 = vpop.f32.mrb[0].mxu0
  %v2087 = vpop.f32.mrb[0].mxu0
  %2088 = vmatprep.mubr.bf16.mxu0 0
  %2089 = vmatmul.mubr.bf16.gmra.mrb[0].mxu0 %v1689
  %v2090 = vpop.f32.mrb[0].mxu0
  %v2091 = vpop.f32.mrb[0].mxu0
  %v2092 = vpop.f32.mrb[0].mxu0
  %v2093 = vpop.f32.mrb[0].mxu0
  %2094 = vmatprep.mubr.bf16.mxu0 0
  %2095 = vmatmul.mubr.bf16.gmra.mrb[0].mxu0 %v1692
  %v2096 = vpop.f32.mrb[0].mxu0
  %v2097 = vpop.f32.mrb[0].mxu0
  %v2098 = vpop.f32.mrb[0].mxu0
  %v2099 = vadd.f32 0.0, %v2098
  %v2100 = vpop.f32.mrb[0].mxu0
  %2101 = vmatprep.mubr.bf16.mxu0 0
  %2102 = vmatmul.mubr.bf16.gmra.mrb[0].mxu0 %v1695
  %v2103 = vpop.f32.mrb[0].mxu0
  %v2104 = vadd.f32 0.0, %v2103
  %v2105 = vpop.f32.mrb[0].mxu0
  %v2106 = vpop.f32.mrb[0].mxu0
  %v2107 = vadd.f32 0.0, %v2106
  %v2108 = vpop.f32.mrb[0].mxu0
  %2109 = vmatprep.mubr.bf16.mxu0 0
  %2110 = vmatmul.mubr.bf16.gmra.mrb[0].mxu0 %v1698
  %v2111 = vpop.f32.mrb[0].mxu0
  %v2112 = vadd.f32 0.0, %v2111
  %v2113 = vpop.f32.mrb[0].mxu0
  %v2114 = vpop.f32.mrb[0].mxu0
  %v2115 = vadd.f32 0.0, %v2114
  %v2116 = vpop.f32.mrb[0].mxu0
  %2117 = vmatprep.mubr.bf16.mxu0 0
  %2118 = vmatmul.mubr.bf16.gmra.mrb[0].mxu0 %v1701
  %v2119 = vpop.f32.mrb[0].mxu0
  %v2120 = vadd.f32 0.0, %v2119
  %v2121 = vpop.f32.mrb[0].mxu0
  %v2122 = vpop.f32.mrb[0].mxu0
  %v2123 = vadd.f32 0.0, %v2122
  %v2124 = vpop.f32.mrb[0].mxu0
  %2125 = vmatprep.mubr.bf16.mxu0 0
  %2126 = vmatmul.mubr.bf16.gmra.mrb[0].mxu0 %v1704
  %v2127 = vpop.f32.mrb[0].mxu0
  %v2128 = vadd.f32 0.0, %v2127
  %v2129 = vpop.f32.mrb[0].mxu0
  %v2130 = vpop.f32.mrb[0].mxu0
  %v2131 = vadd.f32 0.0, %v2130
  %v2132 = vpop.f32.mrb[0].mxu0
  %2133 = vmatprep.mubr.bf16.mxu0 0
  %2134 = vmatmul.mubr.bf16.gmra.mrb[0].mxu0 %v1707
  %v2135 = vpop.f32.mrb[0].mxu0
  %v2136 = vadd.f32 0.0, %v2135
  %v2137 = vpop.f32.mrb[0].mxu0
  %v2138 = vpop.f32.mrb[0].mxu0
  %v2139 = vadd.f32 0.0, %v2138
  %v2140 = vpop.f32.mrb[0].mxu0
  %2141 = vmatprep.mubr.bf16.mxu0 0
  %2142 = vmatmul.mubr.bf16.gmra.mrb[0].mxu0 %v1710
  %v2143 = vpop.f32.mrb[0].mxu0
  %v2144 = vadd.f32 0.0, %v2143
  %v2145 = vpop.f32.mrb[0].mxu0
  %v2146 = vpop.f32.mrb[0].mxu0
  %v2147 = vadd.f32 0.0, %v2146
  %v2148 = vpop.f32.mrb[0].mxu0
  %2149 = vmatprep.mubr.bf16.mxu0 0
  %2150 = vmatmul.mubr.bf16.gmra.mrb[0].mxu0 %v1713
  %v2151 = vpop.f32.mrb[0].mxu0
  %v2152 = vadd.f32 0.0, %v2151
  %v2153 = vpop.f32.mrb[0].mxu0
  %v2154 = vpop.f32.mrb[0].mxu0
  %v2155 = vadd.f32 0.0, %v2154
  %v2156 = vpop.f32.mrb[0].mxu0
  %2157 = vmatprep.mubr.bf16.mxu0 0
  %2158 = vmatmul.mubr.bf16.gmra.mrb[0].mxu0 %v1716
  %v2159 = vpop.f32.mrb[0].mxu0
  %v2160 = vadd.f32 0.0, %v2159
  %v2161 = vpop.f32.mrb[0].mxu0
  %v2162 = vpop.f32.mrb[0].mxu0
  %v2163 = vadd.f32 0.0, %v2162
  %v2164 = vpop.f32.mrb[0].mxu0
  %2165 = vmatprep.mubr.bf16.mxu0 0
  %2166 = vmatmul.mubr.bf16.gmra.mrb[0].mxu0 %v1719
  %v2167 = vpop.f32.mrb[0].mxu0
  %v2168 = vpop.f32.mrb[0].mxu0
  %v2169 = vpop.f32.mrb[0].mxu0
  %v2170 = vpop.f32.mrb[0].mxu0
  %2171 = vmatprep.mubr.bf16.mxu0 0
  %2172 = vmatmul.mubr.bf16.gmra.mrb[0].mxu0 %v1722
  %v2173 = vpop.f32.mrb[0].mxu0
  %v2174 = vpop.f32.mrb[0].mxu0
  %v2175 = vpop.f32.mrb[0].mxu0
  %v2176 = vpop.f32.mrb[0].mxu0
  %2177 = vmatprep.mubr.bf16.mxu0 0
  %2178 = vmatmul.mubr.bf16.gmra.mrb[0].mxu0 %v1725
  %v2179 = vpop.f32.mrb[0].mxu0
  %v2180 = vpop.f32.mrb[0].mxu0
  %v2181 = vpop.f32.mrb[0].mxu0
  %v2182 = vpop.f32.mrb[0].mxu0
  %2183 = vmatprep.mubr.bf16.mxu0 0
  %2184 = vmatmul.mubr.bf16.gmra.mrb[0].mxu0 %v1728
  %v2185 = vpop.f32.mrb[0].mxu0
  %v2186 = vpop.f32.mrb[0].mxu0
  %v2187 = vpop.f32.mrb[0].mxu0
  %v2188 = vpop.f32.mrb[0].mxu0
  %2189 = vmatprep.mubr.bf16.mxu0 0
  %2190 = vmatmul.mubr.bf16.gmra.mrb[0].mxu0 %v1731
  %v2191 = vpop.f32.mrb[0].mxu0
  %v2192 = vpop.f32.mrb[0].mxu0
  %v2193 = vpop.f32.mrb[0].mxu0
  %v2194 = vpop.f32.mrb[0].mxu0
  %2195 = vdwg.mxu0
  %v2196 = vadd.f32 %v2007, %v2099
  %v2197 = vadd.f32 %v2011, %v2104
  %v2198 = vadd.f32 %v2015, %v2123
  %v2199 = vadd.f32 %v2020, %v2128
  %2201 = vrot.lane.b32.xlu0 %v2104, 112
  %v2202 = vpop.permute.xlu0 %2201
  %v2204 = vadd.f32 %v2196, %v2202
  %2206 = vrot.lane.b32.xlu0 %v2107, 112
  %v2207 = vpop.permute.xlu0 %2206
  %v2209 = vadd.f32 %v2197, %v2207
  %2211 = vrot.lane.b32.xlu0 %v2128, 112
  %v2212 = vpop.permute.xlu0 %2211
  %v2214 = vadd.f32 %v2198, %v2212
  %2216 = vrot.lane.b32.xlu0 %v2131, 112
  %v2217 = vpop.permute.xlu0 %2216
  %v2219 = vadd.f32 %v2199, %v2217
  %2221 = vrot.lane.b32.xlu0 %v2112, 96
  %v2222 = vpop.permute.xlu0 %2221
  %v2224 = vadd.f32 %v2204, %v2222
  %2226 = vrot.lane.b32.xlu0 %v2115, 96
  %v2227 = vpop.permute.xlu0 %2226
  %v2229 = vadd.f32 %v2209, %v2227
  %2231 = vrot.lane.b32.xlu0 %v2136, 96
  %v2232 = vpop.permute.xlu0 %2231
  %v2234 = vadd.f32 %v2214, %v2232
  %2236 = vrot.lane.b32.xlu0 %v2139, 96
  %v2237 = vpop.permute.xlu0 %2236
  %v2239 = vadd.f32 %v2219, %v2237
  %2240 = vrot.lane.b32.xlu0 %v2115, 80
  %v2241 = vpop.permute.xlu0 %2240
  %v2243 = vadd.f32 %v2224, %v2241
  %2245 = vrot.lane.b32.xlu0 %v2120, 80
  %v2246 = vpop.permute.xlu0 %2245
  %v2248 = vadd.f32 %v2229, %v2246
  %2249 = vrot.lane.b32.xlu0 %v2139, 80
  %v2250 = vpop.permute.xlu0 %2249
  %v2252 = vadd.f32 %v2234, %v2250
  %2254 = vrot.lane.b32.xlu0 %v2144, 80
  %v2255 = vpop.permute.xlu0 %2254
  %v2257 = vadd.f32 %v2239, %v2255
  %2258 = vrot.lane.b32.xlu0 %v2120, 64
  %v2259 = vpop.permute.xlu0 %2258
  %v2261 = vadd.f32 %v2243, %v2259
  %2263 = vrot.lane.b32.xlu0 %v2123, 64
  %v2264 = vpop.permute.xlu0 %2263
  %v2266 = vadd.f32 %v2248, %v2264
  %2267 = vrot.lane.b32.xlu0 %v2144, 64
  %v2268 = vpop.permute.xlu0 %2267
  %v2270 = vadd.f32 %v2252, %v2268
  %2272 = vrot.lane.b32.xlu0 %v2147, 64
  %v2273 = vpop.permute.xlu0 %2272
  %v2275 = vadd.f32 %v2257, %v2273
  %2276 = vrot.lane.b32.xlu0 %v2123, 48
  %v2277 = vpop.permute.xlu0 %2276
  %v2279 = vadd.f32 %v2261, %v2277
  %2280 = vrot.lane.b32.xlu0 %v2128, 48
  %v2281 = vpop.permute.xlu0 %2280
  %v2283 = vadd.f32 %v2266, %v2281
  %2284 = vrot.lane.b32.xlu0 %v2147, 48
  %v2285 = vpop.permute.xlu0 %2284
  %v2287 = vadd.f32 %v2270, %v2285
  %2289 = vrot.lane.b32.xlu0 %v2152, 48
  %v2290 = vpop.permute.xlu0 %2289
  %v2292 = vadd.f32 %v2275, %v2290
  %2293 = vrot.lane.b32.xlu0 %v2128, 32
  %v2294 = vpop.permute.xlu0 %2293
  %v2296 = vadd.f32 %v2279, %v2294
  %2297 = vrot.lane.b32.xlu0 %v2131, 32
  %v2298 = vpop.permute.xlu0 %2297
  %v2300 = vadd.f32 %v2283, %v2298
  %2301 = vrot.lane.b32.xlu0 %v2152, 32
  %v2302 = vpop.permute.xlu0 %2301
  %v2304 = vadd.f32 %v2287, %v2302
  %2306 = vrot.lane.b32.xlu0 %v2155, 32
  %v2307 = vpop.permute.xlu0 %2306
  %v2309 = vadd.f32 %v2292, %v2307
  %2310 = vrot.lane.b32.xlu0 %v2136, 16
  %v2311 = vpop.permute.xlu0 %2310
  %v2313 = vadd.f32 %v2296, %v2311
  %2314 = vrot.lane.b32.xlu0 %v2139, 16
  %v2315 = vpop.permute.xlu0 %2314
  %v2317 = vadd.f32 %v2300, %v2315
  %2319 = vrot.lane.b32.xlu0 %v2160, 16
  %v2320 = vpop.permute.xlu0 %2319
  %v2322 = vadd.f32 %v2304, %v2320
  %2324 = vrot.lane.b32.xlu0 %v2163, 16
  %v2325 = vpop.permute.xlu0 %2324
  %v2327 = vadd.f32 %v2309, %v2325
  %s2328 = scalar_lea.vmem %s3, 32
  %v2329 = vld [vmem:[%s2328] sm:$0xf]
  %v2330 = vld [vmem:[%s2328 + $0x4] sm:$0xf]
  %v2331 = vld [vmem:[%s2328 + $0x8] sm:$0xf]
  %v2332 = vld [vmem:[%s2328 + $0xc] sm:$0xf]
  %v2337 = vunpack.c.l.b16 %v2329
  %v2338 = vunpack.c.l.b16 %v2330
  %v2339 = vunpack.c.l.b16 %v2331
  %v2340 = vunpack.c.l.b16 %v2332
  %v2341 = vpack.c.b16 %v2338, %v2337
  %v2342 = vpack.c.b16 %v2340, %v2339
  %2345 = vmatprep.subr.bf16.mxu0 0
  %2346 = vmatpush1.bf16.msra.mxu0 %v2341
  %2347 = vmatprep.subr.bf16.mxu0 0
  %2348 = vmatpush1.bf16.msra.mxu0 %v2342
  %2349 = vmatprep.subr.bf16.mxu0 0
  %2350 = vmatpush1.bf16.msra.mxu0 0
  %2351 = vmatprep.subr.bf16.mxu0 0
  %2352 = vmatpush1.bf16.msra.mxu0 0
  %2353 = vmatprep.subr.bf16.mxu0 0
  %2354 = vmatpush1.bf16.msra.mxu0 0
  %2355 = vmatprep.subr.bf16.mxu0 0
  %2356 = vmatpush1.bf16.msra.mxu0 0
  %2357 = vmatprep.subr.bf16.mxu0 0
  %2358 = vmatpush1.bf16.msra.mxu0 0
  %2359 = vmatprep.subr.bf16.mxu0 0
  %2360 = vmatpush1.bf16.msra.mxu0 0
  %2361 = vmatprep.subr.bf16.mxu0 0
  %2362 = vmatpush1.bf16.msra.mxu0 0
  %2363 = vmatprep.subr.bf16.mxu0 0
  %2364 = vmatpush1.bf16.msra.mxu0 0
  %2365 = vmatprep.subr.bf16.mxu0 0
  %2366 = vmatpush1.bf16.msra.mxu0 0
  %2367 = vmatprep.subr.bf16.mxu0 0
  %2368 = vmatpush1.bf16.msra.mxu0 0
  %2369 = vmatprep.subr.bf16.mxu0 0
  %2370 = vmatpush1.bf16.msra.mxu0 0
  %2371 = vmatprep.subr.bf16.mxu0 0
  %2372 = vmatpush1.bf16.msra.mxu0 0
  %2373 = vmatprep.subr.bf16.mxu0 0
  %2374 = vmatpush1.bf16.msra.mxu0 0
  %2375 = vmatprep.subr.bf16.mxu0 0
  %2376 = vmatpush1.bf16.msra.mxu0 0
  %2377 = vmatprep.mubr.bf16.mxu0 0
  %2378 = vmatmul.mubr.bf16.gmra.mrb[0].mxu0 %v1680
  %v2379 = vpop.f32.mrb[0].mxu0
  %v2380 = vpop.f32.mrb[0].mxu0
  %v2381 = vpop.f32.mrb[0].mxu0
  %v2382 = vpop.f32.mrb[0].mxu0
  %2383 = vmatprep.mubr.bf16.mxu0 0
  %2384 = vmatmul.mubr.bf16.gmra.mrb[0].mxu0 %v1683
  %v2385 = vpop.f32.mrb[0].mxu0
  %v2386 = vpop.f32.mrb[0].mxu0
  %v2387 = vpop.f32.mrb[0].mxu0
  %v2388 = vpop.f32.mrb[0].mxu0
  %2389 = vmatprep.mubr.bf16.mxu0 0
  %2390 = vmatmul.mubr.bf16.gmra.mrb[0].mxu0 %v1686
  %v2391 = vpop.f32.mrb[0].mxu0
  %v2392 = vpop.f32.mrb[0].mxu0
  %v2393 = vpop.f32.mrb[0].mxu0
  %v2394 = vpop.f32.mrb[0].mxu0
  %2395 = vmatprep.mubr.bf16.mxu0 0
  %2396 = vmatmul.mubr.bf16.gmra.mrb[0].mxu0 %v1689
  %v2397 = vpop.f32.mrb[0].mxu0
  %v2398 = vpop.f32.mrb[0].mxu0
  %v2399 = vpop.f32.mrb[0].mxu0
  %v2400 = vpop.f32.mrb[0].mxu0
  %2401 = vmatprep.mubr.bf16.mxu0 0
  %2402 = vmatmul.mubr.bf16.gmra.mrb[0].mxu0 %v1692
  %v2403 = vpop.f32.mrb[0].mxu0
  %v2404 = vpop.f32.mrb[0].mxu0
  %v2405 = vpop.f32.mrb[0].mxu0
  %v2406 = vpop.f32.mrb[0].mxu0
  %2407 = vmatprep.mubr.bf16.mxu0 0
  %2408 = vmatmul.mubr.bf16.gmra.mrb[0].mxu0 %v1695
  %v2409 = vpop.f32.mrb[0].mxu0
  %v2410 = vpop.f32.mrb[0].mxu0
  %v2411 = vpop.f32.mrb[0].mxu0
  %v2412 = vpop.f32.mrb[0].mxu0
  %2413 = vmatprep.mubr.bf16.mxu0 0
  %2414 = vmatmul.mubr.bf16.gmra.mrb[0].mxu0 %v1698
  %v2415 = vpop.f32.mrb[0].mxu0
  %v2416 = vpop.f32.mrb[0].mxu0
  %v2417 = vpop.f32.mrb[0].mxu0
  %v2418 = vpop.f32.mrb[0].mxu0
  %2419 = vmatprep.mubr.bf16.mxu0 0
  %2420 = vmatmul.mubr.bf16.gmra.mrb[0].mxu0 %v1701
  %v2421 = vpop.f32.mrb[0].mxu0
  %v2422 = vpop.f32.mrb[0].mxu0
  %v2423 = vpop.f32.mrb[0].mxu0
  %v2424 = vpop.f32.mrb[0].mxu0
  %2425 = vmatprep.mubr.bf16.mxu0 0
  %2426 = vmatmul.mubr.bf16.gmra.mrb[0].mxu0 %v1704
  %v2427 = vpop.f32.mrb[0].mxu0
  %v2428 = vpop.f32.mrb[0].mxu0
  %v2429 = vpop.f32.mrb[0].mxu0
  %v2430 = vpop.f32.mrb[0].mxu0
  %2431 = vmatprep.mubr.bf16.mxu0 0
  %2432 = vmatmul.mubr.bf16.gmra.mrb[0].mxu0 %v1707
  %v2433 = vpop.f32.mrb[0].mxu0
  %v2434 = vpop.f32.mrb[0].mxu0
  %v2435 = vpop.f32.mrb[0].mxu0
  %v2436 = vadd.f32 0.0, %v2435
  %v2437 = vpop.f32.mrb[0].mxu0
  %2438 = vmatprep.mubr.bf16.mxu0 0
  %2439 = vmatmul.mubr.bf16.gmra.mrb[0].mxu0 %v1710
  %v2440 = vpop.f32.mrb[0].mxu0
  %v2441 = vadd.f32 0.0, %v2440
  %v2442 = vpop.f32.mrb[0].mxu0
  %v2443 = vpop.f32.mrb[0].mxu0
  %v2444 = vadd.f32 0.0, %v2443
  %v2445 = vpop.f32.mrb[0].mxu0
  %2446 = vmatprep.mubr.bf16.mxu0 0
  %2447 = vmatmul.mubr.bf16.gmra.mrb[0].mxu0 %v1713
  %v2448 = vpop.f32.mrb[0].mxu0
  %v2449 = vadd.f32 0.0, %v2448
  %v2450 = vpop.f32.mrb[0].mxu0
  %v2451 = vpop.f32.mrb[0].mxu0
  %v2452 = vadd.f32 0.0, %v2451
  %v2453 = vpop.f32.mrb[0].mxu0
  %2454 = vmatprep.mubr.bf16.mxu0 0
  %2455 = vmatmul.mubr.bf16.gmra.mrb[0].mxu0 %v1716
  %v2456 = vpop.f32.mrb[0].mxu0
  %v2457 = vadd.f32 0.0, %v2456
  %v2458 = vpop.f32.mrb[0].mxu0
  %v2459 = vpop.f32.mrb[0].mxu0
  %v2460 = vadd.f32 0.0, %v2459
  %v2461 = vpop.f32.mrb[0].mxu0
  %2462 = vmatprep.mubr.bf16.mxu0 0
  %2463 = vmatmul.mubr.bf16.gmra.mrb[0].mxu0 %v1719
  %v2464 = vpop.f32.mrb[0].mxu0
  %v2465 = vadd.f32 0.0, %v2464
  %v2466 = vpop.f32.mrb[0].mxu0
  %v2467 = vpop.f32.mrb[0].mxu0
  %v2468 = vadd.f32 0.0, %v2467
  %v2469 = vpop.f32.mrb[0].mxu0
  %2470 = vmatprep.mubr.bf16.mxu0 0
  %2471 = vmatmul.mubr.bf16.gmra.mrb[0].mxu0 %v1722
  %v2472 = vpop.f32.mrb[0].mxu0
  %v2473 = vadd.f32 0.0, %v2472
  %v2474 = vpop.f32.mrb[0].mxu0
  %v2475 = vpop.f32.mrb[0].mxu0
  %v2476 = vadd.f32 0.0, %v2475
  %v2477 = vpop.f32.mrb[0].mxu0
  %2478 = vmatprep.mubr.bf16.mxu0 0
  %2479 = vmatmul.mubr.bf16.gmra.mrb[0].mxu0 %v1725
  %v2480 = vpop.f32.mrb[0].mxu0
  %v2481 = vadd.f32 0.0, %v2480
  %v2482 = vpop.f32.mrb[0].mxu0
  %v2483 = vpop.f32.mrb[0].mxu0
  %v2484 = vadd.f32 0.0, %v2483
  %v2485 = vpop.f32.mrb[0].mxu0
  %2486 = vmatprep.mubr.bf16.mxu0 0
  %2487 = vmatmul.mubr.bf16.gmra.mrb[0].mxu0 %v1728
  %v2488 = vpop.f32.mrb[0].mxu0
  %v2489 = vadd.f32 0.0, %v2488
  %v2490 = vpop.f32.mrb[0].mxu0
  %v2491 = vpop.f32.mrb[0].mxu0
  %v2492 = vadd.f32 0.0, %v2491
  %v2493 = vpop.f32.mrb[0].mxu0
  %2494 = vmatprep.mubr.bf16.mxu0 0
  %2495 = vmatmul.mubr.bf16.gmra.mrb[0].mxu0 %v1731
  %v2496 = vpop.f32.mrb[0].mxu0
  %v2497 = vadd.f32 0.0, %v2496
  %v2498 = vpop.f32.mrb[0].mxu0
  %v2499 = vpop.f32.mrb[0].mxu0
  %v2500 = vpop.f32.mrb[0].mxu0
  %2501 = vdwg.mxu0
  %v2502 = vadd.f32 %v2313, %v2436
  %v2503 = vadd.f32 %v2317, %v2441
  %v2504 = vadd.f32 %v2322, %v2460
  %v2505 = vadd.f32 %v2327, %v2465
  %2507 = vrot.lane.b32.xlu0 %v2441, 112
  %v2508 = vpop.permute.xlu0 %2507
  %v2510 = vadd.f32 %v2502, %v2508
  %2512 = vrot.lane.b32.xlu0 %v2444, 112
  %v2513 = vpop.permute.xlu0 %2512
  %v2515 = vadd.f32 %v2503, %v2513
  %2517 = vrot.lane.b32.xlu0 %v2465, 112
  %v2518 = vpop.permute.xlu0 %2517
  %v2520 = vadd.f32 %v2504, %v2518
  %2522 = vrot.lane.b32.xlu0 %v2468, 112
  %v2523 = vpop.permute.xlu0 %2522
  %v2525 = vadd.f32 %v2505, %v2523
  %2526 = vrot.lane.b32.xlu0 %v2444, 96
  %v2527 = vpop.permute.xlu0 %2526
  %v2529 = vadd.f32 %v2510, %v2527
  %2531 = vrot.lane.b32.xlu0 %v2449, 96
  %v2532 = vpop.permute.xlu0 %2531
  %v2534 = vadd.f32 %v2515, %v2532
  %2535 = vrot.lane.b32.xlu0 %v2468, 96
  %v2536 = vpop.permute.xlu0 %2535
  %v2538 = vadd.f32 %v2520, %v2536
  %2540 = vrot.lane.b32.xlu0 %v2473, 96
  %v2541 = vpop.permute.xlu0 %2540
  %v2543 = vadd.f32 %v2525, %v2541
  %2544 = vrot.lane.b32.xlu0 %v2449, 80
  %v2545 = vpop.permute.xlu0 %2544
  %v2547 = vadd.f32 %v2529, %v2545
  %2549 = vrot.lane.b32.xlu0 %v2452, 80
  %v2550 = vpop.permute.xlu0 %2549
  %v2552 = vadd.f32 %v2534, %v2550
  %2553 = vrot.lane.b32.xlu0 %v2473, 80
  %v2554 = vpop.permute.xlu0 %2553
  %v2556 = vadd.f32 %v2538, %v2554
  %2558 = vrot.lane.b32.xlu0 %v2476, 80
  %v2559 = vpop.permute.xlu0 %2558
  %v2561 = vadd.f32 %v2543, %v2559
  %2563 = vrot.lane.b32.xlu0 %v2457, 64
  %v2564 = vpop.permute.xlu0 %2563
  %v2566 = vadd.f32 %v2547, %v2564
  %2568 = vrot.lane.b32.xlu0 %v2460, 64
  %v2569 = vpop.permute.xlu0 %2568
  %v2571 = vadd.f32 %v2552, %v2569
  %2573 = vrot.lane.b32.xlu0 %v2481, 64
  %v2574 = vpop.permute.xlu0 %2573
  %v2576 = vadd.f32 %v2556, %v2574
  %2578 = vrot.lane.b32.xlu0 %v2484, 64
  %v2579 = vpop.permute.xlu0 %2578
  %v2581 = vadd.f32 %v2561, %v2579
  %2582 = vrot.lane.b32.xlu0 %v2460, 48
  %v2583 = vpop.permute.xlu0 %2582
  %v2585 = vadd.f32 %v2566, %v2583
  %2586 = vrot.lane.b32.xlu0 %v2465, 48
  %v2587 = vpop.permute.xlu0 %2586
  %v2589 = vadd.f32 %v2571, %v2587
  %2590 = vrot.lane.b32.xlu0 %v2484, 48
  %v2591 = vpop.permute.xlu0 %2590
  %v2593 = vadd.f32 %v2576, %v2591
  %2595 = vrot.lane.b32.xlu0 %v2489, 48
  %v2596 = vpop.permute.xlu0 %2595
  %v2598 = vadd.f32 %v2581, %v2596
  %2599 = vrot.lane.b32.xlu0 %v2465, 32
  %v2600 = vpop.permute.xlu0 %2599
  %v2602 = vadd.f32 %v2585, %v2600
  %2603 = vrot.lane.b32.xlu0 %v2468, 32
  %v2604 = vpop.permute.xlu0 %2603
  %v2606 = vadd.f32 %v2589, %v2604
  %2607 = vrot.lane.b32.xlu0 %v2489, 32
  %v2608 = vpop.permute.xlu0 %2607
  %v2610 = vadd.f32 %v2593, %v2608
  %2612 = vrot.lane.b32.xlu0 %v2492, 32
  %v2613 = vpop.permute.xlu0 %2612
  %v2615 = vadd.f32 %v2598, %v2613
  %2616 = vrot.lane.b32.xlu0 %v2468, 16
  %v2617 = vpop.permute.xlu0 %2616
  %v2619 = vadd.f32 %v2602, %v2617
  %2620 = vrot.lane.b32.xlu0 %v2473, 16
  %v2621 = vpop.permute.xlu0 %2620
  %v2623 = vadd.f32 %v2606, %v2621
  %2624 = vrot.lane.b32.xlu0 %v2492, 16
  %v2625 = vpop.permute.xlu0 %2624
  %v2627 = vadd.f32 %v2610, %v2625
  %2629 = vrot.lane.b32.xlu0 %v2497, 16
  %v2630 = vpop.permute.xlu0 %2629
  %v2632 = vadd.f32 %v2615, %v2630
  %s2633 = scalar_lea.vmem %s3, 48
  %v2634 = vld [vmem:[%s2633] sm:$0xf]
  %v2635 = vld [vmem:[%s2633 + $0x4] sm:$0xf]
  %v2636 = vld [vmem:[%s2633 + $0x8] sm:$0xf]
  %v2637 = vld [vmem:[%s2633 + $0xc] sm:$0xf]
  %v2642 = vunpack.c.l.b16 %v2634
  %v2643 = vunpack.c.l.b16 %v2635
  %v2644 = vunpack.c.l.b16 %v2636
  %v2645 = vunpack.c.l.b16 %v2637
  %v2646 = vpack.c.b16 %v2643, %v2642
  %v2647 = vpack.c.b16 %v2645, %v2644
  %2650 = vmatprep.subr.bf16.mxu0 0
  %2651 = vmatpush1.bf16.msra.mxu0 %v2646
  %2652 = vmatprep.subr.bf16.mxu0 0
  %2653 = vmatpush1.bf16.msra.mxu0 %v2647
  %2654 = vmatprep.subr.bf16.mxu0 0
  %2655 = vmatpush1.bf16.msra.mxu0 0
  %2656 = vmatprep.subr.bf16.mxu0 0
  %2657 = vmatpush1.bf16.msra.mxu0 0
  %2658 = vmatprep.subr.bf16.mxu0 0
  %2659 = vmatpush1.bf16.msra.mxu0 0
  %2660 = vmatprep.subr.bf16.mxu0 0
  %2661 = vmatpush1.bf16.msra.mxu0 0
  %2662 = vmatprep.subr.bf16.mxu0 0
  %2663 = vmatpush1.bf16.msra.mxu0 0
  %2664 = vmatprep.subr.bf16.mxu0 0
  %2665 = vmatpush1.bf16.msra.mxu0 0
  %2666 = vmatprep.subr.bf16.mxu0 0
  %2667 = vmatpush1.bf16.msra.mxu0 0
  %2668 = vmatprep.subr.bf16.mxu0 0
  %2669 = vmatpush1.bf16.msra.mxu0 0
  %2670 = vmatprep.subr.bf16.mxu0 0
  %2671 = vmatpush1.bf16.msra.mxu0 0
  %2672 = vmatprep.subr.bf16.mxu0 0
  %2673 = vmatpush1.bf16.msra.mxu0 0
  %2674 = vmatprep.subr.bf16.mxu0 0
  %2675 = vmatpush1.bf16.msra.mxu0 0
  %2676 = vmatprep.subr.bf16.mxu0 0
  %2677 = vmatpush1.bf16.msra.mxu0 0
  %2678 = vmatprep.subr.bf16.mxu0 0
  %2679 = vmatpush1.bf16.msra.mxu0 0
  %2680 = vmatprep.subr.bf16.mxu0 0
  %2681 = vmatpush1.bf16.msra.mxu0 0
  %2682 = vmatprep.mubr.bf16.mxu0 0
  %2683 = vmatmul.mubr.bf16.gmra.mrb[0].mxu0 %v1680
  %v2684 = vpop.f32.mrb[0].mxu0
  %v2685 = vpop.f32.mrb[0].mxu0
  %v2686 = vpop.f32.mrb[0].mxu0
  %v2687 = vpop.f32.mrb[0].mxu0
  %2688 = vmatprep.mubr.bf16.mxu0 0
  %2689 = vmatmul.mubr.bf16.gmra.mrb[0].mxu0 %v1683
  %v2690 = vpop.f32.mrb[0].mxu0
  %v2691 = vpop.f32.mrb[0].mxu0
  %v2692 = vpop.f32.mrb[0].mxu0
  %v2693 = vpop.f32.mrb[0].mxu0
  %2694 = vmatprep.mubr.bf16.mxu0 0
  %2695 = vmatmul.mubr.bf16.gmra.mrb[0].mxu0 %v1686
  %v2696 = vpop.f32.mrb[0].mxu0
  %v2697 = vpop.f32.mrb[0].mxu0
  %v2698 = vpop.f32.mrb[0].mxu0
  %v2699 = vpop.f32.mrb[0].mxu0
  %2700 = vmatprep.mubr.bf16.mxu0 0
  %2701 = vmatmul.mubr.bf16.gmra.mrb[0].mxu0 %v1689
  %v2702 = vpop.f32.mrb[0].mxu0
  %v2703 = vpop.f32.mrb[0].mxu0
  %v2704 = vpop.f32.mrb[0].mxu0
  %v2705 = vpop.f32.mrb[0].mxu0
  %2706 = vmatprep.mubr.bf16.mxu0 0
  %2707 = vmatmul.mubr.bf16.gmra.mrb[0].mxu0 %v1692
  %v2708 = vpop.f32.mrb[0].mxu0
  %v2709 = vpop.f32.mrb[0].mxu0
  %v2710 = vpop.f32.mrb[0].mxu0
  %v2711 = vpop.f32.mrb[0].mxu0
  %2712 = vmatprep.mubr.bf16.mxu0 0
  %2713 = vmatmul.mubr.bf16.gmra.mrb[0].mxu0 %v1695
  %v2714 = vpop.f32.mrb[0].mxu0
  %v2715 = vpop.f32.mrb[0].mxu0
  %v2716 = vpop.f32.mrb[0].mxu0
  %v2717 = vpop.f32.mrb[0].mxu0
  %2718 = vmatprep.mubr.bf16.mxu0 0
  %2719 = vmatmul.mubr.bf16.gmra.mrb[0].mxu0 %v1698
  %v2720 = vpop.f32.mrb[0].mxu0
  %v2721 = vpop.f32.mrb[0].mxu0
  %v2722 = vpop.f32.mrb[0].mxu0
  %v2723 = vpop.f32.mrb[0].mxu0
  %2724 = vmatprep.mubr.bf16.mxu0 0
  %2725 = vmatmul.mubr.bf16.gmra.mrb[0].mxu0 %v1701
  %v2726 = vpop.f32.mrb[0].mxu0
  %v2727 = vpop.f32.mrb[0].mxu0
  %v2728 = vpop.f32.mrb[0].mxu0
  %v2729 = vpop.f32.mrb[0].mxu0
  %2730 = vmatprep.mubr.bf16.mxu0 0
  %2731 = vmatmul.mubr.bf16.gmra.mrb[0].mxu0 %v1704
  %v2732 = vpop.f32.mrb[0].mxu0
  %v2733 = vpop.f32.mrb[0].mxu0
  %v2734 = vpop.f32.mrb[0].mxu0
  %v2735 = vpop.f32.mrb[0].mxu0
  %2736 = vmatprep.mubr.bf16.mxu0 0
  %2737 = vmatmul.mubr.bf16.gmra.mrb[0].mxu0 %v1707
  %v2738 = vpop.f32.mrb[0].mxu0
  %v2739 = vpop.f32.mrb[0].mxu0
  %v2740 = vpop.f32.mrb[0].mxu0
  %v2741 = vpop.f32.mrb[0].mxu0
  %2742 = vmatprep.mubr.bf16.mxu0 0
  %2743 = vmatmul.mubr.bf16.gmra.mrb[0].mxu0 %v1710
  %v2744 = vpop.f32.mrb[0].mxu0
  %v2745 = vpop.f32.mrb[0].mxu0
  %v2746 = vpop.f32.mrb[0].mxu0
  %v2747 = vpop.f32.mrb[0].mxu0
  %2748 = vmatprep.mubr.bf16.mxu0 0
  %2749 = vmatmul.mubr.bf16.gmra.mrb[0].mxu0 %v1713
  %v2750 = vpop.f32.mrb[0].mxu0
  %v2751 = vpop.f32.mrb[0].mxu0
  %v2752 = vpop.f32.mrb[0].mxu0
  %v2753 = vpop.f32.mrb[0].mxu0
  %2754 = vmatprep.mubr.bf16.mxu0 0
  %2755 = vmatmul.mubr.bf16.gmra.mrb[0].mxu0 %v1716
  %v2756 = vpop.f32.mrb[0].mxu0
  %v2757 = vpop.f32.mrb[0].mxu0
  %v2758 = vpop.f32.mrb[0].mxu0
  %v2759 = vpop.f32.mrb[0].mxu0
  %2760 = vmatprep.mubr.bf16.mxu0 0
  %2761 = vmatmul.mubr.bf16.gmra.mrb[0].mxu0 %v1719
  %v2762 = vpop.f32.mrb[0].mxu0
  %v2763 = vpop.f32.mrb[0].mxu0
  %v2764 = vpop.f32.mrb[0].mxu0
  %v2765 = vpop.f32.mrb[0].mxu0
  %2766 = vmatprep.mubr.bf16.mxu0 0
  %2767 = vmatmul.mubr.bf16.gmra.mrb[0].mxu0 %v1722
  %v2768 = vpop.f32.mrb[0].mxu0
  %v2769 = vadd.f32 0.0, %v2768
  %v2770 = vpop.f32.mrb[0].mxu0
  %v2771 = vpop.f32.mrb[0].mxu0
  %v2772 = vadd.f32 0.0, %v2771
  %v2773 = vpop.f32.mrb[0].mxu0
  %2774 = vmatprep.mubr.bf16.mxu0 0
  %2775 = vmatmul.mubr.bf16.gmra.mrb[0].mxu0 %v1725
  %v2776 = vpop.f32.mrb[0].mxu0
  %v2777 = vpop.f32.mrb[0].mxu0
  %v2778 = vpop.f32.mrb[0].mxu0
  %v2779 = vpop.f32.mrb[0].mxu0
  %2780 = vmatprep.mubr.bf16.mxu0 0
  %2781 = vmatmul.mubr.bf16.gmra.mrb[0].mxu0 %v1728
  %v2782 = vpop.f32.mrb[0].mxu0
  %v2783 = vpop.f32.mrb[0].mxu0
  %v2784 = vpop.f32.mrb[0].mxu0
  %v2785 = vpop.f32.mrb[0].mxu0
  %2786 = vmatprep.mubr.bf16.mxu0 0
  %2787 = vmatmul.mubr.bf16.gmra.mrb[0].mxu0 %v1731
  %v2788 = vpop.f32.mrb[0].mxu0
  %v2789 = vadd.f32 0.0, %v2788
  %v2790 = vpop.f32.mrb[0].mxu0
  %v2791 = vpop.f32.mrb[0].mxu0
  %v2792 = vadd.f32 0.0, %v2791
  %v2793 = vpop.f32.mrb[0].mxu0
  %2794 = vdwg.mxu0
  %v2795 = vadd.f32 %v2619, %v2769
  %v2796 = vadd.f32 %v2623, %v2772
  %v2797 = vadd.f32 %v2627, %v2789
  %v2798 = vadd.f32 %v2632, %v2792
  %v2800 = vlaneseq
  %v2801 = vshrl.u32 %v2800, 7
  %v2802 = vsub.s32 0, %v2801
  %v2803 = vrot.slane %v1662, %v2802
  %v2805 = vadd.f32 %v2795, %v2803
  %v2806 = vmax.f32 %v2805, 0.0
  %v2807 = vadd.f32 %v2796, %v2803
  %v2808 = vmax.f32 %v2807, 0.0
  %v2809 = vmax.f32 %v2806, %v2808
  %v2810 = vadd.f32 %v2797, %v2803
  %v2811 = vmax.f32 %v2810, 0.0
  %v2812 = vmax.f32 %v2809, %v2811
  %v2813 = vadd.f32 %v2798, %v2803
  %v2814 = vmax.f32 %v2813, 0.0
  %v2815 = vmax.f32 %v2812, %v2814
  %v2816 = vpack.c.bf16 %v2815, %v2815
  %v2817 = vld [vmem:[%s5] sm:$0xf]
  %v2818 = vld [vmem:[%s5 + $0x4] sm:$0xf]
  %v2819 = vld [vmem:[%s6] sm:$0x1]
  %v2821 = vlaneseq
  %v2822 = vshrl.u32 %v2821, 7
  %v2823 = vsub.s32 0, %v2822
  %v2824 = vrot.slane %v2819, %v2823
  %v2828 = vunpack.c.l.b16 %v2817
  %v2829 = vunpack.c.l.b16 %v2818
  %v2830 = vpack.c.b16 %v2829, %v2828
  %vm2832 = vcmask 130048
  %v2834 = vsel %vm2832, %v2816, 0
  %2836 = vmatprep.subr.bf16.mxu0 0
  %2837 = vmatpush1.bf16.msra.mxu0 %v2830
  %2838 = vmatprep.subr.bf16.mxu0 0
  %2839 = vmatpush1.bf16.msra.mxu0 0
  %2840 = vmatprep.subr.bf16.mxu0 0
  %2841 = vmatpush1.bf16.msra.mxu0 0
  %2842 = vmatprep.subr.bf16.mxu0 0
  %2843 = vmatpush1.bf16.msra.mxu0 0
  %2844 = vmatprep.subr.bf16.mxu0 0
  %2845 = vmatpush1.bf16.msra.mxu0 0
  %2846 = vmatprep.subr.bf16.mxu0 0
  %2847 = vmatpush1.bf16.msra.mxu0 0
  %2848 = vmatprep.subr.bf16.mxu0 0
  %2849 = vmatpush1.bf16.msra.mxu0 0
  %2850 = vmatprep.subr.bf16.mxu0 0
  %2851 = vmatpush1.bf16.msra.mxu0 0
  %2852 = vmatprep.subr.bf16.mxu0 0
  %2853 = vmatpush1.bf16.msra.mxu0 0
  %2854 = vmatprep.subr.bf16.mxu0 0
  %2855 = vmatpush1.bf16.msra.mxu0 0
  %2856 = vmatprep.subr.bf16.mxu0 0
  %2857 = vmatpush1.bf16.msra.mxu0 0
  %2858 = vmatprep.subr.bf16.mxu0 0
  %2859 = vmatpush1.bf16.msra.mxu0 0
  %2860 = vmatprep.subr.bf16.mxu0 0
  %2861 = vmatpush1.bf16.msra.mxu0 0
  %2862 = vmatprep.subr.bf16.mxu0 0
  %2863 = vmatpush1.bf16.msra.mxu0 0
  %2864 = vmatprep.subr.bf16.mxu0 0
  %2865 = vmatpush1.bf16.msra.mxu0 0
  %2866 = vmatprep.subr.bf16.mxu0 0
  %2867 = vmatpush1.bf16.msra.mxu0 0
  %2868 = vmatprep.mubr.bf16.mxu0 0
  %2869 = vmatmul.mubr.bf16.gmra.mrb[0].mxu0 %v2834
  %v2870 = vpop.f32.mrb[0].mxu0
  %v2871 = vadd.f32 %v2824, %v2870
  %v2872 = vpop.f32.mrb[0].mxu0
  %v2873 = vpop.f32.mrb[0].mxu0
  %v2874 = vpop.f32.mrb[0].mxu0
  %2875 = vdwg.mxu0
  %v2876 = vmax.f32 %v2871, 0.0
  %v2877 = vpack.c.bf16 %v2876, %v2876
  %v2878 = vld [vmem:[%s7] sm:$0xf]
  %v2879 = vld [vmem:[%s7 + $0x4] sm:$0xf]
  %v2880 = vld [vmem:[%s7 + $0x8] sm:$0xf]
  %v2881 = vld [vmem:[%s7 + $0xc] sm:$0xf]
  %v2882 = vld [vmem:[%s7 + $0x10] sm:$0xf]
  %v2883 = vld [vmem:[%s7 + $0x14] sm:$0xf]
  %v2884 = vld [vmem:[%s7 + $0x18] sm:$0xf]
  %v2885 = vld [vmem:[%s7 + $0x1c] sm:$0xf]
  %v2886 = vld [vmem:[%s7 + $0x20] sm:$0xf]
  %v2887 = vld [vmem:[%s7 + $0x24] sm:$0xf]
  %v2888 = vld [vmem:[%s7 + $0x28] sm:$0xf]
  %v2889 = vld [vmem:[%s7 + $0x2c] sm:$0xf]
  %v2890 = vld [vmem:[%s7 + $0x30] sm:$0xf]
  %v2891 = vld [vmem:[%s7 + $0x34] sm:$0xf]
  %v2892 = vld [vmem:[%s7 + $0x38] sm:$0xf]
  %v2893 = vld [vmem:[%s7 + $0x3c] sm:$0xf]
  %v2894 = vld [vmem:[%s8] sm:$0x1]
  %v2896 = vlaneseq
  %v2897 = vshrl.u32 %v2896, 7
  %v2898 = vsub.s32 0, %v2897
  %v2899 = vrot.slane %v2894, %v2898
  %v2917 = vunpack.c.l.b16 %v2878
  %v2918 = vunpack.c.l.b16 %v2879
  %v2919 = vunpack.c.l.b16 %v2880
  %v2920 = vunpack.c.l.b16 %v2881
  %v2921 = vunpack.c.l.b16 %v2882
  %v2922 = vunpack.c.l.b16 %v2883
  %v2923 = vunpack.c.l.b16 %v2884
  %v2924 = vunpack.c.l.b16 %v2885
  %v2925 = vunpack.c.l.b16 %v2886
  %v2926 = vunpack.c.l.b16 %v2887
  %v2927 = vunpack.c.l.b16 %v2888
  %v2928 = vunpack.c.l.b16 %v2889
  %v2929 = vunpack.c.l.b16 %v2890
  %v2930 = vunpack.c.l.b16 %v2891
  %v2931 = vunpack.c.l.b16 %v2892
  %v2932 = vunpack.c.l.b16 %v2893
  %v2933 = vpack.c.b16 %v2918, %v2917
  %v2934 = vpack.c.b16 %v2920, %v2919
  %v2935 = vpack.c.b16 %v2922, %v2921
  %v2936 = vpack.c.b16 %v2924, %v2923
  %v2937 = vpack.c.b16 %v2926, %v2925
  %v2938 = vpack.c.b16 %v2928, %v2927
  %v2939 = vpack.c.b16 %v2930, %v2929
  %v2940 = vpack.c.b16 %v2932, %v2931
  %2949 = vmatprep.subr.bf16.mxu0 0
  %2950 = vmatpush1.bf16.msra.mxu0 %v2933
  %2951 = vmatprep.subr.bf16.mxu0 0
  %2952 = vmatpush1.bf16.msra.mxu0 %v2934
  %2953 = vmatprep.subr.bf16.mxu0 0
  %2954 = vmatpush1.bf16.msra.mxu0 %v2935
  %2955 = vmatprep.subr.bf16.mxu0 0
  %2956 = vmatpush1.bf16.msra.mxu0 %v2936
  %2957 = vmatprep.subr.bf16.mxu0 0
  %2958 = vmatpush1.bf16.msra.mxu0 %v2937
  %2959 = vmatprep.subr.bf16.mxu0 0
  %2960 = vmatpush1.bf16.msra.mxu0 %v2938
  %2961 = vmatprep.subr.bf16.mxu0 0
  %2962 = vmatpush1.bf16.msra.mxu0 %v2939
  %2963 = vmatprep.subr.bf16.mxu0 0
  %2964 = vmatpush1.bf16.msra.mxu0 %v2940
  %2965 = vmatprep.subr.bf16.mxu0 0
  %2966 = vmatpush1.bf16.msra.mxu0 0
  %2967 = vmatprep.subr.bf16.mxu0 0
  %2968 = vmatpush1.bf16.msra.mxu0 0
  %2969 = vmatprep.subr.bf16.mxu0 0
  %2970 = vmatpush1.bf16.msra.mxu0 0
  %2971 = vmatprep.subr.bf16.mxu0 0
  %2972 = vmatpush1.bf16.msra.mxu0 0
  %2973 = vmatprep.subr.bf16.mxu0 0
  %2974 = vmatpush1.bf16.msra.mxu0 0
  %2975 = vmatprep.subr.bf16.mxu0 0
  %2976 = vmatpush1.bf16.msra.mxu0 0
  %2977 = vmatprep.subr.bf16.mxu0 0
  %2978 = vmatpush1.bf16.msra.mxu0 0
  %2979 = vmatprep.subr.bf16.mxu0 0
  %2980 = vmatpush1.bf16.msra.mxu0 0
  %2981 = vmatprep.mubr.bf16.mxu0 0
  %2982 = vmatmul.mubr.bf16.gmra.mrb[0].mxu0 %v2877
  %v2983 = vpop.f32.mrb[0].mxu0
  %v2984 = vadd.f32 %v2899, %v2983
  %v2985 = vpop.f32.mrb[0].mxu0
  %v2986 = vpop.f32.mrb[0].mxu0
  %v2987 = vpop.f32.mrb[0].mxu0
  %2988 = vdwg.mxu0
  %v2989 = vmax.f32 %v2984, 0.0
  %v2990 = vpack.c.bf16 %v2989, %v2989
  %v2991 = vld [vmem:[%s9] sm:$0xf]
  %v2992 = vld [vmem:[%s9 + $0x4] sm:$0xf]
  %v2993 = vld [vmem:[%s9 + $0x8] sm:$0xf]
  %v2994 = vld [vmem:[%s9 + $0xc] sm:$0xf]
  %v2995 = vld [vmem:[%s9 + $0x10] sm:$0xf]
  %v2996 = vld [vmem:[%s9 + $0x14] sm:$0xf]
  %v2997 = vld [vmem:[%s9 + $0x18] sm:$0xf]
  %v2998 = vld [vmem:[%s9 + $0x1c] sm:$0xf]
  %v2999 = vld [vmem:[%s10] sm:$0x1]
  %v3001 = vlaneseq
  %v3002 = vshrl.u32 %v3001, 7
  %v3003 = vsub.s32 0, %v3002
  %v3004 = vrot.slane %v2999, %v3003
  %v3014 = vunpack.c.l.b16 %v2991
  %v3015 = vunpack.c.l.b16 %v2992
  %v3016 = vunpack.c.l.b16 %v2993
  %v3017 = vunpack.c.l.b16 %v2994
  %v3018 = vunpack.c.l.b16 %v2995
  %v3019 = vunpack.c.l.b16 %v2996
  %v3020 = vunpack.c.l.b16 %v2997
  %v3021 = vunpack.c.l.b16 %v2998
  %v3022 = vpack.c.b16 %v3015, %v3014
  %v3023 = vpack.c.b16 %v3017, %v3016
  %v3024 = vpack.c.b16 %v3019, %v3018
  %v3025 = vpack.c.b16 %v3021, %v3020
  %vm3030 = vcmask 523264
  %v3032 = vsel %vm3030, %v2990, 0
  %3034 = vmatprep.subr.bf16.mxu0 0
  %3035 = vmatpush1.bf16.msra.mxu0 %v3022
  %3036 = vmatprep.subr.bf16.mxu0 0
  %3037 = vmatpush1.bf16.msra.mxu0 %v3023
  %3038 = vmatprep.subr.bf16.mxu0 0
  %3039 = vmatpush1.bf16.msra.mxu0 %v3024
  %3040 = vmatprep.subr.bf16.mxu0 0
  %3041 = vmatpush1.bf16.msra.mxu0 %v3025
  %3042 = vmatprep.subr.bf16.mxu0 0
  %3043 = vmatpush1.bf16.msra.mxu0 0
  %3044 = vmatprep.subr.bf16.mxu0 0
  %3045 = vmatpush1.bf16.msra.mxu0 0
  %3046 = vmatprep.subr.bf16.mxu0 0
  %3047 = vmatpush1.bf16.msra.mxu0 0
  %3048 = vmatprep.subr.bf16.mxu0 0
  %3049 = vmatpush1.bf16.msra.mxu0 0
  %3050 = vmatprep.subr.bf16.mxu0 0
  %3051 = vmatpush1.bf16.msra.mxu0 0
  %3052 = vmatprep.subr.bf16.mxu0 0
  %3053 = vmatpush1.bf16.msra.mxu0 0
  %3054 = vmatprep.subr.bf16.mxu0 0
  %3055 = vmatpush1.bf16.msra.mxu0 0
  %3056 = vmatprep.subr.bf16.mxu0 0
  %3057 = vmatpush1.bf16.msra.mxu0 0
  %3058 = vmatprep.subr.bf16.mxu0 0
  %3059 = vmatpush1.bf16.msra.mxu0 0
  %3060 = vmatprep.subr.bf16.mxu0 0
  %3061 = vmatpush1.bf16.msra.mxu0 0
  %3062 = vmatprep.subr.bf16.mxu0 0
  %3063 = vmatpush1.bf16.msra.mxu0 0
  %3064 = vmatprep.subr.bf16.mxu0 0
  %3065 = vmatpush1.bf16.msra.mxu0 0
  %3066 = vmatprep.mubr.bf16.mxu0 0
  %3067 = vmatmul.mubr.bf16.gmra.mrb[0].mxu0 %v3032
  %v3068 = vpop.f32.mrb[0].mxu0
  %v3069 = vadd.f32 %v3004, %v3068
  %v3070 = vpop.f32.mrb[0].mxu0
  %v3071 = vpop.f32.mrb[0].mxu0
  %v3072 = vpop.f32.mrb[0].mxu0
  %3073 = vdwg.mxu0
  %3074 = vst [vmem:[%s11] sm:$0xff] %v3069
  // Predicated region
  $region46: #{forward.1} parent=0 // pred_check
    _
  $region47: #{forward.1} parent=0 // pred_check_branch
    %3076 = sbr.rel (0) target = $region49
  $region48: #{forward.1} parent=0 // pred_region
    _
  $region49: #{forward.1} parent=0 // pred_fallthru
    _
  // Predicated region
  $region50: #{forward.1} parent=0 // pred_check
    _
  $region51: #{forward.1} parent=0 // pred_check_branch
    %3078 = sbr.rel (0) target = $region53
  $region52: #{forward.1} parent=0 // pred_region
    _
  $region53: #{forward.1} parent=0 // pred_fallthru
    _

</llo_original>
